<compile_context>
chip_gen: v5e
topology: v5e:2x2
jax: 0.10.0
libtpu: 0.0.40
codegen_flags: <defaults>
</compile_context>

<pallas_src>
import functools

import jax
import jax.numpy as jnp
from jax.experimental import pallas as pl
from jax.experimental.pallas import tpu as pltpu


def _round_up(x, m):
    return (x + m - 1) // m * m


# ----------------------------------------------------------------------------
# Pallas kernel: tiled matmul (bf16 in, f32 acc) with fused bias (+ ReLU)
# ----------------------------------------------------------------------------
def _mm_bias_kernel(x_ref, w_ref, b_ref, o_ref, acc_ref, *, relu):
    @pl.when(pl.program_id(2) == 0)
    def _():
        acc_ref[...] = jnp.zeros_like(acc_ref)

    acc_ref[...] += jnp.dot(x_ref[...], w_ref[...],
                            preferred_element_type=jnp.float32)

    @pl.when(pl.program_id(2) == pl.num_programs(2) - 1)
    def _():
        r = acc_ref[...] + b_ref[...]
        if relu:
            r = jnp.maximum(r, 0.0)
        o_ref[...] = r.astype(o_ref.dtype)


def matmul_bias(x, w, b, relu):
    """x: (M, K) f32, w: (K, N) f32, b: (N,) f32 -> (M, N) f32.

    bf16 MXU operands, f32 accumulation, fused bias + optional ReLU.
    """
    M, K = x.shape
    K2, N = w.shape
    assert K == K2

    # Adaptive tiles: no 128-row padding for small M; fat K/N tiles so the
    # grid has very few steps (each grid step costs ~0.35 us of overhead).
    TM = min(128, _round_up(M, 8))
    TK = min(512, _round_up(K, 128))
    TN = min(256, _round_up(N, 128))

    Mp, Kp, Np = _round_up(M, TM), _round_up(K, TK), _round_up(N, TN)
    xp = jnp.pad(x, ((0, Mp - M), (0, Kp - K))).astype(jnp.bfloat16)
    wp = jnp.pad(w, ((0, Kp - K), (0, Np - N))).astype(jnp.bfloat16)
    bp = jnp.pad(b, ((0, Np - N),)).reshape(1, Np).astype(jnp.float32)

    cost = pl.CostEstimate(
        flops=2 * Mp * Kp * Np,
        transcendentals=0,
        bytes_accessed=Mp * Kp * 2 + Kp * Np * 2 + Mp * Np * 4 + Np * 4,
    )

    out = pl.pallas_call(
        functools.partial(_mm_bias_kernel, relu=relu),
        out_shape=jax.ShapeDtypeStruct((Mp, Np), jnp.float32),
        grid_spec=pltpu.PrefetchScalarGridSpec(
            num_scalar_prefetch=0,
            grid=(Mp // TM, Np // TN, Kp // TK),
            in_specs=[
                pl.BlockSpec((TM, TK), lambda i, j, k: (i, k)),
                pl.BlockSpec((TK, TN), lambda i, j, k: (k, j)),
                pl.BlockSpec((1, TN), lambda i, j, k: (0, j)),
            ],
            out_specs=pl.BlockSpec((TM, TN), lambda i, j, k: (i, j)),
            scratch_shapes=[pltpu.VMEM((TM, TN), jnp.float32)],
        ),
        compiler_params=pltpu.CompilerParams(
            dimension_semantics=("parallel", "parallel", "arbitrary")),
        cost_estimate=cost,
    )(xp, wp, bp)
    return out[:M, :N]


# ----------------------------------------------------------------------------
# Pallas kernel: window-max reduction for max-pool (tiled along pixel axis)
# ----------------------------------------------------------------------------
def _max_reduce_kernel(x_ref, o_ref):
    o_ref[...] = jnp.max(x_ref[...], axis=0, keepdims=True)


def _reduce_max_axis0(stacked):
    """stacked: (Wn, P) f32 -> (P,) max over axis 0, tiled along P."""
    Wn, P = stacked.shape
    TILE = min(4096, _round_up(P, 128))
    Pp = _round_up(P, TILE)
    sp = jnp.pad(stacked, ((0, 0), (0, Pp - P)))  # padded lanes sliced off
    out = pl.pallas_call(
        _max_reduce_kernel,
        out_shape=jax.ShapeDtypeStruct((1, Pp), jnp.float32),
        grid_spec=pltpu.PrefetchScalarGridSpec(
            num_scalar_prefetch=0,
            grid=(Pp // TILE,),
            in_specs=[pl.BlockSpec((Wn, TILE), lambda i: (0, i))],
            out_specs=pl.BlockSpec((1, TILE), lambda i: (0, i)),
        ),
        compiler_params=pltpu.CompilerParams(
            dimension_semantics=("parallel",)),
    )(sp)
    return out[0, :P]


# ----------------------------------------------------------------------------
# Layer helpers (JAX glue around the Pallas kernels)
# ----------------------------------------------------------------------------
def _im2col(x, kh, kw, stride, pad):
    """x NHWC -> (N*Ho*Wo, kh*kw*C) patches, K-order (kh, kw, C)."""
    xp = jnp.pad(x, ((0, 0), (pad, pad), (pad, pad), (0, 0)))
    N, H, W, C = xp.shape
    Ho = (H - kh) // stride + 1
    Wo = (W - kw) // stride + 1
    cols = []
    for i in range(kh):
        for j in range(kw):
            cols.append(xp[:, i:i + stride * Ho:stride,
                           j:j + stride * Wo:stride, :])
    patches = jnp.stack(cols, axis=3)                  # (N, Ho, Wo, kh*kw, C)
    return patches.reshape(N * Ho * Wo, kh * kw * C), (N, Ho, Wo)


def conv2d_relu(x, w, b, stride=1, padding=0, relu=True):
    """x NHWC; w PyTorch OIHW; b (O,). Conv + bias (+ReLU) via Pallas matmul."""
    O, I, kh, kw = w.shape
    if kh == 1 and kw == 1 and stride == 1 and padding == 0:
        # 1x1 conv: no im2col needed, just a matmul over channels.
        N, H, W, C = x.shape
        y = matmul_bias(x.reshape(N * H * W, C), w.reshape(O, I).T, b, relu)
        return y.reshape(N, H, W, O)
    patches, (N, Ho, Wo) = _im2col(x, kh, kw, stride, padding)
    wm = jnp.transpose(w, (2, 3, 1, 0)).reshape(kh * kw * I, O)
    y = matmul_bias(patches, wm, b, relu)
    return y.reshape(N, Ho, Wo, O)


def conv1x1_fused(x, weights, biases, relu=True):
    """Fuse several 1x1 convs on the SAME input into one Pallas matmul.

    weights: list of OIHW (k=1) tensors; returns list of NHWC outputs.
    """
    N, H, W, C = x.shape
    xm = x.reshape(N * H * W, C)
    wcat = jnp.concatenate(
        [w.reshape(w.shape[0], w.shape[1]).T for w in weights], axis=1)
    bcat = jnp.concatenate(biases, axis=0)
    y = matmul_bias(xm, wcat, bcat, relu)
    outs, off = [], 0
    for w in weights:
        O = w.shape[0]
        outs.append(y[:, off:off + O].reshape(N, H, W, O))
        off += O
    return outs


def maxpool2d_3x3_s1_p1(x):
    """NHWC max pool, kernel 3, stride 1, padding 1 (nn.MaxPool2d(3,1,1))."""
    N, H, W, C = x.shape
    neg = float(jnp.finfo(jnp.float32).min)
    xp = jnp.pad(x, ((0, 0), (1, 1), (1, 1), (0, 0)), constant_values=neg)
    wins = [xp[:, i:i + H, j:j + W, :] for i in range(3) for j in range(3)]
    stacked = jnp.stack(wins, axis=0).reshape(9, N * H * W * C)
    out = _reduce_max_axis0(stacked)
    return out.reshape(N, H, W, C)


# ----------------------------------------------------------------------------
# Inception forward (eval)
# ----------------------------------------------------------------------------
def inception_forward(p, x):
    """x NHWC -> concat([branch1, branch2, branch3, branch4], channel)."""
    # Fused single matmul for the three 1x1 convs that share the input.
    b1, b2, b3 = conv1x1_fused(
        x,
        [p["b1"][0], p["b2a"][0], p["b3a"][0]],
        [p["b1"][1], p["b2a"][1], p["b3a"][1]],
        relu=True)
    b2 = conv2d_relu(b2, *p["b2b"], padding=1)          # 3x3, pad 1
    b3 = conv2d_relu(b3, *p["b3b"], padding=2)          # 5x5, pad 2
    b4 = maxpool2d_3x3_s1_p1(x)
    b4 = conv2d_relu(b4, *p["b4"])                      # 1x1 after pool
    # NHWC last-axis concat == PyTorch NCHW dim-1 concat.
    return jnp.concatenate([b1, b2, b3, b4], axis=-1)


def inception_apply(params, x_nchw):
    """Public wrapper: NCHW f32 in -> NCHW f32 out (matches torch module)."""
    x = jnp.transpose(x_nchw, (0, 2, 3, 1)).astype(jnp.float32)   # -> NHWC
    y = inception_forward(params, x)
    return jnp.transpose(y, (0, 3, 1, 2))                         # -> NCHW


# ----------------------------------------------------------------------------
# Deterministic parameters + pure-JAX reference for validation
# ----------------------------------------------------------------------------
def make_params(key, in_channels, ch1x1, ch3x3red, ch3x3, ch5x5red, ch5x5,
                pool_proj):
    cnt = [0]

    def nk():
        cnt[0] += 1
        return jax.random.fold_in(key, cnt[0])

    def conv(cin, cout, k):
        fan_in = cin * k * k
        w = jax.random.normal(nk(), (cout, cin, k, k), jnp.float32) * \
            (2.0 / fan_in) ** 0.5
        b = jax.random.normal(nk(), (cout,), jnp.float32) * 0.01
        return (w, b)

    return {
        "b1": conv(in_channels, ch1x1, 1),
        "b2a": conv(in_channels, ch3x3red, 1), "b2b": conv(ch3x3red, ch3x3, 3),
        "b3a": conv(in_channels, ch5x5red, 1), "b3b": conv(ch5x5red, ch5x5, 5),
        "b4": conv(in_channels, pool_proj, 1),
    }


def inception_reference(p, x_nchw):
    """Plain-JAX f32 reference (lax conv / reduce_window) for validation."""
    def conv(x, wb, pad):
        w, b = wb
        y = jax.lax.conv_general_dilated(
            x, w, window_strides=(1, 1), padding=[(pad, pad), (pad, pad)],
            dimension_numbers=("NCHW", "OIHW", "NCHW"))
        return jax.nn.relu(y + b[None, :, None, None])

    b1 = conv(x_nchw, p["b1"], 0)
    b2 = conv(conv(x_nchw, p["b2a"], 0), p["b2b"], 1)
    b3 = conv(conv(x_nchw, p["b3a"], 0), p["b3b"], 2)
    b4 = jax.lax.reduce_window(
        x_nchw, -jnp.inf, jax.lax.max, (1, 1, 3, 3), (1, 1, 1, 1),
        [(0, 0), (0, 0), (1, 1), (1, 1)])
    b4 = conv(b4, p["b4"], 0)
    return jnp.concatenate([b1, b2, b3, b4], axis=1)


if __name__ == "__main__":
    key = jax.random.PRNGKey(0)
    cfg = dict(in_channels=64, ch1x1=32, ch3x3red=48, ch3x3=64,
               ch5x5red=8, ch5x5=16, pool_proj=16)
    params = make_params(jax.random.fold_in(key, 1), **cfg)
    x = jax.random.normal(jax.random.fold_in(key, 2), (2, 64, 16, 16),
                          jnp.float32)

    fwd = jax.jit(inception_apply)
    out = fwd(params, x)
    jax.block_until_ready(out)

    c_out = cfg["ch1x1"] + cfg["ch3x3"] + cfg["ch5x5"] + cfg["pool_proj"]
    assert out.shape == (2, c_out, 16, 16), out.shape
    assert bool(jnp.all(jnp.isfinite(out)))

    # Validate against a pure-JAX f32 reference (bf16 MXU operands -> loose tol).
    ref = inception_reference(params, x)
    err = float(jnp.max(jnp.abs(out - ref)))
    assert err < 5e-2, f"max abs err vs reference: {err}"
    print("KERNEL_OK")
</pallas_src>

<mosaic_0001>
module attributes {stable_mosaic.version = 11 : i64} {
  func.func @_mm_bias_kernel(%arg0: i32, %arg1: i32, %arg2: i32, %arg3: memref<128x128xbf16, #tpu.memory_space<vmem>>, %arg4: memref<128x128xbf16, #tpu.memory_space<vmem>>, %arg5: memref<1x128xf32, #tpu.memory_space<vmem>>, %arg6: memref<128x128xf32, #tpu.memory_space<vmem>>, %arg7: memref<128x128xf32, #tpu.memory_space<vmem>>) attributes {dimension_semantics = [#tpu.dimension_semantics<parallel>, #tpu.dimension_semantics<parallel>, #tpu.dimension_semantics<arbitrary>], iteration_bounds = array<i64: 4, 1, 1>, scalar_prefetch = 0 : i64, scratch_operands = 1 : i64, tpu.core_type = #tpu.core_type<tc>, window_params = [{transform_indices = @transform_0, window_bounds = array<i64: 128, 128>}, {transform_indices = @transform_1, window_bounds = array<i64: 128, 128>}, {transform_indices = @transform_2, window_bounds = array<i64: 1, 128>}, {transform_indices = @transform_3, window_bounds = array<i64: 128, 128>}]} {
    %c0_i32 = arith.constant 0 : i32
    %0 = arith.cmpi eq, %arg2, %c0_i32 : i32
    %1 = arith.extui %0 : i1 to i32
    %c0_i32_0 = arith.constant 0 : i32
    %2 = arith.cmpi ne, %1, %c0_i32_0 : i32
    scf.if %2 {
      %cst_10 = arith.constant 0.000000e+00 : f32
      %12 = vector.broadcast %cst_10 : f32 to vector<128x128xf32>
      %c0_11 = arith.constant 0 : index
      %c0_12 = arith.constant 0 : index
      %13 = vector.load %arg7[%c0_11, %c0_12] : memref<128x128xf32, #tpu.memory_space<vmem>>, vector<128x128xf32>
      tpu.vector_store %arg7[%c0_11, %c0_12], %12 {strides = array<i32>} : memref<128x128xf32, #tpu.memory_space<vmem>>, vector<128x128xf32>,
    } else {
    }
    %c0 = arith.constant 0 : index
    %c0_1 = arith.constant 0 : index
    %3 = vector.load %arg7[%c0, %c0_1] : memref<128x128xf32, #tpu.memory_space<vmem>>, vector<128x128xf32>
    %c0_2 = arith.constant 0 : index
    %c0_3 = arith.constant 0 : index
    %4 = vector.load %arg3[%c0_2, %c0_3] : memref<128x128xbf16, #tpu.memory_space<vmem>>, vector<128x128xbf16>
    %c0_4 = arith.constant 0 : index
    %c0_5 = arith.constant 0 : index
    %5 = vector.load %arg4[%c0_4, %c0_5] : memref<128x128xbf16, #tpu.memory_space<vmem>>, vector<128x128xbf16>
    %cst = arith.constant dense<0.000000e+00> : vector<128x128xf32>
    %6 = tpu.matmul %4, %5, %cst {dimension_numbers = #tpu.dot_dimension_numbers<[1], [0], [0], [1], [0, 0, 1, 1], [], []>} : vector<128x128xbf16>, vector<128x128xbf16>, vector<128x128xf32> -> vector<128x128xf32>
    %7 = arith.addf %3, %6 : vector<128x128xf32>
    %c0_6 = arith.constant 0 : index
    %c0_7 = arith.constant 0 : index
    %8 = vector.load %arg7[%c0_6, %c0_7] : memref<128x128xf32, #tpu.memory_space<vmem>>, vector<128x128xf32>
    tpu.vector_store %arg7[%c0_6, %c0_7], %7 {strides = array<i32>} : memref<128x128xf32, #tpu.memory_space<vmem>>, vector<128x128xf32>,
    %c0_i32_8 = arith.constant 0 : i32
    %9 = arith.cmpi eq, %arg2, %c0_i32_8 : i32
    %10 = arith.extui %9 : i1 to i32
    %c0_i32_9 = arith.constant 0 : i32
    %11 = arith.cmpi ne, %10, %c0_i32_9 : i32
    scf.if %11 {
      %c0_10 = arith.constant 0 : index
      %c0_11 = arith.constant 0 : index
      %12 = vector.load %arg7[%c0_10, %c0_11] : memref<128x128xf32, #tpu.memory_space<vmem>>, vector<128x128xf32>
      %c0_12 = arith.constant 0 : index
      %c0_13 = arith.constant 0 : index
      %13 = vector.load %arg5[%c0_12, %c0_13] : memref<1x128xf32, #tpu.memory_space<vmem>>, vector<1x128xf32>
      %14 = vector.broadcast %13 : vector<1x128xf32> to vector<128x128xf32>
      %15 = arith.addf %12, %14 : vector<128x128xf32>
      %cst_14 = arith.constant 0.000000e+00 : f32
      %16 = vector.broadcast %cst_14 : f32 to vector<128x128xf32>
      %17 = arith.maximumf %15, %16 : vector<128x128xf32>
      %c0_15 = arith.constant 0 : index
      %c0_16 = arith.constant 0 : index
      %18 = vector.load %arg6[%c0_15, %c0_16] : memref<128x128xf32, #tpu.memory_space<vmem>>, vector<128x128xf32>
      tpu.vector_store %arg6[%c0_15, %c0_16], %17 {strides = array<i32>} : memref<128x128xf32, #tpu.memory_space<vmem>>, vector<128x128xf32>,
    } else {
    }
    return
  }
  func.func @transform_0(%arg0: i32, %arg1: i32, %arg2: i32) -> (i32, i32) {
    %c0_i32 = arith.constant 0 : i32
    return %arg0, %arg2 : i32, i32
  }
  func.func @transform_1(%arg0: i32, %arg1: i32, %arg2: i32) -> (i32, i32) {
    %c0_i32 = arith.constant 0 : i32
    return %arg2, %arg1 : i32, i32
  }
  func.func @transform_2(%arg0: i32, %arg1: i32, %arg2: i32) -> (i32, i32) {
    %c0_i32 = arith.constant 0 : i32
    %c0_i32_0 = arith.constant 0 : i32
    return %c0_i32, %arg1 : i32, i32
  }
  func.func @transform_3(%arg0: i32, %arg1: i32, %arg2: i32) -> (i32, i32) {
    %c0_i32 = arith.constant 0 : i32
    return %arg0, %arg1 : i32, i32
  }
}

module attributes {stable_mosaic.version = 11 : i64} {
  func.func @_mm_bias_kernel(%arg0: i32, %arg1: i32, %arg2: i32, %arg3: memref<128x256xbf16, #tpu.memory_space<vmem>>, %arg4: memref<256x128xbf16, #tpu.memory_space<vmem>>, %arg5: memref<1x128xf32, #tpu.memory_space<vmem>>, %arg6: memref<128x128xf32, #tpu.memory_space<vmem>>, %arg7: memref<128x128xf32, #tpu.memory_space<vmem>>) attributes {dimension_semantics = [#tpu.dimension_semantics<parallel>, #tpu.dimension_semantics<parallel>, #tpu.dimension_semantics<arbitrary>], iteration_bounds = array<i64: 4, 1, 1>, scalar_prefetch = 0 : i64, scratch_operands = 1 : i64, tpu.core_type = #tpu.core_type<tc>, window_params = [{transform_indices = @transform_0, window_bounds = array<i64: 128, 256>}, {transform_indices = @transform_1, window_bounds = array<i64: 256, 128>}, {transform_indices = @transform_2, window_bounds = array<i64: 1, 128>}, {transform_indices = @transform_3, window_bounds = array<i64: 128, 128>}]} {
    %c0_i32 = arith.constant 0 : i32
    %0 = arith.cmpi eq, %arg2, %c0_i32 : i32
    %1 = arith.extui %0 : i1 to i32
    %c0_i32_0 = arith.constant 0 : i32
    %2 = arith.cmpi ne, %1, %c0_i32_0 : i32
    scf.if %2 {
      %cst_10 = arith.constant 0.000000e+00 : f32
      %12 = vector.broadcast %cst_10 : f32 to vector<128x128xf32>
      %c0_11 = arith.constant 0 : index
      %c0_12 = arith.constant 0 : index
      %13 = vector.load %arg7[%c0_11, %c0_12] : memref<128x128xf32, #tpu.memory_space<vmem>>, vector<128x128xf32>
      tpu.vector_store %arg7[%c0_11, %c0_12], %12 {strides = array<i32>} : memref<128x128xf32, #tpu.memory_space<vmem>>, vector<128x128xf32>,
    } else {
    }
    %c0 = arith.constant 0 : index
    %c0_1 = arith.constant 0 : index
    %3 = vector.load %arg7[%c0, %c0_1] : memref<128x128xf32, #tpu.memory_space<vmem>>, vector<128x128xf32>
    %c0_2 = arith.constant 0 : index
    %c0_3 = arith.constant 0 : index
    %4 = vector.load %arg3[%c0_2, %c0_3] : memref<128x256xbf16, #tpu.memory_space<vmem>>, vector<128x256xbf16>
    %c0_4 = arith.constant 0 : index
    %c0_5 = arith.constant 0 : index
    %5 = vector.load %arg4[%c0_4, %c0_5] : memref<256x128xbf16, #tpu.memory_space<vmem>>, vector<256x128xbf16>
    %cst = arith.constant dense<0.000000e+00> : vector<128x128xf32>
    %6 = tpu.matmul %4, %5, %cst {dimension_numbers = #tpu.dot_dimension_numbers<[1], [0], [0], [1], [0, 0, 1, 1], [], []>} : vector<128x256xbf16>, vector<256x128xbf16>, vector<128x128xf32> -> vector<128x128xf32>
    %7 = arith.addf %3, %6 : vector<128x128xf32>
    %c0_6 = arith.constant 0 : index
    %c0_7 = arith.constant 0 : index
    %8 = vector.load %arg7[%c0_6, %c0_7] : memref<128x128xf32, #tpu.memory_space<vmem>>, vector<128x128xf32>
    tpu.vector_store %arg7[%c0_6, %c0_7], %7 {strides = array<i32>} : memref<128x128xf32, #tpu.memory_space<vmem>>, vector<128x128xf32>,
    %c0_i32_8 = arith.constant 0 : i32
    %9 = arith.cmpi eq, %arg2, %c0_i32_8 : i32
    %10 = arith.extui %9 : i1 to i32
    %c0_i32_9 = arith.constant 0 : i32
    %11 = arith.cmpi ne, %10, %c0_i32_9 : i32
    scf.if %11 {
      %c0_10 = arith.constant 0 : index
      %c0_11 = arith.constant 0 : index
      %12 = vector.load %arg7[%c0_10, %c0_11] : memref<128x128xf32, #tpu.memory_space<vmem>>, vector<128x128xf32>
      %c0_12 = arith.constant 0 : index
      %c0_13 = arith.constant 0 : index
      %13 = vector.load %arg5[%c0_12, %c0_13] : memref<1x128xf32, #tpu.memory_space<vmem>>, vector<1x128xf32>
      %14 = vector.broadcast %13 : vector<1x128xf32> to vector<128x128xf32>
      %15 = arith.addf %12, %14 : vector<128x128xf32>
      %cst_14 = arith.constant 0.000000e+00 : f32
      %16 = vector.broadcast %cst_14 : f32 to vector<128x128xf32>
      %17 = arith.maximumf %15, %16 : vector<128x128xf32>
      %c0_15 = arith.constant 0 : index
      %c0_16 = arith.constant 0 : index
      %18 = vector.load %arg6[%c0_15, %c0_16] : memref<128x128xf32, #tpu.memory_space<vmem>>, vector<128x128xf32>
      tpu.vector_store %arg6[%c0_15, %c0_16], %17 {strides = array<i32>} : memref<128x128xf32, #tpu.memory_space<vmem>>, vector<128x128xf32>,
    } else {
    }
    return
  }
  func.func @transform_0(%arg0: i32, %arg1: i32, %arg2: i32) -> (i32, i32) {
    %c0_i32 = arith.constant 0 : i32
    return %arg0, %arg2 : i32, i32
  }
  func.func @transform_1(%arg0: i32, %arg1: i32, %arg2: i32) -> (i32, i32) {
    %c0_i32 = arith.constant 0 : i32
    return %arg2, %arg1 : i32, i32
  }
  func.func @transform_2(%arg0: i32, %arg1: i32, %arg2: i32) -> (i32, i32) {
    %c0_i32 = arith.constant 0 : i32
    %c0_i32_0 = arith.constant 0 : i32
    return %c0_i32, %arg1 : i32, i32
  }
  func.func @transform_3(%arg0: i32, %arg1: i32, %arg2: i32) -> (i32, i32) {
    %c0_i32 = arith.constant 0 : i32
    return %arg0, %arg1 : i32, i32
  }
}

module attributes {stable_mosaic.version = 11 : i64} {
  func.func @_mm_bias_kernel(%arg0: i32, %arg1: i32, %arg2: i32, %arg3: memref<128x512xbf16, #tpu.memory_space<vmem>>, %arg4: memref<512x128xbf16, #tpu.memory_space<vmem>>, %arg5: memref<1x128xf32, #tpu.memory_space<vmem>>, %arg6: memref<128x128xf32, #tpu.memory_space<vmem>>, %arg7: memref<128x128xf32, #tpu.memory_space<vmem>>) attributes {dimension_semantics = [#tpu.dimension_semantics<parallel>, #tpu.dimension_semantics<parallel>, #tpu.dimension_semantics<arbitrary>], iteration_bounds = array<i64: 4, 1, 1>, scalar_prefetch = 0 : i64, scratch_operands = 1 : i64, tpu.core_type = #tpu.core_type<tc>, window_params = [{transform_indices = @transform_0, window_bounds = array<i64: 128, 512>}, {transform_indices = @transform_1, window_bounds = array<i64: 512, 128>}, {transform_indices = @transform_2, window_bounds = array<i64: 1, 128>}, {transform_indices = @transform_3, window_bounds = array<i64: 128, 128>}]} {
    %c0_i32 = arith.constant 0 : i32
    %0 = arith.cmpi eq, %arg2, %c0_i32 : i32
    %1 = arith.extui %0 : i1 to i32
    %c0_i32_0 = arith.constant 0 : i32
    %2 = arith.cmpi ne, %1, %c0_i32_0 : i32
    scf.if %2 {
      %cst_10 = arith.constant 0.000000e+00 : f32
      %12 = vector.broadcast %cst_10 : f32 to vector<128x128xf32>
      %c0_11 = arith.constant 0 : index
      %c0_12 = arith.constant 0 : index
      %13 = vector.load %arg7[%c0_11, %c0_12] : memref<128x128xf32, #tpu.memory_space<vmem>>, vector<128x128xf32>
      tpu.vector_store %arg7[%c0_11, %c0_12], %12 {strides = array<i32>} : memref<128x128xf32, #tpu.memory_space<vmem>>, vector<128x128xf32>,
    } else {
    }
    %c0 = arith.constant 0 : index
    %c0_1 = arith.constant 0 : index
    %3 = vector.load %arg7[%c0, %c0_1] : memref<128x128xf32, #tpu.memory_space<vmem>>, vector<128x128xf32>
    %c0_2 = arith.constant 0 : index
    %c0_3 = arith.constant 0 : index
    %4 = vector.load %arg3[%c0_2, %c0_3] : memref<128x512xbf16, #tpu.memory_space<vmem>>, vector<128x512xbf16>
    %c0_4 = arith.constant 0 : index
    %c0_5 = arith.constant 0 : index
    %5 = vector.load %arg4[%c0_4, %c0_5] : memref<512x128xbf16, #tpu.memory_space<vmem>>, vector<512x128xbf16>
    %cst = arith.constant dense<0.000000e+00> : vector<128x128xf32>
    %6 = tpu.matmul %4, %5, %cst {dimension_numbers = #tpu.dot_dimension_numbers<[1], [0], [0], [1], [0, 0, 1, 1], [], []>} : vector<128x512xbf16>, vector<512x128xbf16>, vector<128x128xf32> -> vector<128x128xf32>
    %7 = arith.addf %3, %6 : vector<128x128xf32>
    %c0_6 = arith.constant 0 : index
    %c0_7 = arith.constant 0 : index
    %8 = vector.load %arg7[%c0_6, %c0_7] : memref<128x128xf32, #tpu.memory_space<vmem>>, vector<128x128xf32>
    tpu.vector_store %arg7[%c0_6, %c0_7], %7 {strides = array<i32>} : memref<128x128xf32, #tpu.memory_space<vmem>>, vector<128x128xf32>,
    %c0_i32_8 = arith.constant 0 : i32
    %9 = arith.cmpi eq, %arg2, %c0_i32_8 : i32
    %10 = arith.extui %9 : i1 to i32
    %c0_i32_9 = arith.constant 0 : i32
    %11 = arith.cmpi ne, %10, %c0_i32_9 : i32
    scf.if %11 {
      %c0_10 = arith.constant 0 : index
      %c0_11 = arith.constant 0 : index
      %12 = vector.load %arg7[%c0_10, %c0_11] : memref<128x128xf32, #tpu.memory_space<vmem>>, vector<128x128xf32>
      %c0_12 = arith.constant 0 : index
      %c0_13 = arith.constant 0 : index
      %13 = vector.load %arg5[%c0_12, %c0_13] : memref<1x128xf32, #tpu.memory_space<vmem>>, vector<1x128xf32>
      %14 = vector.broadcast %13 : vector<1x128xf32> to vector<128x128xf32>
      %15 = arith.addf %12, %14 : vector<128x128xf32>
      %cst_14 = arith.constant 0.000000e+00 : f32
      %16 = vector.broadcast %cst_14 : f32 to vector<128x128xf32>
      %17 = arith.maximumf %15, %16 : vector<128x128xf32>
      %c0_15 = arith.constant 0 : index
      %c0_16 = arith.constant 0 : index
      %18 = vector.load %arg6[%c0_15, %c0_16] : memref<128x128xf32, #tpu.memory_space<vmem>>, vector<128x128xf32>
      tpu.vector_store %arg6[%c0_15, %c0_16], %17 {strides = array<i32>} : memref<128x128xf32, #tpu.memory_space<vmem>>, vector<128x128xf32>,
    } else {
    }
    return
  }
  func.func @transform_0(%arg0: i32, %arg1: i32, %arg2: i32) -> (i32, i32) {
    %c0_i32 = arith.constant 0 : i32
    return %arg0, %arg2 : i32, i32
  }
  func.func @transform_1(%arg0: i32, %arg1: i32, %arg2: i32) -> (i32, i32) {
    %c0_i32 = arith.constant 0 : i32
    return %arg2, %arg1 : i32, i32
  }
  func.func @transform_2(%arg0: i32, %arg1: i32, %arg2: i32) -> (i32, i32) {
    %c0_i32 = arith.constant 0 : i32
    %c0_i32_0 = arith.constant 0 : i32
    return %c0_i32, %arg1 : i32, i32
  }
  func.func @transform_3(%arg0: i32, %arg1: i32, %arg2: i32) -> (i32, i32) {
    %c0_i32 = arith.constant 0 : i32
    return %arg0, %arg1 : i32, i32
  }
}

module attributes {stable_mosaic.version = 11 : i64} {
  func.func @_max_reduce_kernel(%arg0: i32, %arg1: memref<9x4096xf32, #tpu.memory_space<vmem>>, %arg2: memref<1x4096xf32, #tpu.memory_space<vmem>>) attributes {dimension_semantics = [#tpu.dimension_semantics<parallel>], iteration_bounds = array<i64: 8>, scalar_prefetch = 0 : i64, scratch_operands = 0 : i64, tpu.core_type = #tpu.core_type<tc>, window_params = [{transform_indices = @transform_0, window_bounds = array<i64: 9, 4096>}, {transform_indices = @transform_1, window_bounds = array<i64: 1, 4096>}]} {
    %c0 = arith.constant 0 : index
    %c0_0 = arith.constant 0 : index
    %0 = vector.load %arg1[%c0, %c0_0] : memref<9x4096xf32, #tpu.memory_space<vmem>>, vector<9x4096xf32>
    %cst = arith.constant dense<0xFF800000> : vector<4096xf32>
    %1 = vector.multi_reduction <maximumf>, %0, %cst [0] : vector<9x4096xf32> to vector<4096xf32>
    %2 = vector.shape_cast %1 : vector<4096xf32> to vector<1x4096xf32>
    %c0_1 = arith.constant 0 : index
    %c0_2 = arith.constant 0 : index
    %3 = vector.load %arg2[%c0_1, %c0_2] : memref<1x4096xf32, #tpu.memory_space<vmem>>, vector<1x4096xf32>
    tpu.vector_store %arg2[%c0_1, %c0_2], %2 {strides = array<i32>} : memref<1x4096xf32, #tpu.memory_space<vmem>>, vector<1x4096xf32>,
    return
  }
  func.func @transform_0(%arg0: i32) -> (i32, i32) {
    %c0_i32 = arith.constant 0 : i32
    %c0_i32_0 = arith.constant 0 : i32
    return %c0_i32, %arg0 : i32, i32
  }
  func.func @transform_1(%arg0: i32) -> (i32, i32) {
    %c0_i32 = arith.constant 0 : i32
    %c0_i32_0 = arith.constant 0 : i32
    return %c0_i32, %arg0 : i32, i32
  }
}

</mosaic_0001>

<llo_original>
// kernel: inception_apply.5
$region0: #{inception_apply.5}
  #allocation0 [shape = 'u32[]', space=smem, size = 0x4, offset = 0x4, fixed_abs, tag = 'smem constant byte address 0x4 - core index']
  #allocation1 [shape = 'u32[72,128]{1,0:T(1,128)}', space=vmem, size = 0x9000, scoped, tag = 'internal scratch']
  #allocation2 [shape = 'f32[128,128]{1,0:T(8,128)}', space=vmem, size = 0x10000, scoped, tag = 'scratch operand']
  %s0 = inlined_call_operand.vmem [shape: bf16[512,128], index: 0, kind: input, shape index: {}]
  %s1 = inlined_call_operand.vmem [shape: bf16[128,128], index: 1, kind: input, shape index: {}]
  %s2 = inlined_call_operand.vmem [shape: f32[1,128], index: 2, kind: input, shape index: {}]
  %s3 = inlined_call_operand.vmem [shape: f32[512,128], index: 3, kind: output, shape index: {}]
  %s4 = sld [smem:[#allocation0]]
  $region53: #{inception_apply.5} parent=0
    _
  %s6 = ssub.s32 1, %s4
  %s7 = scalar_select 0, %s6, %s4
  loop: start=0, step=1, limit=6
  $region2: #{inception_apply.5} parent=0 // loop_pre_header
    _
  $region3: #{inception_apply.5} parent=0 // loop_header
    %s9 = sphi 0, %s13
    %p10 = scmp.ge.s32.totalorder %s9, 6
    %s16 = sphi 0, %s35
    %s17 = sphi 0, %s31
    %s18 = sphi 0, %s27
    %s19 = sphi 0, %s16
    %s20 = sphi 0, %s17
    %s21 = sphi 0, %s18
    %s22 = sphi 0, %s19
    %s23 = sphi 0, %s20
    %s24 = sphi 0, %s21
    %s40 = sphi 0, %s42
    %s43 = sphi 0, %s40
    %s44 = sphi 0, %s43
    %s60 = sphi 0, %s44
    %s68 = sphi 0, %s70
    %s71 = sphi 0, %s68
    %s72 = sphi 0, %s71
    %s88 = sphi 0, %s72
    %s94 = sphi 0, %s96
    %s97 = sphi 0, %s94
    %s98 = sphi 0, %s97
    %s114 = sphi 0, %s98
    %s122 = sphi 0, %s124
    %s125 = sphi 0, %s122
    %s126 = sphi 0, %s125
    %s142 = sphi 0, %s126
  $region4: #{inception_apply.5} parent=0 // loop_header_branch
    %12 = sbr.rel (%p10) target = $region8
  $region5: #{inception_apply.5} parent=0 // loop_body
    %s14 = ssub.s32 %s9, 1
    %s15 = ssub.s32 %s9, 2
    %s25 = sadd.s32 1, %s18
    %p26 = scmp.ge.s32.totalorder %s25, 1
    %s27 = scalar_select %p26, 0, %s25
    %s28 = sadd.s32 1, %s17
    %s29 = scalar_select %p26, %s28, %s17
    %p30 = scmp.ge.s32.totalorder %s29, 1
    %s31 = scalar_select %p30, 0, %s29
    %s32 = sadd.s32 1, %s16
    %s33 = scalar_select %p30, %s32, %s16
    %p34 = scmp.ge.s32.totalorder %s33, 4
    %s35 = scalar_select %p34, 0, %s33
    %s36 = ssub.s32 %s16, %s35
    %s37 = ssub.s32 %s18, %s27
    %s38 = sor.u32 %s36, %s37
    %p39 = scmp.eq.s32.totalorder %s38, 0
    %s41 = sadd.s32 %s40, 1
    %s42 = scalar_select %p39, %s40, %s41
    %p45 = pneg %p39
    %p46 = scmp.eq.s32.totalorder %s9, 3
    %p47 = por %p45, %p46
    %p48 = scmp.ne.s32.totalorder %s40, %s43
    %p49 = scmp.eq.s32.totalorder %s9, 0
    %p50 = por %p48, %p49
    %p51 = scmp.ne.s32.totalorder %s40, %s43
    %p52 = scmp.eq.s32.totalorder %s14, 3
    %p53 = por %p51, %p52
    %p54 = scmp.ne.s32.totalorder %s43, %s44
    %p55 = scmp.eq.s32.totalorder %s14, 0
    %p56 = por %p54, %p55
    %p57 = scmp.ne.s32.totalorder %s43, %s44
    %p58 = scmp.eq.s32.totalorder %s15, 3
    %p59 = por %p57, %p58
    %p61 = scmp.ne.s32.totalorder %s44, %s60
    %p62 = scmp.eq.s32.totalorder %s15, 0
    %p63 = por %p61, %p62
    %s64 = ssub.s32 %s18, %s27
    %s65 = ssub.s32 %s17, %s31
    %s66 = sor.u32 %s64, %s65
    %p67 = scmp.eq.s32.totalorder %s66, 0
    %s69 = sadd.s32 %s68, 1
    %s70 = scalar_select %p67, %s68, %s69
    %p73 = pneg %p67
    %p74 = scmp.eq.s32.totalorder %s9, 3
    %p75 = por %p73, %p74
    %p76 = scmp.ne.s32.totalorder %s68, %s71
    %p77 = scmp.eq.s32.totalorder %s9, 0
    %p78 = por %p76, %p77
    %p79 = scmp.ne.s32.totalorder %s68, %s71
    %p80 = scmp.eq.s32.totalorder %s14, 3
    %p81 = por %p79, %p80
    %p82 = scmp.ne.s32.totalorder %s71, %s72
    %p83 = scmp.eq.s32.totalorder %s14, 0
    %p84 = por %p82, %p83
    %p85 = scmp.ne.s32.totalorder %s71, %s72
    %p86 = scmp.eq.s32.totalorder %s15, 3
    %p87 = por %p85, %p86
    %p89 = scmp.ne.s32.totalorder %s72, %s88
    %p90 = scmp.eq.s32.totalorder %s15, 0
    %p91 = por %p89, %p90
    %s92 = ssub.s32 %s17, %s31
    %p93 = scmp.eq.s32.totalorder %s92, 0
    %s95 = sadd.s32 %s94, 1
    %s96 = scalar_select %p93, %s94, %s95
    %p99 = pneg %p93
    %p100 = scmp.eq.s32.totalorder %s9, 3
    %p101 = por %p99, %p100
    %p102 = scmp.ne.s32.totalorder %s94, %s97
    %p103 = scmp.eq.s32.totalorder %s9, 0
    %p104 = por %p102, %p103
    %p105 = scmp.ne.s32.totalorder %s94, %s97
    %p106 = scmp.eq.s32.totalorder %s14, 3
    %p107 = por %p105, %p106
    %p108 = scmp.ne.s32.totalorder %s97, %s98
    %p109 = scmp.eq.s32.totalorder %s14, 0
    %p110 = por %p108, %p109
    %p111 = scmp.ne.s32.totalorder %s97, %s98
    %p112 = scmp.eq.s32.totalorder %s15, 3
    %p113 = por %p111, %p112
    %p115 = scmp.ne.s32.totalorder %s98, %s114
    %p116 = scmp.eq.s32.totalorder %s15, 0
    %p117 = por %p115, %p116
    %s118 = ssub.s32 %s16, %s35
    %s119 = ssub.s32 %s17, %s31
    %s120 = sor.u32 %s118, %s119
    %p121 = scmp.eq.s32.totalorder %s120, 0
    %s123 = sadd.s32 %s122, 1
    %s124 = scalar_select %p121, %s122, %s123
    %p127 = pneg %p121
    %p128 = scmp.eq.s32.totalorder %s9, 3
    %p129 = por %p127, %p128
    %p130 = scmp.ne.s32.totalorder %s122, %s125
    %p131 = scmp.eq.s32.totalorder %s9, 0
    %p132 = por %p130, %p131
    %p133 = scmp.ne.s32.totalorder %s122, %s125
    %p134 = scmp.eq.s32.totalorder %s14, 3
    %p135 = por %p133, %p134
    %p136 = scmp.ne.s32.totalorder %s125, %s126
    %p137 = scmp.eq.s32.totalorder %s14, 0
    %p138 = por %p136, %p137
    %p139 = scmp.ne.s32.totalorder %s125, %s126
    %p140 = scmp.eq.s32.totalorder %s15, 3
    %p141 = por %p139, %p140
    %p143 = scmp.ne.s32.totalorder %s126, %s142
    %p144 = scmp.eq.s32.totalorder %s15, 0
    %p145 = por %p143, %p144
    %p146 = scmp.le.s32.totalorder 1, %s9
    %p147 = scmp.lt.s32.totalorder %s9, 5
    %p148 = pnand %p146, %p147
    %p149 = pneg %p148
    // Predicated region
    $region9: #{inception_apply.5} parent=5 // pred_check
      _
    $region10: #{inception_apply.5} parent=5 // pred_check_branch
      %151 = sbr.rel (%p148) target = $region12
    $region11: #{inception_apply.5} parent=5 // pred_region
      %s152 = ssub.s32 %s9, 1
      // Predicated region
      $region13: #{inception_apply.5} parent=11 // pred_check
        %p153 = pneg %p84
      $region14: #{inception_apply.5} parent=11 // pred_check_branch
        %155 = sbr.rel (%p153) target = $region16
      $region15: #{inception_apply.5} parent=11 // pred_region
        %s156 = smul.u32 16, %s21
        %p157 = scmp.lt.s32.totalorder %s156, 15
        %s158 = scalar_select %p157, %s156, 15
        %p159 = scmp.lt.s32.totalorder %s20, 0
        %s160 = scalar_select %p159, %s20, 0
        %s161 = sadd.s32 %s160, %s158
        %s162 = smul.addr %s161, 4
        %s163 = scalar_lea.vmem %s1, %s162
        %s164 = smul.u32 16, %s21
      $region16: #{inception_apply.5} parent=11 // pred_fallthru
        _
      // Predicated region
      $region17: #{inception_apply.5} parent=11 // pred_check
        %p165 = pneg %p110
      $region18: #{inception_apply.5} parent=11 // pred_check_branch
        %167 = sbr.rel (%p165) target = $region20
      $region19: #{inception_apply.5} parent=11 // pred_region
        %p168 = scmp.lt.s32.totalorder %s20, 0
        %s169 = scalar_select %p168, %s20, 0
        %s170 = scalar_lea.vmem %s2, %s169
      $region20: #{inception_apply.5} parent=11 // pred_fallthru
        _
    $region12: #{inception_apply.5} parent=5 // pred_fallthru
      _
    %p171 = scmp.lt.s32.totalorder %s9, 4
    // Predicated region
    $region21: #{inception_apply.5} parent=5 // pred_check
      %p172 = pneg %p171
    $region22: #{inception_apply.5} parent=5 // pred_check_branch
      %174 = sbr.rel (%p172) target = $region24
    $region23: #{inception_apply.5} parent=5 // pred_region
      // Predicated region
      $region25: #{inception_apply.5} parent=23 // pred_check
        %p175 = pneg %p50
      $region26: #{inception_apply.5} parent=23 // pred_check_branch
        %177 = sbr.rel (%p175) target = $region28
      $region27: #{inception_apply.5} parent=23 // pred_region
        %s178 = smul.u32 16, %s16
        %p179 = scmp.lt.s32.totalorder %s178, 63
        %s180 = scalar_select %p179, %s178, 63
        %p181 = scmp.lt.s32.totalorder %s18, 0
        %s182 = scalar_select %p181, %s18, 0
        %s183 = sadd.s32 %s182, %s180
        %s184 = smul.addr %s183, 4
        %s185 = scalar_lea.vmem %s0, %s184
        %s186 = smul.u32 16, %s16
      $region28: #{inception_apply.5} parent=23 // pred_fallthru
        _
    $region24: #{inception_apply.5} parent=5 // pred_fallthru
      _
    %p187 = scmp.le.s32.totalorder 1, %s9
    %p188 = scmp.lt.s32.totalorder %s9, 5
    %p189 = pnand %p187, %p188
    %p190 = pneg %p189
    // Predicated region
    $region29: #{inception_apply.5} parent=5 // pred_check
      _
    $region30: #{inception_apply.5} parent=5 // pred_check_branch
      %192 = sbr.rel (%p189) target = $region32
    $region31: #{inception_apply.5} parent=5 // pred_region
      %s193 = ssub.s32 %s9, 1
      %s194 = smul.u32 16, %s19
      %p195 = scmp.lt.s32.totalorder %s194, 63
      %s196 = scalar_select %p195, %s194, 63
      %p197 = scmp.lt.s32.totalorder %s21, 0
      %s198 = scalar_select %p197, %s21, 0
      %s199 = sadd.s32 %s198, %s196
      %s200 = smul.addr %s199, 4
      %s201 = scalar_lea.vmem %s0, %s200
      %p202 = pneg %p56
      %p203 = pneg %p53
      %s204 = smul.u32 16, %s21
      %p205 = scmp.lt.s32.totalorder %s204, 15
      %s206 = scalar_select %p205, %s204, 15
      %p207 = scmp.lt.s32.totalorder %s20, 0
      %s208 = scalar_select %p207, %s20, 0
      %s209 = sadd.s32 %s208, %s206
      %s210 = smul.addr %s209, 4
      %s211 = scalar_lea.vmem %s1, %s210
      %p212 = pneg %p84
      %p213 = pneg %p81
      %p214 = scmp.lt.s32.totalorder %s20, 0
      %s215 = scalar_select %p214, %s20, 0
      %s216 = scalar_lea.vmem %s2, %s215
      %p217 = pneg %p110
      %p218 = pneg %p107
      %p219 = pneg %p138
      %p220 = pneg %p135
      %s221 = smul.u32 16, %s19
      %p222 = scmp.lt.s32.totalorder %s221, 63
      %s223 = scalar_select %p222, %s221, 63
      %p224 = scmp.lt.s32.totalorder %s20, 0
      %s225 = scalar_select %p224, %s20, 0
      %s226 = sadd.s32 %s225, %s223
      %s227 = smul.addr %s226, 8
      %s228 = scalar_lea.vmem %s3, %s227
      %s229 = smul.u32 16, %s19
      %p230 = scmp.lt.s32.totalorder %s229, 63
      %s231 = scalar_select %p230, %s229, 63
      %p232 = scmp.lt.s32.totalorder %s21, 0
      %s233 = scalar_select %p232, %s21, 0
      %s234 = sadd.s32 %s233, %s231
      %s235 = smul.addr %s234, 4
      %s236 = scalar_lea.vmem %s0, %s235
      %s237 = smul.u32 16, %s19
      %s238 = smul.u32 16, %s21
      %p239 = scmp.lt.s32.totalorder %s238, 15
      %s240 = scalar_select %p239, %s238, 15
      %p241 = scmp.lt.s32.totalorder %s20, 0
      %s242 = scalar_select %p241, %s20, 0
      %s243 = sadd.s32 %s242, %s240
      %s244 = smul.addr %s243, 4
      %s245 = scalar_lea.vmem %s1, %s244
      %s246 = smul.u32 16, %s21
      %p247 = scmp.lt.s32.totalorder %s20, 0
      %s248 = scalar_select %p247, %s20, 0
      %s249 = scalar_lea.vmem %s2, %s248
      %s250 = smul.u32 16, %s19
      %p251 = scmp.lt.s32.totalorder %s250, 63
      %s252 = scalar_select %p251, %s250, 63
      %p253 = scmp.lt.s32.totalorder %s20, 0
      %s254 = scalar_select %p253, %s20, 0
      %s255 = sadd.s32 %s254, %s252
      %s256 = smul.addr %s255, 8
      %s257 = scalar_lea.vmem %s3, %s256
      %s258 = smul.u32 16, %s19
      %p259 = scmp.eq.s32.totalorder %s21, 0
      // Predicated region
      $region33: #{inception_apply.5} parent=31 // pred_check
        %p260 = pneg %p259
      $region34: #{inception_apply.5} parent=31 // pred_check_branch
        %262 = sbr.rel (%p260) target = $region36
      $region35: #{inception_apply.5} parent=31 // pred_region
        %263 = vst [vmem:[#allocation2] sm:$0xff] 0.0
        %264 = vst [vmem:[#allocation2 + $0x8] sm:$0xff] 0.0
        %265 = vst [vmem:[#allocation2 + $0x10] sm:$0xff] 0.0
        %266 = vst [vmem:[#allocation2 + $0x18] sm:$0xff] 0.0
        %267 = vst [vmem:[#allocation2 + $0x20] sm:$0xff] 0.0
        %268 = vst [vmem:[#allocation2 + $0x28] sm:$0xff] 0.0
        %269 = vst [vmem:[#allocation2 + $0x30] sm:$0xff] 0.0
        %270 = vst [vmem:[#allocation2 + $0x38] sm:$0xff] 0.0
        %271 = vst [vmem:[#allocation2 + $0x40] sm:$0xff] 0.0
        %272 = vst [vmem:[#allocation2 + $0x48] sm:$0xff] 0.0
        %273 = vst [vmem:[#allocation2 + $0x50] sm:$0xff] 0.0
        %274 = vst [vmem:[#allocation2 + $0x58] sm:$0xff] 0.0
        %275 = vst [vmem:[#allocation2 + $0x60] sm:$0xff] 0.0
        %276 = vst [vmem:[#allocation2 + $0x68] sm:$0xff] 0.0
        %277 = vst [vmem:[#allocation2 + $0x70] sm:$0xff] 0.0
        %278 = vst [vmem:[#allocation2 + $0x78] sm:$0xff] 0.0
      $region36: #{inception_apply.5} parent=31 // pred_fallthru
        _
      %v279 = vld [vmem:[#allocation2] sm:$0xff]
      %v280 = vld [vmem:[#allocation2 + $0x8] sm:$0xff]
      %v281 = vld [vmem:[#allocation2 + $0x10] sm:$0xff]
      %v282 = vld [vmem:[#allocation2 + $0x18] sm:$0xff]
      %v283 = vld [vmem:[#allocation2 + $0x20] sm:$0xff]
      %v284 = vld [vmem:[#allocation2 + $0x28] sm:$0xff]
      %v285 = vld [vmem:[#allocation2 + $0x30] sm:$0xff]
      %v286 = vld [vmem:[#allocation2 + $0x38] sm:$0xff]
      %v287 = vld [vmem:[#allocation2 + $0x40] sm:$0xff]
      %v288 = vld [vmem:[#allocation2 + $0x48] sm:$0xff]
      %v289 = vld [vmem:[#allocation2 + $0x50] sm:$0xff]
      %v290 = vld [vmem:[#allocation2 + $0x58] sm:$0xff]
      %v291 = vld [vmem:[#allocation2 + $0x60] sm:$0xff]
      %v292 = vld [vmem:[#allocation2 + $0x68] sm:$0xff]
      %v293 = vld [vmem:[#allocation2 + $0x70] sm:$0xff]
      %v294 = vld [vmem:[#allocation2 + $0x78] sm:$0xff]
      %v295 = vld [vmem:[%s236] sm:$0xf]
      %v296 = vld [vmem:[%s236 + $0x4] sm:$0xf]
      %v297 = vld [vmem:[%s236 + $0x8] sm:$0xf]
      %v298 = vld [vmem:[%s236 + $0xc] sm:$0xf]
      %v299 = vld [vmem:[%s236 + $0x10] sm:$0xf]
      %v300 = vld [vmem:[%s236 + $0x14] sm:$0xf]
      %v301 = vld [vmem:[%s236 + $0x18] sm:$0xf]
      %v302 = vld [vmem:[%s236 + $0x1c] sm:$0xf]
      %v303 = vld [vmem:[%s236 + $0x20] sm:$0xf]
      %v304 = vld [vmem:[%s236 + $0x24] sm:$0xf]
      %v305 = vld [vmem:[%s236 + $0x28] sm:$0xf]
      %v306 = vld [vmem:[%s236 + $0x2c] sm:$0xf]
      %v307 = vld [vmem:[%s236 + $0x30] sm:$0xf]
      %v308 = vld [vmem:[%s236 + $0x34] sm:$0xf]
      %v309 = vld [vmem:[%s236 + $0x38] sm:$0xf]
      %v310 = vld [vmem:[%s236 + $0x3c] sm:$0xf]
      %v311 = vld [vmem:[%s245] sm:$0xf]
      %v312 = vld [vmem:[%s245 + $0x4] sm:$0xf]
      %v313 = vld [vmem:[%s245 + $0x8] sm:$0xf]
      %v314 = vld [vmem:[%s245 + $0xc] sm:$0xf]
      %v315 = vld [vmem:[%s245 + $0x10] sm:$0xf]
      %v316 = vld [vmem:[%s245 + $0x14] sm:$0xf]
      %v317 = vld [vmem:[%s245 + $0x18] sm:$0xf]
      %v318 = vld [vmem:[%s245 + $0x1c] sm:$0xf]
      %v319 = vld [vmem:[%s245 + $0x20] sm:$0xf]
      %v320 = vld [vmem:[%s245 + $0x24] sm:$0xf]
      %v321 = vld [vmem:[%s245 + $0x28] sm:$0xf]
      %v322 = vld [vmem:[%s245 + $0x2c] sm:$0xf]
      %v323 = vld [vmem:[%s245 + $0x30] sm:$0xf]
      %v324 = vld [vmem:[%s245 + $0x34] sm:$0xf]
      %v325 = vld [vmem:[%s245 + $0x38] sm:$0xf]
      %v326 = vld [vmem:[%s245 + $0x3c] sm:$0xf]
      %v343 = vunpack.c.l.b16 %v295
      %v344 = vunpack.c.l.b16 %v296
      %v345 = vunpack.c.l.b16 %v297
      %v346 = vunpack.c.l.b16 %v298
      %v347 = vunpack.c.l.b16 %v299
      %v348 = vunpack.c.l.b16 %v300
      %v349 = vunpack.c.l.b16 %v301
      %v350 = vunpack.c.l.b16 %v302
      %v351 = vunpack.c.l.b16 %v303
      %v352 = vunpack.c.l.b16 %v304
      %v353 = vunpack.c.l.b16 %v305
      %v354 = vunpack.c.l.b16 %v306
      %v355 = vunpack.c.l.b16 %v307
      %v356 = vunpack.c.l.b16 %v308
      %v357 = vunpack.c.l.b16 %v309
      %v358 = vunpack.c.l.b16 %v310
      %v359 = vpack.c.b16 %v344, %v343
      %v360 = vpack.c.b16 %v346, %v345
      %v361 = vpack.c.b16 %v348, %v347
      %v362 = vpack.c.b16 %v350, %v349
      %v363 = vpack.c.b16 %v352, %v351
      %v364 = vpack.c.b16 %v354, %v353
      %v365 = vpack.c.b16 %v356, %v355
      %v366 = vpack.c.b16 %v358, %v357
      %v391 = vunpack.c.l.b16 %v311
      %v392 = vunpack.c.l.b16 %v312
      %v393 = vunpack.c.l.b16 %v313
      %v394 = vunpack.c.l.b16 %v314
      %v395 = vunpack.c.l.b16 %v315
      %v396 = vunpack.c.l.b16 %v316
      %v397 = vunpack.c.l.b16 %v317
      %v398 = vunpack.c.l.b16 %v318
      %v399 = vunpack.c.l.b16 %v319
      %v400 = vunpack.c.l.b16 %v320
      %v401 = vunpack.c.l.b16 %v321
      %v402 = vunpack.c.l.b16 %v322
      %v403 = vunpack.c.l.b16 %v323
      %v404 = vunpack.c.l.b16 %v324
      %v405 = vunpack.c.l.b16 %v325
      %v406 = vunpack.c.l.b16 %v326
      %v407 = vpack.c.b16 %v392, %v391
      %v408 = vpack.c.b16 %v394, %v393
      %v409 = vpack.c.b16 %v396, %v395
      %v410 = vpack.c.b16 %v398, %v397
      %v411 = vpack.c.b16 %v400, %v399
      %v412 = vpack.c.b16 %v402, %v401
      %v413 = vpack.c.b16 %v404, %v403
      %v414 = vpack.c.b16 %v406, %v405
      %423 = vmatpush.bf16.msra.mxu0 %v414
      %424 = vmatpush.bf16.msra.mxu0 %v413
      %425 = vmatpush.bf16.msra.mxu0 %v412
      %426 = vmatpush.bf16.msra.mxu0 %v411
      %427 = vmatpush.bf16.msra.mxu0 %v410
      %428 = vmatpush.bf16.msra.mxu0 %v409
      %429 = vmatpush.bf16.msra.mxu0 %v408
      %430 = vmatpush.bf16.msra.mxu0 %v407
      %431 = vmatmul.bf16.gmra.mxu0 %v359
      %v432 = vpop.f32.mrf.mxu0
      %v433 = vadd.f32 0.0, %v432
      %v434 = vpop.f32.mrf.mxu0
      %v435 = vadd.f32 0.0, %v434
      %436 = vmatmul.bf16.gmra.mxu0 %v360
      %v437 = vpop.f32.mrf.mxu0
      %v438 = vadd.f32 0.0, %v437
      %v439 = vpop.f32.mrf.mxu0
      %v440 = vadd.f32 0.0, %v439
      %441 = vmatmul.bf16.gmra.mxu0 %v361
      %v442 = vpop.f32.mrf.mxu0
      %v443 = vadd.f32 0.0, %v442
      %v444 = vpop.f32.mrf.mxu0
      %v445 = vadd.f32 0.0, %v444
      %446 = vmatmul.bf16.gmra.mxu0 %v362
      %v447 = vpop.f32.mrf.mxu0
      %v448 = vadd.f32 0.0, %v447
      %v449 = vpop.f32.mrf.mxu0
      %v450 = vadd.f32 0.0, %v449
      %451 = vmatmul.bf16.gmra.mxu0 %v363
      %v452 = vpop.f32.mrf.mxu0
      %v453 = vadd.f32 0.0, %v452
      %v454 = vpop.f32.mrf.mxu0
      %v455 = vadd.f32 0.0, %v454
      %456 = vmatmul.bf16.gmra.mxu0 %v364
      %v457 = vpop.f32.mrf.mxu0
      %v458 = vadd.f32 0.0, %v457
      %v459 = vpop.f32.mrf.mxu0
      %v460 = vadd.f32 0.0, %v459
      %461 = vmatmul.bf16.gmra.mxu0 %v365
      %v462 = vpop.f32.mrf.mxu0
      %v463 = vadd.f32 0.0, %v462
      %v464 = vpop.f32.mrf.mxu0
      %v465 = vadd.f32 0.0, %v464
      %466 = vmatmul.bf16.gmra.mxu0 %v366
      %v467 = vpop.f32.mrf.mxu0
      %v468 = vadd.f32 0.0, %v467
      %v469 = vpop.f32.mrf.mxu0
      %v470 = vadd.f32 0.0, %v469
      %471 = vdwg.mxu0
      %v472 = vadd.f32 %v279, %v433
      %v473 = vadd.f32 %v280, %v435
      %v474 = vadd.f32 %v281, %v438
      %v475 = vadd.f32 %v282, %v440
      %v476 = vadd.f32 %v283, %v443
      %v477 = vadd.f32 %v284, %v445
      %v478 = vadd.f32 %v285, %v448
      %v479 = vadd.f32 %v286, %v450
      %v480 = vadd.f32 %v287, %v453
      %v481 = vadd.f32 %v288, %v455
      %v482 = vadd.f32 %v289, %v458
      %v483 = vadd.f32 %v290, %v460
      %v484 = vadd.f32 %v291, %v463
      %v485 = vadd.f32 %v292, %v465
      %v486 = vadd.f32 %v293, %v468
      %v487 = vadd.f32 %v294, %v470
      %488 = vst [vmem:[#allocation2] sm:$0xff] %v472
      %489 = vst [vmem:[#allocation2 + $0x8] sm:$0xff] %v473
      %490 = vst [vmem:[#allocation2 + $0x10] sm:$0xff] %v474
      %491 = vst [vmem:[#allocation2 + $0x18] sm:$0xff] %v475
      %492 = vst [vmem:[#allocation2 + $0x20] sm:$0xff] %v476
      %493 = vst [vmem:[#allocation2 + $0x28] sm:$0xff] %v477
      %494 = vst [vmem:[#allocation2 + $0x30] sm:$0xff] %v478
      %495 = vst [vmem:[#allocation2 + $0x38] sm:$0xff] %v479
      %496 = vst [vmem:[#allocation2 + $0x40] sm:$0xff] %v480
      %497 = vst [vmem:[#allocation2 + $0x48] sm:$0xff] %v481
      %498 = vst [vmem:[#allocation2 + $0x50] sm:$0xff] %v482
      %499 = vst [vmem:[#allocation2 + $0x58] sm:$0xff] %v483
      %500 = vst [vmem:[#allocation2 + $0x60] sm:$0xff] %v484
      %501 = vst [vmem:[#allocation2 + $0x68] sm:$0xff] %v485
      %502 = vst [vmem:[#allocation2 + $0x70] sm:$0xff] %v486
      %503 = vst [vmem:[#allocation2 + $0x78] sm:$0xff] %v487
      // Predicated region
      $region37: #{inception_apply.5} parent=31 // pred_check
        %p504 = pneg %p259
      $region38: #{inception_apply.5} parent=31 // pred_check_branch
        %506 = sbr.rel (%p504) target = $region40
      $region39: #{inception_apply.5} parent=31 // pred_region
        %v507 = vld [vmem:[#allocation2] sm:$0xff]
        %v508 = vld [vmem:[#allocation2 + $0x8] sm:$0xff]
        %v509 = vld [vmem:[#allocation2 + $0x10] sm:$0xff]
        %v510 = vld [vmem:[#allocation2 + $0x18] sm:$0xff]
        %v511 = vld [vmem:[#allocation2 + $0x20] sm:$0xff]
        %v512 = vld [vmem:[#allocation2 + $0x28] sm:$0xff]
        %v513 = vld [vmem:[#allocation2 + $0x30] sm:$0xff]
        %v514 = vld [vmem:[#allocation2 + $0x38] sm:$0xff]
        %v515 = vld [vmem:[#allocation2 + $0x40] sm:$0xff]
        %v516 = vld [vmem:[#allocation2 + $0x48] sm:$0xff]
        %v517 = vld [vmem:[#allocation2 + $0x50] sm:$0xff]
        %v518 = vld [vmem:[#allocation2 + $0x58] sm:$0xff]
        %v519 = vld [vmem:[#allocation2 + $0x60] sm:$0xff]
        %v520 = vld [vmem:[#allocation2 + $0x68] sm:$0xff]
        %v521 = vld [vmem:[#allocation2 + $0x70] sm:$0xff]
        %v522 = vld [vmem:[#allocation2 + $0x78] sm:$0xff]
        %v523 = vld [vmem:[%s249] sm:$0x1]
        %v525 = vperm.slane %v523, 0
        %v527 = vadd.f32 %v507, %v525
        %v528 = vadd.f32 %v508, %v525
        %v529 = vadd.f32 %v509, %v525
        %v530 = vadd.f32 %v510, %v525
        %v531 = vadd.f32 %v511, %v525
        %v532 = vadd.f32 %v512, %v525
        %v533 = vadd.f32 %v513, %v525
        %v534 = vadd.f32 %v514, %v525
        %v535 = vadd.f32 %v515, %v525
        %v536 = vadd.f32 %v516, %v525
        %v537 = vadd.f32 %v517, %v525
        %v538 = vadd.f32 %v518, %v525
        %v539 = vadd.f32 %v519, %v525
        %v540 = vadd.f32 %v520, %v525
        %v541 = vadd.f32 %v521, %v525
        %v542 = vadd.f32 %v522, %v525
        %v543 = vmax.f32 %v527, 0.0
        %v544 = vmax.f32 %v528, 0.0
        %v545 = vmax.f32 %v529, 0.0
        %v546 = vmax.f32 %v530, 0.0
        %v547 = vmax.f32 %v531, 0.0
        %v548 = vmax.f32 %v532, 0.0
        %v549 = vmax.f32 %v533, 0.0
        %v550 = vmax.f32 %v534, 0.0
        %v551 = vmax.f32 %v535, 0.0
        %v552 = vmax.f32 %v536, 0.0
        %v553 = vmax.f32 %v537, 0.0
        %v554 = vmax.f32 %v538, 0.0
        %v555 = vmax.f32 %v539, 0.0
        %v556 = vmax.f32 %v540, 0.0
        %v557 = vmax.f32 %v541, 0.0
        %v558 = vmax.f32 %v542, 0.0
        %559 = vst [vmem:[%s257] sm:$0xff] %v543
        %560 = vst [vmem:[%s257 + $0x8] sm:$0xff] %v544
        %561 = vst [vmem:[%s257 + $0x10] sm:$0xff] %v545
        %562 = vst [vmem:[%s257 + $0x18] sm:$0xff] %v546
        %563 = vst [vmem:[%s257 + $0x20] sm:$0xff] %v547
        %564 = vst [vmem:[%s257 + $0x28] sm:$0xff] %v548
        %565 = vst [vmem:[%s257 + $0x30] sm:$0xff] %v549
        %566 = vst [vmem:[%s257 + $0x38] sm:$0xff] %v550
        %567 = vst [vmem:[%s257 + $0x40] sm:$0xff] %v551
        %568 = vst [vmem:[%s257 + $0x48] sm:$0xff] %v552
        %569 = vst [vmem:[%s257 + $0x50] sm:$0xff] %v553
        %570 = vst [vmem:[%s257 + $0x58] sm:$0xff] %v554
        %571 = vst [vmem:[%s257 + $0x60] sm:$0xff] %v555
        %572 = vst [vmem:[%s257 + $0x68] sm:$0xff] %v556
        %573 = vst [vmem:[%s257 + $0x70] sm:$0xff] %v557
        %574 = vst [vmem:[%s257 + $0x78] sm:$0xff] %v558
      $region40: #{inception_apply.5} parent=31 // pred_fallthru
        _
      %s575 = smul.u32 16, %s19
      %p576 = scmp.lt.s32.totalorder %s575, 63
      %s577 = scalar_select %p576, %s575, 63
      %p578 = scmp.lt.s32.totalorder %s20, 0
      %s579 = scalar_select %p578, %s20, 0
      %s580 = sadd.s32 %s579, %s577
      %s581 = smul.addr %s580, 8
      %s582 = scalar_lea.vmem %s3, %s581
      // Predicated region
      $region41: #{inception_apply.5} parent=31 // pred_check
        %p583 = pneg %p135
      $region42: #{inception_apply.5} parent=31 // pred_check_branch
        %585 = sbr.rel (%p583) target = $region44
      $region43: #{inception_apply.5} parent=31 // pred_region
        %s586 = smul.u32 16, %s19
      $region44: #{inception_apply.5} parent=31 // pred_fallthru
        _
    $region32: #{inception_apply.5} parent=5 // pred_fallthru
      _
    %p587 = scmp.le.s32.totalorder 2, %s9
    // Predicated region
    $region45: #{inception_apply.5} parent=5 // pred_check
      %p588 = pneg %p587
    $region46: #{inception_apply.5} parent=5 // pred_check_branch
      %590 = sbr.rel (%p588) target = $region48
    $region47: #{inception_apply.5} parent=5 // pred_region
      %s591 = ssub.s32 %s9, 2
      // Predicated region
      $region49: #{inception_apply.5} parent=47 // pred_check
        %p592 = pneg %p141
      $region50: #{inception_apply.5} parent=47 // pred_check_branch
        %594 = sbr.rel (%p592) target = $region52
      $region51: #{inception_apply.5} parent=47 // pred_region
        %s595 = smul.u32 16, %s22
        %p596 = scmp.lt.s32.totalorder %s595, 63
        %s597 = scalar_select %p596, %s595, 63
        %p598 = scmp.lt.s32.totalorder %s23, 0
        %s599 = scalar_select %p598, %s23, 0
        %s600 = sadd.s32 %s599, %s597
        %s601 = smul.addr %s600, 8
        %s602 = scalar_lea.vmem %s3, %s601
      $region52: #{inception_apply.5} parent=47 // pred_fallthru
        _
    $region48: #{inception_apply.5} parent=5 // pred_fallthru
      _
  $region6: #{inception_apply.5} parent=0 // loop_footer
    %s13 = sadd.s32 1, %s9
  $region7: #{inception_apply.5} parent=0 // loop_footer_branch
    %8 = sbr.rel target = $region3
  $region8: #{inception_apply.5} parent=0 // loop_exit
    _

// kernel: inception_apply.7
$region0: #{inception_apply.7}
  #allocation0 [shape = 'u32[]', space=smem, size = 0x4, offset = 0x4, fixed_abs, tag = 'smem constant byte address 0x4 - core index']
  #allocation1 [shape = 'u32[72,128]{1,0:T(1,128)}', space=vmem, size = 0x9000, scoped, tag = 'internal scratch']
  #allocation2 [shape = 'f32[128,128]{1,0:T(8,128)}', space=vmem, size = 0x10000, scoped, tag = 'scratch operand']
  %s0 = inlined_call_operand.vmem [shape: bf16[512,256], index: 0, kind: input, shape index: {}]
  %s1 = inlined_call_operand.vmem [shape: bf16[256,128], index: 1, kind: input, shape index: {}]
  %s2 = inlined_call_operand.vmem [shape: f32[1,128], index: 2, kind: input, shape index: {}]
  %s3 = inlined_call_operand.vmem [shape: f32[512,128], index: 3, kind: output, shape index: {}]
  %s4 = sld [smem:[#allocation0]]
  $region53: #{inception_apply.7} parent=0
    _
  %s6 = ssub.s32 1, %s4
  %s7 = scalar_select 0, %s6, %s4
  loop: start=0, step=1, limit=6
  $region2: #{inception_apply.7} parent=0 // loop_pre_header
    _
  $region3: #{inception_apply.7} parent=0 // loop_header
    %s9 = sphi 0, %s13
    %p10 = scmp.ge.s32.totalorder %s9, 6
    %s16 = sphi 0, %s35
    %s17 = sphi 0, %s31
    %s18 = sphi 0, %s27
    %s19 = sphi 0, %s16
    %s20 = sphi 0, %s17
    %s21 = sphi 0, %s18
    %s22 = sphi 0, %s19
    %s23 = sphi 0, %s20
    %s24 = sphi 0, %s21
    %s40 = sphi 0, %s42
    %s43 = sphi 0, %s40
    %s44 = sphi 0, %s43
    %s60 = sphi 0, %s44
    %s68 = sphi 0, %s70
    %s71 = sphi 0, %s68
    %s72 = sphi 0, %s71
    %s88 = sphi 0, %s72
    %s94 = sphi 0, %s96
    %s97 = sphi 0, %s94
    %s98 = sphi 0, %s97
    %s114 = sphi 0, %s98
    %s122 = sphi 0, %s124
    %s125 = sphi 0, %s122
    %s126 = sphi 0, %s125
    %s142 = sphi 0, %s126
  $region4: #{inception_apply.7} parent=0 // loop_header_branch
    %12 = sbr.rel (%p10) target = $region8
  $region5: #{inception_apply.7} parent=0 // loop_body
    %s14 = ssub.s32 %s9, 1
    %s15 = ssub.s32 %s9, 2
    %s25 = sadd.s32 1, %s18
    %p26 = scmp.ge.s32.totalorder %s25, 1
    %s27 = scalar_select %p26, 0, %s25
    %s28 = sadd.s32 1, %s17
    %s29 = scalar_select %p26, %s28, %s17
    %p30 = scmp.ge.s32.totalorder %s29, 1
    %s31 = scalar_select %p30, 0, %s29
    %s32 = sadd.s32 1, %s16
    %s33 = scalar_select %p30, %s32, %s16
    %p34 = scmp.ge.s32.totalorder %s33, 4
    %s35 = scalar_select %p34, 0, %s33
    %s36 = ssub.s32 %s16, %s35
    %s37 = ssub.s32 %s18, %s27
    %s38 = sor.u32 %s36, %s37
    %p39 = scmp.eq.s32.totalorder %s38, 0
    %s41 = sadd.s32 %s40, 1
    %s42 = scalar_select %p39, %s40, %s41
    %p45 = pneg %p39
    %p46 = scmp.eq.s32.totalorder %s9, 3
    %p47 = por %p45, %p46
    %p48 = scmp.ne.s32.totalorder %s40, %s43
    %p49 = scmp.eq.s32.totalorder %s9, 0
    %p50 = por %p48, %p49
    %p51 = scmp.ne.s32.totalorder %s40, %s43
    %p52 = scmp.eq.s32.totalorder %s14, 3
    %p53 = por %p51, %p52
    %p54 = scmp.ne.s32.totalorder %s43, %s44
    %p55 = scmp.eq.s32.totalorder %s14, 0
    %p56 = por %p54, %p55
    %p57 = scmp.ne.s32.totalorder %s43, %s44
    %p58 = scmp.eq.s32.totalorder %s15, 3
    %p59 = por %p57, %p58
    %p61 = scmp.ne.s32.totalorder %s44, %s60
    %p62 = scmp.eq.s32.totalorder %s15, 0
    %p63 = por %p61, %p62
    %s64 = ssub.s32 %s18, %s27
    %s65 = ssub.s32 %s17, %s31
    %s66 = sor.u32 %s64, %s65
    %p67 = scmp.eq.s32.totalorder %s66, 0
    %s69 = sadd.s32 %s68, 1
    %s70 = scalar_select %p67, %s68, %s69
    %p73 = pneg %p67
    %p74 = scmp.eq.s32.totalorder %s9, 3
    %p75 = por %p73, %p74
    %p76 = scmp.ne.s32.totalorder %s68, %s71
    %p77 = scmp.eq.s32.totalorder %s9, 0
    %p78 = por %p76, %p77
    %p79 = scmp.ne.s32.totalorder %s68, %s71
    %p80 = scmp.eq.s32.totalorder %s14, 3
    %p81 = por %p79, %p80
    %p82 = scmp.ne.s32.totalorder %s71, %s72
    %p83 = scmp.eq.s32.totalorder %s14, 0
    %p84 = por %p82, %p83
    %p85 = scmp.ne.s32.totalorder %s71, %s72
    %p86 = scmp.eq.s32.totalorder %s15, 3
    %p87 = por %p85, %p86
    %p89 = scmp.ne.s32.totalorder %s72, %s88
    %p90 = scmp.eq.s32.totalorder %s15, 0
    %p91 = por %p89, %p90
    %s92 = ssub.s32 %s17, %s31
    %p93 = scmp.eq.s32.totalorder %s92, 0
    %s95 = sadd.s32 %s94, 1
    %s96 = scalar_select %p93, %s94, %s95
    %p99 = pneg %p93
    %p100 = scmp.eq.s32.totalorder %s9, 3
    %p101 = por %p99, %p100
    %p102 = scmp.ne.s32.totalorder %s94, %s97
    %p103 = scmp.eq.s32.totalorder %s9, 0
    %p104 = por %p102, %p103
    %p105 = scmp.ne.s32.totalorder %s94, %s97
    %p106 = scmp.eq.s32.totalorder %s14, 3
    %p107 = por %p105, %p106
    %p108 = scmp.ne.s32.totalorder %s97, %s98
    %p109 = scmp.eq.s32.totalorder %s14, 0
    %p110 = por %p108, %p109
    %p111 = scmp.ne.s32.totalorder %s97, %s98
    %p112 = scmp.eq.s32.totalorder %s15, 3
    %p113 = por %p111, %p112
    %p115 = scmp.ne.s32.totalorder %s98, %s114
    %p116 = scmp.eq.s32.totalorder %s15, 0
    %p117 = por %p115, %p116
    %s118 = ssub.s32 %s16, %s35
    %s119 = ssub.s32 %s17, %s31
    %s120 = sor.u32 %s118, %s119
    %p121 = scmp.eq.s32.totalorder %s120, 0
    %s123 = sadd.s32 %s122, 1
    %s124 = scalar_select %p121, %s122, %s123
    %p127 = pneg %p121
    %p128 = scmp.eq.s32.totalorder %s9, 3
    %p129 = por %p127, %p128
    %p130 = scmp.ne.s32.totalorder %s122, %s125
    %p131 = scmp.eq.s32.totalorder %s9, 0
    %p132 = por %p130, %p131
    %p133 = scmp.ne.s32.totalorder %s122, %s125
    %p134 = scmp.eq.s32.totalorder %s14, 3
    %p135 = por %p133, %p134
    %p136 = scmp.ne.s32.totalorder %s125, %s126
    %p137 = scmp.eq.s32.totalorder %s14, 0
    %p138 = por %p136, %p137
    %p139 = scmp.ne.s32.totalorder %s125, %s126
    %p140 = scmp.eq.s32.totalorder %s15, 3
    %p141 = por %p139, %p140
    %p143 = scmp.ne.s32.totalorder %s126, %s142
    %p144 = scmp.eq.s32.totalorder %s15, 0
    %p145 = por %p143, %p144
    %p146 = scmp.le.s32.totalorder 1, %s9
    %p147 = scmp.lt.s32.totalorder %s9, 5
    %p148 = pnand %p146, %p147
    %p149 = pneg %p148
    // Predicated region
    $region9: #{inception_apply.7} parent=5 // pred_check
      _
    $region10: #{inception_apply.7} parent=5 // pred_check_branch
      %151 = sbr.rel (%p148) target = $region12
    $region11: #{inception_apply.7} parent=5 // pred_region
      %s152 = ssub.s32 %s9, 1
      // Predicated region
      $region13: #{inception_apply.7} parent=11 // pred_check
        %p153 = pneg %p84
      $region14: #{inception_apply.7} parent=11 // pred_check_branch
        %155 = sbr.rel (%p153) target = $region16
      $region15: #{inception_apply.7} parent=11 // pred_region
        %s156 = smul.u32 32, %s21
        %p157 = scmp.lt.s32.totalorder %s156, 31
        %s158 = scalar_select %p157, %s156, 31
        %p159 = scmp.lt.s32.totalorder %s20, 0
        %s160 = scalar_select %p159, %s20, 0
        %s161 = sadd.s32 %s160, %s158
        %s162 = smul.addr %s161, 4
        %s163 = scalar_lea.vmem %s1, %s162
        %s164 = smul.u32 32, %s21
      $region16: #{inception_apply.7} parent=11 // pred_fallthru
        _
      // Predicated region
      $region17: #{inception_apply.7} parent=11 // pred_check
        %p165 = pneg %p110
      $region18: #{inception_apply.7} parent=11 // pred_check_branch
        %167 = sbr.rel (%p165) target = $region20
      $region19: #{inception_apply.7} parent=11 // pred_region
        %p168 = scmp.lt.s32.totalorder %s20, 0
        %s169 = scalar_select %p168, %s20, 0
        %s170 = scalar_lea.vmem %s2, %s169
      $region20: #{inception_apply.7} parent=11 // pred_fallthru
        _
    $region12: #{inception_apply.7} parent=5 // pred_fallthru
      _
    %p171 = scmp.lt.s32.totalorder %s9, 4
    // Predicated region
    $region21: #{inception_apply.7} parent=5 // pred_check
      %p172 = pneg %p171
    $region22: #{inception_apply.7} parent=5 // pred_check_branch
      %174 = sbr.rel (%p172) target = $region24
    $region23: #{inception_apply.7} parent=5 // pred_region
      // Predicated region
      $region25: #{inception_apply.7} parent=23 // pred_check
        %p175 = pneg %p50
      $region26: #{inception_apply.7} parent=23 // pred_check_branch
        %177 = sbr.rel (%p175) target = $region28
      $region27: #{inception_apply.7} parent=23 // pred_region
        %s178 = smul.u32 16, %s16
        %s179 = smul.u32 2, %s18
        %p180 = scmp.lt.s32.totalorder %s178, 63
        %s181 = scalar_select %p180, %s178, 63
        %p182 = scmp.lt.s32.totalorder %s179, 1
        %s183 = scalar_select %p182, %s179, 1
        %s184 = smul.addr %s181, 2
        %s185 = sadd.s32 %s183, %s184
        %s186 = smul.addr %s185, 4
        %s187 = scalar_lea.vmem %s0, %s186
        %s188 = smul.u32 16, %s16
        %s189 = smul.u32 2, %s18
      $region28: #{inception_apply.7} parent=23 // pred_fallthru
        _
    $region24: #{inception_apply.7} parent=5 // pred_fallthru
      _
    %p190 = scmp.le.s32.totalorder 1, %s9
    %p191 = scmp.lt.s32.totalorder %s9, 5
    %p192 = pnand %p190, %p191
    %p193 = pneg %p192
    // Predicated region
    $region29: #{inception_apply.7} parent=5 // pred_check
      _
    $region30: #{inception_apply.7} parent=5 // pred_check_branch
      %195 = sbr.rel (%p192) target = $region32
    $region31: #{inception_apply.7} parent=5 // pred_region
      %s196 = ssub.s32 %s9, 1
      %s197 = smul.u32 16, %s19
      %s198 = smul.u32 2, %s21
      %p199 = scmp.lt.s32.totalorder %s197, 63
      %s200 = scalar_select %p199, %s197, 63
      %p201 = scmp.lt.s32.totalorder %s198, 1
      %s202 = scalar_select %p201, %s198, 1
      %s203 = smul.addr %s200, 2
      %s204 = sadd.s32 %s202, %s203
      %s205 = smul.addr %s204, 4
      %s206 = scalar_lea.vmem %s0, %s205
      %p207 = pneg %p56
      %p208 = pneg %p53
      %s209 = smul.u32 32, %s21
      %p210 = scmp.lt.s32.totalorder %s209, 31
      %s211 = scalar_select %p210, %s209, 31
      %p212 = scmp.lt.s32.totalorder %s20, 0
      %s213 = scalar_select %p212, %s20, 0
      %s214 = sadd.s32 %s213, %s211
      %s215 = smul.addr %s214, 4
      %s216 = scalar_lea.vmem %s1, %s215
      %p217 = pneg %p84
      %p218 = pneg %p81
      %p219 = scmp.lt.s32.totalorder %s20, 0
      %s220 = scalar_select %p219, %s20, 0
      %s221 = scalar_lea.vmem %s2, %s220
      %p222 = pneg %p110
      %p223 = pneg %p107
      %p224 = pneg %p138
      %p225 = pneg %p135
      %s226 = smul.u32 16, %s19
      %p227 = scmp.lt.s32.totalorder %s226, 63
      %s228 = scalar_select %p227, %s226, 63
      %p229 = scmp.lt.s32.totalorder %s20, 0
      %s230 = scalar_select %p229, %s20, 0
      %s231 = sadd.s32 %s230, %s228
      %s232 = smul.addr %s231, 8
      %s233 = scalar_lea.vmem %s3, %s232
      %s234 = smul.u32 16, %s19
      %s235 = smul.u32 2, %s21
      %p236 = scmp.lt.s32.totalorder %s234, 63
      %s237 = scalar_select %p236, %s234, 63
      %p238 = scmp.lt.s32.totalorder %s235, 1
      %s239 = scalar_select %p238, %s235, 1
      %s240 = smul.addr %s237, 2
      %s241 = sadd.s32 %s239, %s240
      %s242 = smul.addr %s241, 4
      %s243 = scalar_lea.vmem %s0, %s242
      %s244 = smul.u32 16, %s19
      %s245 = smul.u32 2, %s21
      %s246 = smul.u32 32, %s21
      %p247 = scmp.lt.s32.totalorder %s246, 31
      %s248 = scalar_select %p247, %s246, 31
      %p249 = scmp.lt.s32.totalorder %s20, 0
      %s250 = scalar_select %p249, %s20, 0
      %s251 = sadd.s32 %s250, %s248
      %s252 = smul.addr %s251, 4
      %s253 = scalar_lea.vmem %s1, %s252
      %s254 = smul.u32 32, %s21
      %p255 = scmp.lt.s32.totalorder %s20, 0
      %s256 = scalar_select %p255, %s20, 0
      %s257 = scalar_lea.vmem %s2, %s256
      %s258 = smul.u32 16, %s19
      %p259 = scmp.lt.s32.totalorder %s258, 63
      %s260 = scalar_select %p259, %s258, 63
      %p261 = scmp.lt.s32.totalorder %s20, 0
      %s262 = scalar_select %p261, %s20, 0
      %s263 = sadd.s32 %s262, %s260
      %s264 = smul.addr %s263, 8
      %s265 = scalar_lea.vmem %s3, %s264
      %s266 = smul.u32 16, %s19
      %p267 = scmp.eq.s32.totalorder %s21, 0
      // Predicated region
      $region33: #{inception_apply.7} parent=31 // pred_check
        %p268 = pneg %p267
      $region34: #{inception_apply.7} parent=31 // pred_check_branch
        %270 = sbr.rel (%p268) target = $region36
      $region35: #{inception_apply.7} parent=31 // pred_region
        %271 = vst [vmem:[#allocation2] sm:$0xff] 0.0
        %272 = vst [vmem:[#allocation2 + $0x8] sm:$0xff] 0.0
        %273 = vst [vmem:[#allocation2 + $0x10] sm:$0xff] 0.0
        %274 = vst [vmem:[#allocation2 + $0x18] sm:$0xff] 0.0
        %275 = vst [vmem:[#allocation2 + $0x20] sm:$0xff] 0.0
        %276 = vst [vmem:[#allocation2 + $0x28] sm:$0xff] 0.0
        %277 = vst [vmem:[#allocation2 + $0x30] sm:$0xff] 0.0
        %278 = vst [vmem:[#allocation2 + $0x38] sm:$0xff] 0.0
        %279 = vst [vmem:[#allocation2 + $0x40] sm:$0xff] 0.0
        %280 = vst [vmem:[#allocation2 + $0x48] sm:$0xff] 0.0
        %281 = vst [vmem:[#allocation2 + $0x50] sm:$0xff] 0.0
        %282 = vst [vmem:[#allocation2 + $0x58] sm:$0xff] 0.0
        %283 = vst [vmem:[#allocation2 + $0x60] sm:$0xff] 0.0
        %284 = vst [vmem:[#allocation2 + $0x68] sm:$0xff] 0.0
        %285 = vst [vmem:[#allocation2 + $0x70] sm:$0xff] 0.0
        %286 = vst [vmem:[#allocation2 + $0x78] sm:$0xff] 0.0
      $region36: #{inception_apply.7} parent=31 // pred_fallthru
        _
      %v287 = vld [vmem:[#allocation2] sm:$0xff]
      %v288 = vld [vmem:[#allocation2 + $0x8] sm:$0xff]
      %v289 = vld [vmem:[#allocation2 + $0x10] sm:$0xff]
      %v290 = vld [vmem:[#allocation2 + $0x18] sm:$0xff]
      %v291 = vld [vmem:[#allocation2 + $0x20] sm:$0xff]
      %v292 = vld [vmem:[#allocation2 + $0x28] sm:$0xff]
      %v293 = vld [vmem:[#allocation2 + $0x30] sm:$0xff]
      %v294 = vld [vmem:[#allocation2 + $0x38] sm:$0xff]
      %v295 = vld [vmem:[#allocation2 + $0x40] sm:$0xff]
      %v296 = vld [vmem:[#allocation2 + $0x48] sm:$0xff]
      %v297 = vld [vmem:[#allocation2 + $0x50] sm:$0xff]
      %v298 = vld [vmem:[#allocation2 + $0x58] sm:$0xff]
      %v299 = vld [vmem:[#allocation2 + $0x60] sm:$0xff]
      %v300 = vld [vmem:[#allocation2 + $0x68] sm:$0xff]
      %v301 = vld [vmem:[#allocation2 + $0x70] sm:$0xff]
      %v302 = vld [vmem:[#allocation2 + $0x78] sm:$0xff]
      %v303 = vld [vmem:[%s243] sm:$0xff]
      %v304 = vld [vmem:[%s243 + $0x8] sm:$0xff]
      %v305 = vld [vmem:[%s243 + $0x10] sm:$0xff]
      %v306 = vld [vmem:[%s243 + $0x18] sm:$0xff]
      %v307 = vld [vmem:[%s243 + $0x20] sm:$0xff]
      %v308 = vld [vmem:[%s243 + $0x28] sm:$0xff]
      %v309 = vld [vmem:[%s243 + $0x30] sm:$0xff]
      %v310 = vld [vmem:[%s243 + $0x38] sm:$0xff]
      %v311 = vld [vmem:[%s243 + $0x40] sm:$0xff]
      %v312 = vld [vmem:[%s243 + $0x48] sm:$0xff]
      %v313 = vld [vmem:[%s243 + $0x50] sm:$0xff]
      %v314 = vld [vmem:[%s243 + $0x58] sm:$0xff]
      %v315 = vld [vmem:[%s243 + $0x60] sm:$0xff]
      %v316 = vld [vmem:[%s243 + $0x68] sm:$0xff]
      %v317 = vld [vmem:[%s243 + $0x70] sm:$0xff]
      %v318 = vld [vmem:[%s243 + $0x78] sm:$0xff]
      %v319 = vld [vmem:[%s253] sm:$0xf]
      %v320 = vld [vmem:[%s253 + $0x4] sm:$0xf]
      %v321 = vld [vmem:[%s253 + $0x8] sm:$0xf]
      %v322 = vld [vmem:[%s253 + $0xc] sm:$0xf]
      %v323 = vld [vmem:[%s253 + $0x10] sm:$0xf]
      %v324 = vld [vmem:[%s253 + $0x14] sm:$0xf]
      %v325 = vld [vmem:[%s253 + $0x18] sm:$0xf]
      %v326 = vld [vmem:[%s253 + $0x1c] sm:$0xf]
      %v327 = vld [vmem:[%s253 + $0x20] sm:$0xf]
      %v328 = vld [vmem:[%s253 + $0x24] sm:$0xf]
      %v329 = vld [vmem:[%s253 + $0x28] sm:$0xf]
      %v330 = vld [vmem:[%s253 + $0x2c] sm:$0xf]
      %v331 = vld [vmem:[%s253 + $0x30] sm:$0xf]
      %v332 = vld [vmem:[%s253 + $0x34] sm:$0xf]
      %v333 = vld [vmem:[%s253 + $0x38] sm:$0xf]
      %v334 = vld [vmem:[%s253 + $0x3c] sm:$0xf]
      %v335 = vld [vmem:[%s253 + $0x40] sm:$0xf]
      %v336 = vld [vmem:[%s253 + $0x44] sm:$0xf]
      %v337 = vld [vmem:[%s253 + $0x48] sm:$0xf]
      %v338 = vld [vmem:[%s253 + $0x4c] sm:$0xf]
      %v339 = vld [vmem:[%s253 + $0x50] sm:$0xf]
      %v340 = vld [vmem:[%s253 + $0x54] sm:$0xf]
      %v341 = vld [vmem:[%s253 + $0x58] sm:$0xf]
      %v342 = vld [vmem:[%s253 + $0x5c] sm:$0xf]
      %v343 = vld [vmem:[%s253 + $0x60] sm:$0xf]
      %v344 = vld [vmem:[%s253 + $0x64] sm:$0xf]
      %v345 = vld [vmem:[%s253 + $0x68] sm:$0xf]
      %v346 = vld [vmem:[%s253 + $0x6c] sm:$0xf]
      %v347 = vld [vmem:[%s253 + $0x70] sm:$0xf]
      %v348 = vld [vmem:[%s253 + $0x74] sm:$0xf]
      %v349 = vld [vmem:[%s253 + $0x78] sm:$0xf]
      %v350 = vld [vmem:[%s253 + $0x7c] sm:$0xf]
      %v367 = vunpack.c.l.b16 %v303
      %v368 = vunpack.c.h.b16 %v303
      %v369 = vunpack.c.l.b16 %v304
      %v370 = vunpack.c.h.b16 %v304
      %v371 = vunpack.c.l.b16 %v305
      %v372 = vunpack.c.h.b16 %v305
      %v373 = vunpack.c.l.b16 %v306
      %v374 = vunpack.c.h.b16 %v306
      %v375 = vunpack.c.l.b16 %v307
      %v376 = vunpack.c.h.b16 %v307
      %v377 = vunpack.c.l.b16 %v308
      %v378 = vunpack.c.h.b16 %v308
      %v379 = vunpack.c.l.b16 %v309
      %v380 = vunpack.c.h.b16 %v309
      %v381 = vunpack.c.l.b16 %v310
      %v382 = vunpack.c.h.b16 %v310
      %v383 = vunpack.c.l.b16 %v311
      %v384 = vunpack.c.h.b16 %v311
      %v385 = vunpack.c.l.b16 %v312
      %v386 = vunpack.c.h.b16 %v312
      %v387 = vunpack.c.l.b16 %v313
      %v388 = vunpack.c.h.b16 %v313
      %v389 = vunpack.c.l.b16 %v314
      %v390 = vunpack.c.h.b16 %v314
      %v391 = vunpack.c.l.b16 %v315
      %v392 = vunpack.c.h.b16 %v315
      %v393 = vunpack.c.l.b16 %v316
      %v394 = vunpack.c.h.b16 %v316
      %v395 = vunpack.c.l.b16 %v317
      %v396 = vunpack.c.h.b16 %v317
      %v397 = vunpack.c.l.b16 %v318
      %v398 = vunpack.c.h.b16 %v318
      %v399 = vpack.c.b16 %v369, %v367
      %v400 = vpack.c.b16 %v370, %v368
      %v401 = vpack.c.b16 %v373, %v371
      %v402 = vpack.c.b16 %v374, %v372
      %v403 = vpack.c.b16 %v377, %v375
      %v404 = vpack.c.b16 %v378, %v376
      %v405 = vpack.c.b16 %v381, %v379
      %v406 = vpack.c.b16 %v382, %v380
      %v407 = vpack.c.b16 %v385, %v383
      %v408 = vpack.c.b16 %v386, %v384
      %v409 = vpack.c.b16 %v389, %v387
      %v410 = vpack.c.b16 %v390, %v388
      %v411 = vpack.c.b16 %v393, %v391
      %v412 = vpack.c.b16 %v394, %v392
      %v413 = vpack.c.b16 %v397, %v395
      %v414 = vpack.c.b16 %v398, %v396
      %v463 = vunpack.c.l.b16 %v319
      %v464 = vunpack.c.l.b16 %v320
      %v465 = vunpack.c.l.b16 %v321
      %v466 = vunpack.c.l.b16 %v322
      %v467 = vunpack.c.l.b16 %v323
      %v468 = vunpack.c.l.b16 %v324
      %v469 = vunpack.c.l.b16 %v325
      %v470 = vunpack.c.l.b16 %v326
      %v471 = vunpack.c.l.b16 %v327
      %v472 = vunpack.c.l.b16 %v328
      %v473 = vunpack.c.l.b16 %v329
      %v474 = vunpack.c.l.b16 %v330
      %v475 = vunpack.c.l.b16 %v331
      %v476 = vunpack.c.l.b16 %v332
      %v477 = vunpack.c.l.b16 %v333
      %v478 = vunpack.c.l.b16 %v334
      %v479 = vunpack.c.l.b16 %v335
      %v480 = vunpack.c.l.b16 %v336
      %v481 = vunpack.c.l.b16 %v337
      %v482 = vunpack.c.l.b16 %v338
      %v483 = vunpack.c.l.b16 %v339
      %v484 = vunpack.c.l.b16 %v340
      %v485 = vunpack.c.l.b16 %v341
      %v486 = vunpack.c.l.b16 %v342
      %v487 = vunpack.c.l.b16 %v343
      %v488 = vunpack.c.l.b16 %v344
      %v489 = vunpack.c.l.b16 %v345
      %v490 = vunpack.c.l.b16 %v346
      %v491 = vunpack.c.l.b16 %v347
      %v492 = vunpack.c.l.b16 %v348
      %v493 = vunpack.c.l.b16 %v349
      %v494 = vunpack.c.l.b16 %v350
      %v495 = vpack.c.b16 %v464, %v463
      %v496 = vpack.c.b16 %v466, %v465
      %v497 = vpack.c.b16 %v468, %v467
      %v498 = vpack.c.b16 %v470, %v469
      %v499 = vpack.c.b16 %v472, %v471
      %v500 = vpack.c.b16 %v474, %v473
      %v501 = vpack.c.b16 %v476, %v475
      %v502 = vpack.c.b16 %v478, %v477
      %v503 = vpack.c.b16 %v480, %v479
      %v504 = vpack.c.b16 %v482, %v481
      %v505 = vpack.c.b16 %v484, %v483
      %v506 = vpack.c.b16 %v486, %v485
      %v507 = vpack.c.b16 %v488, %v487
      %v508 = vpack.c.b16 %v490, %v489
      %v509 = vpack.c.b16 %v492, %v491
      %v510 = vpack.c.b16 %v494, %v493
      %527 = vmatpush.bf16.msra.mxu0 %v502
      %528 = vmatpush.bf16.msra.mxu0 %v501
      %529 = vmatpush.bf16.msra.mxu0 %v500
      %530 = vmatpush.bf16.msra.mxu0 %v499
      %531 = vmatpush.bf16.msra.mxu0 %v498
      %532 = vmatpush.bf16.msra.mxu0 %v497
      %533 = vmatpush.bf16.msra.mxu0 %v496
      %534 = vmatpush.bf16.msra.mxu0 %v495
      %535 = vmatmul.bf16.gmra.mxu0 %v399
      %v536 = vpop.f32.mrf.mxu0
      %v537 = vadd.f32 0.0, %v536
      %v538 = vpop.f32.mrf.mxu0
      %v539 = vadd.f32 0.0, %v538
      %540 = vmatmul.bf16.gmra.mxu0 %v401
      %v541 = vpop.f32.mrf.mxu0
      %v542 = vadd.f32 0.0, %v541
      %v543 = vpop.f32.mrf.mxu0
      %v544 = vadd.f32 0.0, %v543
      %545 = vmatmul.bf16.gmra.mxu0 %v403
      %v546 = vpop.f32.mrf.mxu0
      %v547 = vadd.f32 0.0, %v546
      %v548 = vpop.f32.mrf.mxu0
      %v549 = vadd.f32 0.0, %v548
      %550 = vmatmul.bf16.gmra.mxu0 %v405
      %v551 = vpop.f32.mrf.mxu0
      %v552 = vadd.f32 0.0, %v551
      %v553 = vpop.f32.mrf.mxu0
      %v554 = vadd.f32 0.0, %v553
      %555 = vmatmul.bf16.gmra.mxu0 %v407
      %v556 = vpop.f32.mrf.mxu0
      %v557 = vadd.f32 0.0, %v556
      %v558 = vpop.f32.mrf.mxu0
      %v559 = vadd.f32 0.0, %v558
      %560 = vmatmul.bf16.gmra.mxu0 %v409
      %v561 = vpop.f32.mrf.mxu0
      %v562 = vadd.f32 0.0, %v561
      %v563 = vpop.f32.mrf.mxu0
      %v564 = vadd.f32 0.0, %v563
      %565 = vmatmul.bf16.gmra.mxu0 %v411
      %v566 = vpop.f32.mrf.mxu0
      %v567 = vadd.f32 0.0, %v566
      %v568 = vpop.f32.mrf.mxu0
      %v569 = vadd.f32 0.0, %v568
      %570 = vmatmul.bf16.gmra.mxu0 %v413
      %v571 = vpop.f32.mrf.mxu0
      %v572 = vadd.f32 0.0, %v571
      %v573 = vpop.f32.mrf.mxu0
      %v574 = vadd.f32 0.0, %v573
      %575 = vdwg.mxu0
      %576 = vmatpush.bf16.msra.mxu0 %v510
      %577 = vmatpush.bf16.msra.mxu0 %v509
      %578 = vmatpush.bf16.msra.mxu0 %v508
      %579 = vmatpush.bf16.msra.mxu0 %v507
      %580 = vmatpush.bf16.msra.mxu0 %v506
      %581 = vmatpush.bf16.msra.mxu0 %v505
      %582 = vmatpush.bf16.msra.mxu0 %v504
      %583 = vmatpush.bf16.msra.mxu0 %v503
      %584 = vmatmul.bf16.gmra.mxu0 %v400
      %v585 = vpop.f32.mrf.mxu0
      %v586 = vadd.f32 %v537, %v585
      %v587 = vpop.f32.mrf.mxu0
      %v588 = vadd.f32 %v539, %v587
      %589 = vmatmul.bf16.gmra.mxu0 %v402
      %v590 = vpop.f32.mrf.mxu0
      %v591 = vadd.f32 %v542, %v590
      %v592 = vpop.f32.mrf.mxu0
      %v593 = vadd.f32 %v544, %v592
      %594 = vmatmul.bf16.gmra.mxu0 %v404
      %v595 = vpop.f32.mrf.mxu0
      %v596 = vadd.f32 %v547, %v595
      %v597 = vpop.f32.mrf.mxu0
      %v598 = vadd.f32 %v549, %v597
      %599 = vmatmul.bf16.gmra.mxu0 %v406
      %v600 = vpop.f32.mrf.mxu0
      %v601 = vadd.f32 %v552, %v600
      %v602 = vpop.f32.mrf.mxu0
      %v603 = vadd.f32 %v554, %v602
      %604 = vmatmul.bf16.gmra.mxu0 %v408
      %v605 = vpop.f32.mrf.mxu0
      %v606 = vadd.f32 %v557, %v605
      %v607 = vpop.f32.mrf.mxu0
      %v608 = vadd.f32 %v559, %v607
      %609 = vmatmul.bf16.gmra.mxu0 %v410
      %v610 = vpop.f32.mrf.mxu0
      %v611 = vadd.f32 %v562, %v610
      %v612 = vpop.f32.mrf.mxu0
      %v613 = vadd.f32 %v564, %v612
      %614 = vmatmul.bf16.gmra.mxu0 %v412
      %v615 = vpop.f32.mrf.mxu0
      %v616 = vadd.f32 %v567, %v615
      %v617 = vpop.f32.mrf.mxu0
      %v618 = vadd.f32 %v569, %v617
      %619 = vmatmul.bf16.gmra.mxu0 %v414
      %v620 = vpop.f32.mrf.mxu0
      %v621 = vadd.f32 %v572, %v620
      %v622 = vpop.f32.mrf.mxu0
      %v623 = vadd.f32 %v574, %v622
      %624 = vdwg.mxu0
      %v625 = vadd.f32 %v287, %v586
      %v626 = vadd.f32 %v288, %v588
      %v627 = vadd.f32 %v289, %v591
      %v628 = vadd.f32 %v290, %v593
      %v629 = vadd.f32 %v291, %v596
      %v630 = vadd.f32 %v292, %v598
      %v631 = vadd.f32 %v293, %v601
      %v632 = vadd.f32 %v294, %v603
      %v633 = vadd.f32 %v295, %v606
      %v634 = vadd.f32 %v296, %v608
      %v635 = vadd.f32 %v297, %v611
      %v636 = vadd.f32 %v298, %v613
      %v637 = vadd.f32 %v299, %v616
      %v638 = vadd.f32 %v300, %v618
      %v639 = vadd.f32 %v301, %v621
      %v640 = vadd.f32 %v302, %v623
      %641 = vst [vmem:[#allocation2] sm:$0xff] %v625
      %642 = vst [vmem:[#allocation2 + $0x8] sm:$0xff] %v626
      %643 = vst [vmem:[#allocation2 + $0x10] sm:$0xff] %v627
      %644 = vst [vmem:[#allocation2 + $0x18] sm:$0xff] %v628
      %645 = vst [vmem:[#allocation2 + $0x20] sm:$0xff] %v629
      %646 = vst [vmem:[#allocation2 + $0x28] sm:$0xff] %v630
      %647 = vst [vmem:[#allocation2 + $0x30] sm:$0xff] %v631
      %648 = vst [vmem:[#allocation2 + $0x38] sm:$0xff] %v632
      %649 = vst [vmem:[#allocation2 + $0x40] sm:$0xff] %v633
      %650 = vst [vmem:[#allocation2 + $0x48] sm:$0xff] %v634
      %651 = vst [vmem:[#allocation2 + $0x50] sm:$0xff] %v635
      %652 = vst [vmem:[#allocation2 + $0x58] sm:$0xff] %v636
      %653 = vst [vmem:[#allocation2 + $0x60] sm:$0xff] %v637
      %654 = vst [vmem:[#allocation2 + $0x68] sm:$0xff] %v638
      %655 = vst [vmem:[#allocation2 + $0x70] sm:$0xff] %v639
      %656 = vst [vmem:[#allocation2 + $0x78] sm:$0xff] %v640
      // Predicated region
      $region37: #{inception_apply.7} parent=31 // pred_check
        %p657 = pneg %p267
      $region38: #{inception_apply.7} parent=31 // pred_check_branch
        %659 = sbr.rel (%p657) target = $region40
      $region39: #{inception_apply.7} parent=31 // pred_region
        %v660 = vld [vmem:[#allocation2] sm:$0xff]
        %v661 = vld [vmem:[#allocation2 + $0x8] sm:$0xff]
        %v662 = vld [vmem:[#allocation2 + $0x10] sm:$0xff]
        %v663 = vld [vmem:[#allocation2 + $0x18] sm:$0xff]
        %v664 = vld [vmem:[#allocation2 + $0x20] sm:$0xff]
        %v665 = vld [vmem:[#allocation2 + $0x28] sm:$0xff]
        %v666 = vld [vmem:[#allocation2 + $0x30] sm:$0xff]
        %v667 = vld [vmem:[#allocation2 + $0x38] sm:$0xff]
        %v668 = vld [vmem:[#allocation2 + $0x40] sm:$0xff]
        %v669 = vld [vmem:[#allocation2 + $0x48] sm:$0xff]
        %v670 = vld [vmem:[#allocation2 + $0x50] sm:$0xff]
        %v671 = vld [vmem:[#allocation2 + $0x58] sm:$0xff]
        %v672 = vld [vmem:[#allocation2 + $0x60] sm:$0xff]
        %v673 = vld [vmem:[#allocation2 + $0x68] sm:$0xff]
        %v674 = vld [vmem:[#allocation2 + $0x70] sm:$0xff]
        %v675 = vld [vmem:[#allocation2 + $0x78] sm:$0xff]
        %v676 = vld [vmem:[%s257] sm:$0x1]
        %v678 = vperm.slane %v676, 0
        %v680 = vadd.f32 %v660, %v678
        %v681 = vadd.f32 %v661, %v678
        %v682 = vadd.f32 %v662, %v678
        %v683 = vadd.f32 %v663, %v678
        %v684 = vadd.f32 %v664, %v678
        %v685 = vadd.f32 %v665, %v678
        %v686 = vadd.f32 %v666, %v678
        %v687 = vadd.f32 %v667, %v678
        %v688 = vadd.f32 %v668, %v678
        %v689 = vadd.f32 %v669, %v678
        %v690 = vadd.f32 %v670, %v678
        %v691 = vadd.f32 %v671, %v678
        %v692 = vadd.f32 %v672, %v678
        %v693 = vadd.f32 %v673, %v678
        %v694 = vadd.f32 %v674, %v678
        %v695 = vadd.f32 %v675, %v678
        %v696 = vmax.f32 %v680, 0.0
        %v697 = vmax.f32 %v681, 0.0
        %v698 = vmax.f32 %v682, 0.0
        %v699 = vmax.f32 %v683, 0.0
        %v700 = vmax.f32 %v684, 0.0
        %v701 = vmax.f32 %v685, 0.0
        %v702 = vmax.f32 %v686, 0.0
        %v703 = vmax.f32 %v687, 0.0
        %v704 = vmax.f32 %v688, 0.0
        %v705 = vmax.f32 %v689, 0.0
        %v706 = vmax.f32 %v690, 0.0
        %v707 = vmax.f32 %v691, 0.0
        %v708 = vmax.f32 %v692, 0.0
        %v709 = vmax.f32 %v693, 0.0
        %v710 = vmax.f32 %v694, 0.0
        %v711 = vmax.f32 %v695, 0.0
        %712 = vst [vmem:[%s265] sm:$0xff] %v696
        %713 = vst [vmem:[%s265 + $0x8] sm:$0xff] %v697
        %714 = vst [vmem:[%s265 + $0x10] sm:$0xff] %v698
        %715 = vst [vmem:[%s265 + $0x18] sm:$0xff] %v699
        %716 = vst [vmem:[%s265 + $0x20] sm:$0xff] %v700
        %717 = vst [vmem:[%s265 + $0x28] sm:$0xff] %v701
        %718 = vst [vmem:[%s265 + $0x30] sm:$0xff] %v702
        %719 = vst [vmem:[%s265 + $0x38] sm:$0xff] %v703
        %720 = vst [vmem:[%s265 + $0x40] sm:$0xff] %v704
        %721 = vst [vmem:[%s265 + $0x48] sm:$0xff] %v705
        %722 = vst [vmem:[%s265 + $0x50] sm:$0xff] %v706
        %723 = vst [vmem:[%s265 + $0x58] sm:$0xff] %v707
        %724 = vst [vmem:[%s265 + $0x60] sm:$0xff] %v708
        %725 = vst [vmem:[%s265 + $0x68] sm:$0xff] %v709
        %726 = vst [vmem:[%s265 + $0x70] sm:$0xff] %v710
        %727 = vst [vmem:[%s265 + $0x78] sm:$0xff] %v711
      $region40: #{inception_apply.7} parent=31 // pred_fallthru
        _
      %s728 = smul.u32 16, %s19
      %p729 = scmp.lt.s32.totalorder %s728, 63
      %s730 = scalar_select %p729, %s728, 63
      %p731 = scmp.lt.s32.totalorder %s20, 0
      %s732 = scalar_select %p731, %s20, 0
      %s733 = sadd.s32 %s732, %s730
      %s734 = smul.addr %s733, 8
      %s735 = scalar_lea.vmem %s3, %s734
      // Predicated region
      $region41: #{inception_apply.7} parent=31 // pred_check
        %p736 = pneg %p135
      $region42: #{inception_apply.7} parent=31 // pred_check_branch
        %738 = sbr.rel (%p736) target = $region44
      $region43: #{inception_apply.7} parent=31 // pred_region
        %s739 = smul.u32 16, %s19
      $region44: #{inception_apply.7} parent=31 // pred_fallthru
        _
    $region32: #{inception_apply.7} parent=5 // pred_fallthru
      _
    %p740 = scmp.le.s32.totalorder 2, %s9
    // Predicated region
    $region45: #{inception_apply.7} parent=5 // pred_check
      %p741 = pneg %p740
    $region46: #{inception_apply.7} parent=5 // pred_check_branch
      %743 = sbr.rel (%p741) target = $region48
    $region47: #{inception_apply.7} parent=5 // pred_region
      %s744 = ssub.s32 %s9, 2
      // Predicated region
      $region49: #{inception_apply.7} parent=47 // pred_check
        %p745 = pneg %p141
      $region50: #{inception_apply.7} parent=47 // pred_check_branch
        %747 = sbr.rel (%p745) target = $region52
      $region51: #{inception_apply.7} parent=47 // pred_region
        %s748 = smul.u32 16, %s22
        %p749 = scmp.lt.s32.totalorder %s748, 63
        %s750 = scalar_select %p749, %s748, 63
        %p751 = scmp.lt.s32.totalorder %s23, 0
        %s752 = scalar_select %p751, %s23, 0
        %s753 = sadd.s32 %s752, %s750
        %s754 = smul.addr %s753, 8
        %s755 = scalar_lea.vmem %s3, %s754
      $region52: #{inception_apply.7} parent=47 // pred_fallthru
        _
    $region48: #{inception_apply.7} parent=5 // pred_fallthru
      _
  $region6: #{inception_apply.7} parent=0 // loop_footer
    %s13 = sadd.s32 1, %s9
  $region7: #{inception_apply.7} parent=0 // loop_footer_branch
    %8 = sbr.rel target = $region3
  $region8: #{inception_apply.7} parent=0 // loop_exit
    _

// kernel: inception_apply.6
$region0: #{inception_apply.6}
  #allocation0 [shape = 'u32[]', space=smem, size = 0x4, offset = 0x4, fixed_abs, tag = 'smem constant byte address 0x4 - core index']
  #allocation1 [shape = 'u32[72,128]{1,0:T(1,128)}', space=vmem, size = 0x9000, scoped, tag = 'internal scratch']
  #allocation2 [shape = 'f32[128,128]{1,0:T(8,128)}', space=vmem, size = 0x10000, scoped, tag = 'scratch operand']
  %s0 = inlined_call_operand.vmem [shape: bf16[512,512], index: 0, kind: input, shape index: {}]
  %s1 = inlined_call_operand.vmem [shape: bf16[512,128], index: 1, kind: input, shape index: {}]
  %s2 = inlined_call_operand.vmem [shape: f32[1,128], index: 2, kind: input, shape index: {}]
  %s3 = inlined_call_operand.vmem [shape: f32[512,128], index: 3, kind: output, shape index: {}]
  %s4 = sld [smem:[#allocation0]]
  $region53: #{inception_apply.6} parent=0
    _
  %s6 = ssub.s32 1, %s4
  %s7 = scalar_select 0, %s6, %s4
  loop: start=0, step=1, limit=6
  $region2: #{inception_apply.6} parent=0 // loop_pre_header
    _
  $region3: #{inception_apply.6} parent=0 // loop_header
    %s9 = sphi 0, %s13
    %p10 = scmp.ge.s32.totalorder %s9, 6
    %s16 = sphi 0, %s35
    %s17 = sphi 0, %s31
    %s18 = sphi 0, %s27
    %s19 = sphi 0, %s16
    %s20 = sphi 0, %s17
    %s21 = sphi 0, %s18
    %s22 = sphi 0, %s19
    %s23 = sphi 0, %s20
    %s24 = sphi 0, %s21
    %s40 = sphi 0, %s42
    %s43 = sphi 0, %s40
    %s44 = sphi 0, %s43
    %s60 = sphi 0, %s44
    %s68 = sphi 0, %s70
    %s71 = sphi 0, %s68
    %s72 = sphi 0, %s71
    %s88 = sphi 0, %s72
    %s94 = sphi 0, %s96
    %s97 = sphi 0, %s94
    %s98 = sphi 0, %s97
    %s114 = sphi 0, %s98
    %s122 = sphi 0, %s124
    %s125 = sphi 0, %s122
    %s126 = sphi 0, %s125
    %s142 = sphi 0, %s126
  $region4: #{inception_apply.6} parent=0 // loop_header_branch
    %12 = sbr.rel (%p10) target = $region8
  $region5: #{inception_apply.6} parent=0 // loop_body
    %s14 = ssub.s32 %s9, 1
    %s15 = ssub.s32 %s9, 2
    %s25 = sadd.s32 1, %s18
    %p26 = scmp.ge.s32.totalorder %s25, 1
    %s27 = scalar_select %p26, 0, %s25
    %s28 = sadd.s32 1, %s17
    %s29 = scalar_select %p26, %s28, %s17
    %p30 = scmp.ge.s32.totalorder %s29, 1
    %s31 = scalar_select %p30, 0, %s29
    %s32 = sadd.s32 1, %s16
    %s33 = scalar_select %p30, %s32, %s16
    %p34 = scmp.ge.s32.totalorder %s33, 4
    %s35 = scalar_select %p34, 0, %s33
    %s36 = ssub.s32 %s16, %s35
    %s37 = ssub.s32 %s18, %s27
    %s38 = sor.u32 %s36, %s37
    %p39 = scmp.eq.s32.totalorder %s38, 0
    %s41 = sadd.s32 %s40, 1
    %s42 = scalar_select %p39, %s40, %s41
    %p45 = pneg %p39
    %p46 = scmp.eq.s32.totalorder %s9, 3
    %p47 = por %p45, %p46
    %p48 = scmp.ne.s32.totalorder %s40, %s43
    %p49 = scmp.eq.s32.totalorder %s9, 0
    %p50 = por %p48, %p49
    %p51 = scmp.ne.s32.totalorder %s40, %s43
    %p52 = scmp.eq.s32.totalorder %s14, 3
    %p53 = por %p51, %p52
    %p54 = scmp.ne.s32.totalorder %s43, %s44
    %p55 = scmp.eq.s32.totalorder %s14, 0
    %p56 = por %p54, %p55
    %p57 = scmp.ne.s32.totalorder %s43, %s44
    %p58 = scmp.eq.s32.totalorder %s15, 3
    %p59 = por %p57, %p58
    %p61 = scmp.ne.s32.totalorder %s44, %s60
    %p62 = scmp.eq.s32.totalorder %s15, 0
    %p63 = por %p61, %p62
    %s64 = ssub.s32 %s18, %s27
    %s65 = ssub.s32 %s17, %s31
    %s66 = sor.u32 %s64, %s65
    %p67 = scmp.eq.s32.totalorder %s66, 0
    %s69 = sadd.s32 %s68, 1
    %s70 = scalar_select %p67, %s68, %s69
    %p73 = pneg %p67
    %p74 = scmp.eq.s32.totalorder %s9, 3
    %p75 = por %p73, %p74
    %p76 = scmp.ne.s32.totalorder %s68, %s71
    %p77 = scmp.eq.s32.totalorder %s9, 0
    %p78 = por %p76, %p77
    %p79 = scmp.ne.s32.totalorder %s68, %s71
    %p80 = scmp.eq.s32.totalorder %s14, 3
    %p81 = por %p79, %p80
    %p82 = scmp.ne.s32.totalorder %s71, %s72
    %p83 = scmp.eq.s32.totalorder %s14, 0
    %p84 = por %p82, %p83
    %p85 = scmp.ne.s32.totalorder %s71, %s72
    %p86 = scmp.eq.s32.totalorder %s15, 3
    %p87 = por %p85, %p86
    %p89 = scmp.ne.s32.totalorder %s72, %s88
    %p90 = scmp.eq.s32.totalorder %s15, 0
    %p91 = por %p89, %p90
    %s92 = ssub.s32 %s17, %s31
    %p93 = scmp.eq.s32.totalorder %s92, 0
    %s95 = sadd.s32 %s94, 1
    %s96 = scalar_select %p93, %s94, %s95
    %p99 = pneg %p93
    %p100 = scmp.eq.s32.totalorder %s9, 3
    %p101 = por %p99, %p100
    %p102 = scmp.ne.s32.totalorder %s94, %s97
    %p103 = scmp.eq.s32.totalorder %s9, 0
    %p104 = por %p102, %p103
    %p105 = scmp.ne.s32.totalorder %s94, %s97
    %p106 = scmp.eq.s32.totalorder %s14, 3
    %p107 = por %p105, %p106
    %p108 = scmp.ne.s32.totalorder %s97, %s98
    %p109 = scmp.eq.s32.totalorder %s14, 0
    %p110 = por %p108, %p109
    %p111 = scmp.ne.s32.totalorder %s97, %s98
    %p112 = scmp.eq.s32.totalorder %s15, 3
    %p113 = por %p111, %p112
    %p115 = scmp.ne.s32.totalorder %s98, %s114
    %p116 = scmp.eq.s32.totalorder %s15, 0
    %p117 = por %p115, %p116
    %s118 = ssub.s32 %s16, %s35
    %s119 = ssub.s32 %s17, %s31
    %s120 = sor.u32 %s118, %s119
    %p121 = scmp.eq.s32.totalorder %s120, 0
    %s123 = sadd.s32 %s122, 1
    %s124 = scalar_select %p121, %s122, %s123
    %p127 = pneg %p121
    %p128 = scmp.eq.s32.totalorder %s9, 3
    %p129 = por %p127, %p128
    %p130 = scmp.ne.s32.totalorder %s122, %s125
    %p131 = scmp.eq.s32.totalorder %s9, 0
    %p132 = por %p130, %p131
    %p133 = scmp.ne.s32.totalorder %s122, %s125
    %p134 = scmp.eq.s32.totalorder %s14, 3
    %p135 = por %p133, %p134
    %p136 = scmp.ne.s32.totalorder %s125, %s126
    %p137 = scmp.eq.s32.totalorder %s14, 0
    %p138 = por %p136, %p137
    %p139 = scmp.ne.s32.totalorder %s125, %s126
    %p140 = scmp.eq.s32.totalorder %s15, 3
    %p141 = por %p139, %p140
    %p143 = scmp.ne.s32.totalorder %s126, %s142
    %p144 = scmp.eq.s32.totalorder %s15, 0
    %p145 = por %p143, %p144
    %p146 = scmp.le.s32.totalorder 1, %s9
    %p147 = scmp.lt.s32.totalorder %s9, 5
    %p148 = pnand %p146, %p147
    %p149 = pneg %p148
    // Predicated region
    $region9: #{inception_apply.6} parent=5 // pred_check
      _
    $region10: #{inception_apply.6} parent=5 // pred_check_branch
      %151 = sbr.rel (%p148) target = $region12
    $region11: #{inception_apply.6} parent=5 // pred_region
      %s152 = ssub.s32 %s9, 1
      // Predicated region
      $region13: #{inception_apply.6} parent=11 // pred_check
        %p153 = pneg %p84
      $region14: #{inception_apply.6} parent=11 // pred_check_branch
        %155 = sbr.rel (%p153) target = $region16
      $region15: #{inception_apply.6} parent=11 // pred_region
        %s156 = smul.u32 64, %s21
        %p157 = scmp.lt.s32.totalorder %s156, 63
        %s158 = scalar_select %p157, %s156, 63
        %p159 = scmp.lt.s32.totalorder %s20, 0
        %s160 = scalar_select %p159, %s20, 0
        %s161 = sadd.s32 %s160, %s158
        %s162 = smul.addr %s161, 4
        %s163 = scalar_lea.vmem %s1, %s162
        %s164 = smul.u32 64, %s21
      $region16: #{inception_apply.6} parent=11 // pred_fallthru
        _
      // Predicated region
      $region17: #{inception_apply.6} parent=11 // pred_check
        %p165 = pneg %p110
      $region18: #{inception_apply.6} parent=11 // pred_check_branch
        %167 = sbr.rel (%p165) target = $region20
      $region19: #{inception_apply.6} parent=11 // pred_region
        %p168 = scmp.lt.s32.totalorder %s20, 0
        %s169 = scalar_select %p168, %s20, 0
        %s170 = scalar_lea.vmem %s2, %s169
      $region20: #{inception_apply.6} parent=11 // pred_fallthru
        _
    $region12: #{inception_apply.6} parent=5 // pred_fallthru
      _
    %p171 = scmp.lt.s32.totalorder %s9, 4
    // Predicated region
    $region21: #{inception_apply.6} parent=5 // pred_check
      %p172 = pneg %p171
    $region22: #{inception_apply.6} parent=5 // pred_check_branch
      %174 = sbr.rel (%p172) target = $region24
    $region23: #{inception_apply.6} parent=5 // pred_region
      // Predicated region
      $region25: #{inception_apply.6} parent=23 // pred_check
        %p175 = pneg %p50
      $region26: #{inception_apply.6} parent=23 // pred_check_branch
        %177 = sbr.rel (%p175) target = $region28
      $region27: #{inception_apply.6} parent=23 // pred_region
        %s178 = smul.u32 16, %s16
        %s179 = smul.u32 4, %s18
        %p180 = scmp.lt.s32.totalorder %s178, 63
        %s181 = scalar_select %p180, %s178, 63
        %p182 = scmp.lt.s32.totalorder %s179, 3
        %s183 = scalar_select %p182, %s179, 3
        %s184 = smul.addr %s181, 4
        %s185 = sadd.s32 %s183, %s184
        %s186 = smul.addr %s185, 4
        %s187 = scalar_lea.vmem %s0, %s186
        %s188 = smul.u32 16, %s16
        %s189 = smul.u32 4, %s18
      $region28: #{inception_apply.6} parent=23 // pred_fallthru
        _
    $region24: #{inception_apply.6} parent=5 // pred_fallthru
      _
    %p190 = scmp.le.s32.totalorder 1, %s9
    %p191 = scmp.lt.s32.totalorder %s9, 5
    %p192 = pnand %p190, %p191
    %p193 = pneg %p192
    // Predicated region
    $region29: #{inception_apply.6} parent=5 // pred_check
      _
    $region30: #{inception_apply.6} parent=5 // pred_check_branch
      %195 = sbr.rel (%p192) target = $region32
    $region31: #{inception_apply.6} parent=5 // pred_region
      %s196 = ssub.s32 %s9, 1
      %s197 = smul.u32 16, %s19
      %s198 = smul.u32 4, %s21
      %p199 = scmp.lt.s32.totalorder %s197, 63
      %s200 = scalar_select %p199, %s197, 63
      %p201 = scmp.lt.s32.totalorder %s198, 3
      %s202 = scalar_select %p201, %s198, 3
      %s203 = smul.addr %s200, 4
      %s204 = sadd.s32 %s202, %s203
      %s205 = smul.addr %s204, 4
      %s206 = scalar_lea.vmem %s0, %s205
      %p207 = pneg %p56
      %p208 = pneg %p53
      %s209 = smul.u32 64, %s21
      %p210 = scmp.lt.s32.totalorder %s209, 63
      %s211 = scalar_select %p210, %s209, 63
      %p212 = scmp.lt.s32.totalorder %s20, 0
      %s213 = scalar_select %p212, %s20, 0
      %s214 = sadd.s32 %s213, %s211
      %s215 = smul.addr %s214, 4
      %s216 = scalar_lea.vmem %s1, %s215
      %p217 = pneg %p84
      %p218 = pneg %p81
      %p219 = scmp.lt.s32.totalorder %s20, 0
      %s220 = scalar_select %p219, %s20, 0
      %s221 = scalar_lea.vmem %s2, %s220
      %p222 = pneg %p110
      %p223 = pneg %p107
      %p224 = pneg %p138
      %p225 = pneg %p135
      %s226 = smul.u32 16, %s19
      %p227 = scmp.lt.s32.totalorder %s226, 63
      %s228 = scalar_select %p227, %s226, 63
      %p229 = scmp.lt.s32.totalorder %s20, 0
      %s230 = scalar_select %p229, %s20, 0
      %s231 = sadd.s32 %s230, %s228
      %s232 = smul.addr %s231, 8
      %s233 = scalar_lea.vmem %s3, %s232
      %s234 = smul.u32 16, %s19
      %s235 = smul.u32 4, %s21
      %p236 = scmp.lt.s32.totalorder %s234, 63
      %s237 = scalar_select %p236, %s234, 63
      %p238 = scmp.lt.s32.totalorder %s235, 3
      %s239 = scalar_select %p238, %s235, 3
      %s240 = smul.addr %s237, 4
      %s241 = sadd.s32 %s239, %s240
      %s242 = smul.addr %s241, 4
      %s243 = scalar_lea.vmem %s0, %s242
      %s244 = smul.u32 16, %s19
      %s245 = smul.u32 4, %s21
      %s246 = smul.u32 64, %s21
      %p247 = scmp.lt.s32.totalorder %s246, 63
      %s248 = scalar_select %p247, %s246, 63
      %p249 = scmp.lt.s32.totalorder %s20, 0
      %s250 = scalar_select %p249, %s20, 0
      %s251 = sadd.s32 %s250, %s248
      %s252 = smul.addr %s251, 4
      %s253 = scalar_lea.vmem %s1, %s252
      %s254 = smul.u32 64, %s21
      %p255 = scmp.lt.s32.totalorder %s20, 0
      %s256 = scalar_select %p255, %s20, 0
      %s257 = scalar_lea.vmem %s2, %s256
      %s258 = smul.u32 16, %s19
      %p259 = scmp.lt.s32.totalorder %s258, 63
      %s260 = scalar_select %p259, %s258, 63
      %p261 = scmp.lt.s32.totalorder %s20, 0
      %s262 = scalar_select %p261, %s20, 0
      %s263 = sadd.s32 %s262, %s260
      %s264 = smul.addr %s263, 8
      %s265 = scalar_lea.vmem %s3, %s264
      %s266 = smul.u32 16, %s19
      %p267 = scmp.eq.s32.totalorder %s21, 0
      // Predicated region
      $region33: #{inception_apply.6} parent=31 // pred_check
        %p268 = pneg %p267
      $region34: #{inception_apply.6} parent=31 // pred_check_branch
        %270 = sbr.rel (%p268) target = $region36
      $region35: #{inception_apply.6} parent=31 // pred_region
        %271 = vst [vmem:[#allocation2] sm:$0xff] 0.0
        %272 = vst [vmem:[#allocation2 + $0x8] sm:$0xff] 0.0
        %273 = vst [vmem:[#allocation2 + $0x10] sm:$0xff] 0.0
        %274 = vst [vmem:[#allocation2 + $0x18] sm:$0xff] 0.0
        %275 = vst [vmem:[#allocation2 + $0x20] sm:$0xff] 0.0
        %276 = vst [vmem:[#allocation2 + $0x28] sm:$0xff] 0.0
        %277 = vst [vmem:[#allocation2 + $0x30] sm:$0xff] 0.0
        %278 = vst [vmem:[#allocation2 + $0x38] sm:$0xff] 0.0
        %279 = vst [vmem:[#allocation2 + $0x40] sm:$0xff] 0.0
        %280 = vst [vmem:[#allocation2 + $0x48] sm:$0xff] 0.0
        %281 = vst [vmem:[#allocation2 + $0x50] sm:$0xff] 0.0
        %282 = vst [vmem:[#allocation2 + $0x58] sm:$0xff] 0.0
        %283 = vst [vmem:[#allocation2 + $0x60] sm:$0xff] 0.0
        %284 = vst [vmem:[#allocation2 + $0x68] sm:$0xff] 0.0
        %285 = vst [vmem:[#allocation2 + $0x70] sm:$0xff] 0.0
        %286 = vst [vmem:[#allocation2 + $0x78] sm:$0xff] 0.0
      $region36: #{inception_apply.6} parent=31 // pred_fallthru
        _
      %v287 = vld [vmem:[#allocation2] sm:$0xff]
      %v288 = vld [vmem:[#allocation2 + $0x8] sm:$0xff]
      %v289 = vld [vmem:[#allocation2 + $0x10] sm:$0xff]
      %v290 = vld [vmem:[#allocation2 + $0x18] sm:$0xff]
      %v291 = vld [vmem:[#allocation2 + $0x20] sm:$0xff]
      %v292 = vld [vmem:[#allocation2 + $0x28] sm:$0xff]
      %v293 = vld [vmem:[#allocation2 + $0x30] sm:$0xff]
      %v294 = vld [vmem:[#allocation2 + $0x38] sm:$0xff]
      %v295 = vld [vmem:[#allocation2 + $0x40] sm:$0xff]
      %v296 = vld [vmem:[#allocation2 + $0x48] sm:$0xff]
      %v297 = vld [vmem:[#allocation2 + $0x50] sm:$0xff]
      %v298 = vld [vmem:[#allocation2 + $0x58] sm:$0xff]
      %v299 = vld [vmem:[#allocation2 + $0x60] sm:$0xff]
      %v300 = vld [vmem:[#allocation2 + $0x68] sm:$0xff]
      %v301 = vld [vmem:[#allocation2 + $0x70] sm:$0xff]
      %v302 = vld [vmem:[#allocation2 + $0x78] sm:$0xff]
      %v303 = vld [vmem:[%s243] sm:$0xff]
      %v304 = vld [vmem:[%s243 + $0x8] sm:$0xff]
      %v305 = vld [vmem:[%s243 + $0x10] sm:$0xff]
      %v306 = vld [vmem:[%s243 + $0x18] sm:$0xff]
      %v307 = vld [vmem:[%s243 + $0x20] sm:$0xff]
      %v308 = vld [vmem:[%s243 + $0x28] sm:$0xff]
      %v309 = vld [vmem:[%s243 + $0x30] sm:$0xff]
      %v310 = vld [vmem:[%s243 + $0x38] sm:$0xff]
      %v311 = vld [vmem:[%s243 + $0x40] sm:$0xff]
      %v312 = vld [vmem:[%s243 + $0x48] sm:$0xff]
      %v313 = vld [vmem:[%s243 + $0x50] sm:$0xff]
      %v314 = vld [vmem:[%s243 + $0x58] sm:$0xff]
      %v315 = vld [vmem:[%s243 + $0x60] sm:$0xff]
      %v316 = vld [vmem:[%s243 + $0x68] sm:$0xff]
      %v317 = vld [vmem:[%s243 + $0x70] sm:$0xff]
      %v318 = vld [vmem:[%s243 + $0x78] sm:$0xff]
      %v319 = vld [vmem:[%s243 + $0x80] sm:$0xff]
      %v320 = vld [vmem:[%s243 + $0x88] sm:$0xff]
      %v321 = vld [vmem:[%s243 + $0x90] sm:$0xff]
      %v322 = vld [vmem:[%s243 + $0x98] sm:$0xff]
      %v323 = vld [vmem:[%s243 + $0xa0] sm:$0xff]
      %v324 = vld [vmem:[%s243 + $0xa8] sm:$0xff]
      %v325 = vld [vmem:[%s243 + $0xb0] sm:$0xff]
      %v326 = vld [vmem:[%s243 + $0xb8] sm:$0xff]
      %v327 = vld [vmem:[%s243 + $0xc0] sm:$0xff]
      %v328 = vld [vmem:[%s243 + $0xc8] sm:$0xff]
      %v329 = vld [vmem:[%s243 + $0xd0] sm:$0xff]
      %v330 = vld [vmem:[%s243 + $0xd8] sm:$0xff]
      %v331 = vld [vmem:[%s243 + $0xe0] sm:$0xff]
      %v332 = vld [vmem:[%s243 + $0xe8] sm:$0xff]
      %v333 = vld [vmem:[%s243 + $0xf0] sm:$0xff]
      %v334 = vld [vmem:[%s243 + $0xf8] sm:$0xff]
      %v335 = vld [vmem:[%s253] sm:$0xf]
      %v336 = vld [vmem:[%s253 + $0x4] sm:$0xf]
      %v337 = vld [vmem:[%s253 + $0x8] sm:$0xf]
      %v338 = vld [vmem:[%s253 + $0xc] sm:$0xf]
      %v339 = vld [vmem:[%s253 + $0x10] sm:$0xf]
      %v340 = vld [vmem:[%s253 + $0x14] sm:$0xf]
      %v341 = vld [vmem:[%s253 + $0x18] sm:$0xf]
      %v342 = vld [vmem:[%s253 + $0x1c] sm:$0xf]
      %v343 = vld [vmem:[%s253 + $0x20] sm:$0xf]
      %v344 = vld [vmem:[%s253 + $0x24] sm:$0xf]
      %v345 = vld [vmem:[%s253 + $0x28] sm:$0xf]
      %v346 = vld [vmem:[%s253 + $0x2c] sm:$0xf]
      %v347 = vld [vmem:[%s253 + $0x30] sm:$0xf]
      %v348 = vld [vmem:[%s253 + $0x34] sm:$0xf]
      %v349 = vld [vmem:[%s253 + $0x38] sm:$0xf]
      %v350 = vld [vmem:[%s253 + $0x3c] sm:$0xf]
      %v351 = vld [vmem:[%s253 + $0x40] sm:$0xf]
      %v352 = vld [vmem:[%s253 + $0x44] sm:$0xf]
      %v353 = vld [vmem:[%s253 + $0x48] sm:$0xf]
      %v354 = vld [vmem:[%s253 + $0x4c] sm:$0xf]
      %v355 = vld [vmem:[%s253 + $0x50] sm:$0xf]
      %v356 = vld [vmem:[%s253 + $0x54] sm:$0xf]
      %v357 = vld [vmem:[%s253 + $0x58] sm:$0xf]
      %v358 = vld [vmem:[%s253 + $0x5c] sm:$0xf]
      %v359 = vld [vmem:[%s253 + $0x60] sm:$0xf]
      %v360 = vld [vmem:[%s253 + $0x64] sm:$0xf]
      %v361 = vld [vmem:[%s253 + $0x68] sm:$0xf]
      %v362 = vld [vmem:[%s253 + $0x6c] sm:$0xf]
      %v363 = vld [vmem:[%s253 + $0x70] sm:$0xf]
      %v364 = vld [vmem:[%s253 + $0x74] sm:$0xf]
      %v365 = vld [vmem:[%s253 + $0x78] sm:$0xf]
      %v366 = vld [vmem:[%s253 + $0x7c] sm:$0xf]
      %v367 = vld [vmem:[%s253 + $0x80] sm:$0xf]
      %v368 = vld [vmem:[%s253 + $0x84] sm:$0xf]
      %v369 = vld [vmem:[%s253 + $0x88] sm:$0xf]
      %v370 = vld [vmem:[%s253 + $0x8c] sm:$0xf]
      %v371 = vld [vmem:[%s253 + $0x90] sm:$0xf]
      %v372 = vld [vmem:[%s253 + $0x94] sm:$0xf]
      %v373 = vld [vmem:[%s253 + $0x98] sm:$0xf]
      %v374 = vld [vmem:[%s253 + $0x9c] sm:$0xf]
      %v375 = vld [vmem:[%s253 + $0xa0] sm:$0xf]
      %v376 = vld [vmem:[%s253 + $0xa4] sm:$0xf]
      %v377 = vld [vmem:[%s253 + $0xa8] sm:$0xf]
      %v378 = vld [vmem:[%s253 + $0xac] sm:$0xf]
      %v379 = vld [vmem:[%s253 + $0xb0] sm:$0xf]
      %v380 = vld [vmem:[%s253 + $0xb4] sm:$0xf]
      %v381 = vld [vmem:[%s253 + $0xb8] sm:$0xf]
      %v382 = vld [vmem:[%s253 + $0xbc] sm:$0xf]
      %v383 = vld [vmem:[%s253 + $0xc0] sm:$0xf]
      %v384 = vld [vmem:[%s253 + $0xc4] sm:$0xf]
      %v385 = vld [vmem:[%s253 + $0xc8] sm:$0xf]
      %v386 = vld [vmem:[%s253 + $0xcc] sm:$0xf]
      %v387 = vld [vmem:[%s253 + $0xd0] sm:$0xf]
      %v388 = vld [vmem:[%s253 + $0xd4] sm:$0xf]
      %v389 = vld [vmem:[%s253 + $0xd8] sm:$0xf]
      %v390 = vld [vmem:[%s253 + $0xdc] sm:$0xf]
      %v391 = vld [vmem:[%s253 + $0xe0] sm:$0xf]
      %v392 = vld [vmem:[%s253 + $0xe4] sm:$0xf]
      %v393 = vld [vmem:[%s253 + $0xe8] sm:$0xf]
      %v394 = vld [vmem:[%s253 + $0xec] sm:$0xf]
      %v395 = vld [vmem:[%s253 + $0xf0] sm:$0xf]
      %v396 = vld [vmem:[%s253 + $0xf4] sm:$0xf]
      %v397 = vld [vmem:[%s253 + $0xf8] sm:$0xf]
      %v398 = vld [vmem:[%s253 + $0xfc] sm:$0xf]
      %v431 = vunpack.c.l.b16 %v303
      %v432 = vunpack.c.h.b16 %v303
      %v433 = vunpack.c.l.b16 %v304
      %v434 = vunpack.c.h.b16 %v304
      %v435 = vunpack.c.l.b16 %v305
      %v436 = vunpack.c.h.b16 %v305
      %v437 = vunpack.c.l.b16 %v306
      %v438 = vunpack.c.h.b16 %v306
      %v439 = vunpack.c.l.b16 %v307
      %v440 = vunpack.c.h.b16 %v307
      %v441 = vunpack.c.l.b16 %v308
      %v442 = vunpack.c.h.b16 %v308
      %v443 = vunpack.c.l.b16 %v309
      %v444 = vunpack.c.h.b16 %v309
      %v445 = vunpack.c.l.b16 %v310
      %v446 = vunpack.c.h.b16 %v310
      %v447 = vunpack.c.l.b16 %v311
      %v448 = vunpack.c.h.b16 %v311
      %v449 = vunpack.c.l.b16 %v312
      %v450 = vunpack.c.h.b16 %v312
      %v451 = vunpack.c.l.b16 %v313
      %v452 = vunpack.c.h.b16 %v313
      %v453 = vunpack.c.l.b16 %v314
      %v454 = vunpack.c.h.b16 %v314
      %v455 = vunpack.c.l.b16 %v315
      %v456 = vunpack.c.h.b16 %v315
      %v457 = vunpack.c.l.b16 %v316
      %v458 = vunpack.c.h.b16 %v316
      %v459 = vunpack.c.l.b16 %v317
      %v460 = vunpack.c.h.b16 %v317
      %v461 = vunpack.c.l.b16 %v318
      %v462 = vunpack.c.h.b16 %v318
      %v463 = vunpack.c.l.b16 %v319
      %v464 = vunpack.c.h.b16 %v319
      %v465 = vunpack.c.l.b16 %v320
      %v466 = vunpack.c.h.b16 %v320
      %v467 = vunpack.c.l.b16 %v321
      %v468 = vunpack.c.h.b16 %v321
      %v469 = vunpack.c.l.b16 %v322
      %v470 = vunpack.c.h.b16 %v322
      %v471 = vunpack.c.l.b16 %v323
      %v472 = vunpack.c.h.b16 %v323
      %v473 = vunpack.c.l.b16 %v324
      %v474 = vunpack.c.h.b16 %v324
      %v475 = vunpack.c.l.b16 %v325
      %v476 = vunpack.c.h.b16 %v325
      %v477 = vunpack.c.l.b16 %v326
      %v478 = vunpack.c.h.b16 %v326
      %v479 = vunpack.c.l.b16 %v327
      %v480 = vunpack.c.h.b16 %v327
      %v481 = vunpack.c.l.b16 %v328
      %v482 = vunpack.c.h.b16 %v328
      %v483 = vunpack.c.l.b16 %v329
      %v484 = vunpack.c.h.b16 %v329
      %v485 = vunpack.c.l.b16 %v330
      %v486 = vunpack.c.h.b16 %v330
      %v487 = vunpack.c.l.b16 %v331
      %v488 = vunpack.c.h.b16 %v331
      %v489 = vunpack.c.l.b16 %v332
      %v490 = vunpack.c.h.b16 %v332
      %v491 = vunpack.c.l.b16 %v333
      %v492 = vunpack.c.h.b16 %v333
      %v493 = vunpack.c.l.b16 %v334
      %v494 = vunpack.c.h.b16 %v334
      %v495 = vpack.c.b16 %v435, %v431
      %v496 = vpack.c.b16 %v436, %v432
      %v497 = vpack.c.b16 %v437, %v433
      %v498 = vpack.c.b16 %v438, %v434
      %v499 = vpack.c.b16 %v443, %v439
      %v500 = vpack.c.b16 %v444, %v440
      %v501 = vpack.c.b16 %v445, %v441
      %v502 = vpack.c.b16 %v446, %v442
      %v503 = vpack.c.b16 %v451, %v447
      %v504 = vpack.c.b16 %v452, %v448
      %v505 = vpack.c.b16 %v453, %v449
      %v506 = vpack.c.b16 %v454, %v450
      %v507 = vpack.c.b16 %v459, %v455
      %v508 = vpack.c.b16 %v460, %v456
      %v509 = vpack.c.b16 %v461, %v457
      %v510 = vpack.c.b16 %v462, %v458
      %v511 = vpack.c.b16 %v467, %v463
      %v512 = vpack.c.b16 %v468, %v464
      %v513 = vpack.c.b16 %v469, %v465
      %v514 = vpack.c.b16 %v470, %v466
      %v515 = vpack.c.b16 %v475, %v471
      %v516 = vpack.c.b16 %v476, %v472
      %v517 = vpack.c.b16 %v477, %v473
      %v518 = vpack.c.b16 %v478, %v474
      %v519 = vpack.c.b16 %v483, %v479
      %v520 = vpack.c.b16 %v484, %v480
      %v521 = vpack.c.b16 %v485, %v481
      %v522 = vpack.c.b16 %v486, %v482
      %v523 = vpack.c.b16 %v491, %v487
      %v524 = vpack.c.b16 %v492, %v488
      %v525 = vpack.c.b16 %v493, %v489
      %v526 = vpack.c.b16 %v494, %v490
      %v623 = vunpack.c.l.b16 %v335
      %v624 = vunpack.c.l.b16 %v336
      %v625 = vunpack.c.l.b16 %v337
      %v626 = vunpack.c.l.b16 %v338
      %v627 = vunpack.c.l.b16 %v339
      %v628 = vunpack.c.l.b16 %v340
      %v629 = vunpack.c.l.b16 %v341
      %v630 = vunpack.c.l.b16 %v342
      %v631 = vunpack.c.l.b16 %v343
      %v632 = vunpack.c.l.b16 %v344
      %v633 = vunpack.c.l.b16 %v345
      %v634 = vunpack.c.l.b16 %v346
      %v635 = vunpack.c.l.b16 %v347
      %v636 = vunpack.c.l.b16 %v348
      %v637 = vunpack.c.l.b16 %v349
      %v638 = vunpack.c.l.b16 %v350
      %v639 = vunpack.c.l.b16 %v351
      %v640 = vunpack.c.l.b16 %v352
      %v641 = vunpack.c.l.b16 %v353
      %v642 = vunpack.c.l.b16 %v354
      %v643 = vunpack.c.l.b16 %v355
      %v644 = vunpack.c.l.b16 %v356
      %v645 = vunpack.c.l.b16 %v357
      %v646 = vunpack.c.l.b16 %v358
      %v647 = vunpack.c.l.b16 %v359
      %v648 = vunpack.c.l.b16 %v360
      %v649 = vunpack.c.l.b16 %v361
      %v650 = vunpack.c.l.b16 %v362
      %v651 = vunpack.c.l.b16 %v363
      %v652 = vunpack.c.l.b16 %v364
      %v653 = vunpack.c.l.b16 %v365
      %v654 = vunpack.c.l.b16 %v366
      %v655 = vunpack.c.l.b16 %v367
      %v656 = vunpack.c.l.b16 %v368
      %v657 = vunpack.c.l.b16 %v369
      %v658 = vunpack.c.l.b16 %v370
      %v659 = vunpack.c.l.b16 %v371
      %v660 = vunpack.c.l.b16 %v372
      %v661 = vunpack.c.l.b16 %v373
      %v662 = vunpack.c.l.b16 %v374
      %v663 = vunpack.c.l.b16 %v375
      %v664 = vunpack.c.l.b16 %v376
      %v665 = vunpack.c.l.b16 %v377
      %v666 = vunpack.c.l.b16 %v378
      %v667 = vunpack.c.l.b16 %v379
      %v668 = vunpack.c.l.b16 %v380
      %v669 = vunpack.c.l.b16 %v381
      %v670 = vunpack.c.l.b16 %v382
      %v671 = vunpack.c.l.b16 %v383
      %v672 = vunpack.c.l.b16 %v384
      %v673 = vunpack.c.l.b16 %v385
      %v674 = vunpack.c.l.b16 %v386
      %v675 = vunpack.c.l.b16 %v387
      %v676 = vunpack.c.l.b16 %v388
      %v677 = vunpack.c.l.b16 %v389
      %v678 = vunpack.c.l.b16 %v390
      %v679 = vunpack.c.l.b16 %v391
      %v680 = vunpack.c.l.b16 %v392
      %v681 = vunpack.c.l.b16 %v393
      %v682 = vunpack.c.l.b16 %v394
      %v683 = vunpack.c.l.b16 %v395
      %v684 = vunpack.c.l.b16 %v396
      %v685 = vunpack.c.l.b16 %v397
      %v686 = vunpack.c.l.b16 %v398
      %v687 = vpack.c.b16 %v624, %v623
      %v688 = vpack.c.b16 %v626, %v625
      %v689 = vpack.c.b16 %v628, %v627
      %v690 = vpack.c.b16 %v630, %v629
      %v691 = vpack.c.b16 %v632, %v631
      %v692 = vpack.c.b16 %v634, %v633
      %v693 = vpack.c.b16 %v636, %v635
      %v694 = vpack.c.b16 %v638, %v637
      %v695 = vpack.c.b16 %v640, %v639
      %v696 = vpack.c.b16 %v642, %v641
      %v697 = vpack.c.b16 %v644, %v643
      %v698 = vpack.c.b16 %v646, %v645
      %v699 = vpack.c.b16 %v648, %v647
      %v700 = vpack.c.b16 %v650, %v649
      %v701 = vpack.c.b16 %v652, %v651
      %v702 = vpack.c.b16 %v654, %v653
      %v703 = vpack.c.b16 %v656, %v655
      %v704 = vpack.c.b16 %v658, %v657
      %v705 = vpack.c.b16 %v660, %v659
      %v706 = vpack.c.b16 %v662, %v661
      %v707 = vpack.c.b16 %v664, %v663
      %v708 = vpack.c.b16 %v666, %v665
      %v709 = vpack.c.b16 %v668, %v667
      %v710 = vpack.c.b16 %v670, %v669
      %v711 = vpack.c.b16 %v672, %v671
      %v712 = vpack.c.b16 %v674, %v673
      %v713 = vpack.c.b16 %v676, %v675
      %v714 = vpack.c.b16 %v678, %v677
      %v715 = vpack.c.b16 %v680, %v679
      %v716 = vpack.c.b16 %v682, %v681
      %v717 = vpack.c.b16 %v684, %v683
      %v718 = vpack.c.b16 %v686, %v685
      %751 = vmatpush.bf16.msra.mxu0 %v694
      %752 = vmatpush.bf16.msra.mxu0 %v693
      %753 = vmatpush.bf16.msra.mxu0 %v692
      %754 = vmatpush.bf16.msra.mxu0 %v691
      %755 = vmatpush.bf16.msra.mxu0 %v690
      %756 = vmatpush.bf16.msra.mxu0 %v689
      %757 = vmatpush.bf16.msra.mxu0 %v688
      %758 = vmatpush.bf16.msra.mxu0 %v687
      %759 = vmatmul.bf16.gmra.mxu0 %v495
      %v760 = vpop.f32.mrf.mxu0
      %v761 = vadd.f32 0.0, %v760
      %v762 = vpop.f32.mrf.mxu0
      %v763 = vadd.f32 0.0, %v762
      %764 = vmatmul.bf16.gmra.mxu0 %v499
      %v765 = vpop.f32.mrf.mxu0
      %v766 = vadd.f32 0.0, %v765
      %v767 = vpop.f32.mrf.mxu0
      %v768 = vadd.f32 0.0, %v767
      %769 = vmatmul.bf16.gmra.mxu0 %v503
      %v770 = vpop.f32.mrf.mxu0
      %v771 = vadd.f32 0.0, %v770
      %v772 = vpop.f32.mrf.mxu0
      %v773 = vadd.f32 0.0, %v772
      %774 = vmatmul.bf16.gmra.mxu0 %v507
      %v775 = vpop.f32.mrf.mxu0
      %v776 = vadd.f32 0.0, %v775
      %v777 = vpop.f32.mrf.mxu0
      %v778 = vadd.f32 0.0, %v777
      %779 = vmatmul.bf16.gmra.mxu0 %v511
      %v780 = vpop.f32.mrf.mxu0
      %v781 = vadd.f32 0.0, %v780
      %v782 = vpop.f32.mrf.mxu0
      %v783 = vadd.f32 0.0, %v782
      %784 = vmatmul.bf16.gmra.mxu0 %v515
      %v785 = vpop.f32.mrf.mxu0
      %v786 = vadd.f32 0.0, %v785
      %v787 = vpop.f32.mrf.mxu0
      %v788 = vadd.f32 0.0, %v787
      %789 = vmatmul.bf16.gmra.mxu0 %v519
      %v790 = vpop.f32.mrf.mxu0
      %v791 = vadd.f32 0.0, %v790
      %v792 = vpop.f32.mrf.mxu0
      %v793 = vadd.f32 0.0, %v792
      %794 = vmatmul.bf16.gmra.mxu0 %v523
      %v795 = vpop.f32.mrf.mxu0
      %v796 = vadd.f32 0.0, %v795
      %v797 = vpop.f32.mrf.mxu0
      %v798 = vadd.f32 0.0, %v797
      %799 = vdwg.mxu0
      %800 = vmatpush.bf16.msra.mxu0 %v702
      %801 = vmatpush.bf16.msra.mxu0 %v701
      %802 = vmatpush.bf16.msra.mxu0 %v700
      %803 = vmatpush.bf16.msra.mxu0 %v699
      %804 = vmatpush.bf16.msra.mxu0 %v698
      %805 = vmatpush.bf16.msra.mxu0 %v697
      %806 = vmatpush.bf16.msra.mxu0 %v696
      %807 = vmatpush.bf16.msra.mxu0 %v695
      %808 = vmatmul.bf16.gmra.mxu0 %v496
      %v809 = vpop.f32.mrf.mxu0
      %v810 = vadd.f32 %v761, %v809
      %v811 = vpop.f32.mrf.mxu0
      %v812 = vadd.f32 %v763, %v811
      %813 = vmatmul.bf16.gmra.mxu0 %v500
      %v814 = vpop.f32.mrf.mxu0
      %v815 = vadd.f32 %v766, %v814
      %v816 = vpop.f32.mrf.mxu0
      %v817 = vadd.f32 %v768, %v816
      %818 = vmatmul.bf16.gmra.mxu0 %v504
      %v819 = vpop.f32.mrf.mxu0
      %v820 = vadd.f32 %v771, %v819
      %v821 = vpop.f32.mrf.mxu0
      %v822 = vadd.f32 %v773, %v821
      %823 = vmatmul.bf16.gmra.mxu0 %v508
      %v824 = vpop.f32.mrf.mxu0
      %v825 = vadd.f32 %v776, %v824
      %v826 = vpop.f32.mrf.mxu0
      %v827 = vadd.f32 %v778, %v826
      %828 = vmatmul.bf16.gmra.mxu0 %v512
      %v829 = vpop.f32.mrf.mxu0
      %v830 = vadd.f32 %v781, %v829
      %v831 = vpop.f32.mrf.mxu0
      %v832 = vadd.f32 %v783, %v831
      %833 = vmatmul.bf16.gmra.mxu0 %v516
      %v834 = vpop.f32.mrf.mxu0
      %v835 = vadd.f32 %v786, %v834
      %v836 = vpop.f32.mrf.mxu0
      %v837 = vadd.f32 %v788, %v836
      %838 = vmatmul.bf16.gmra.mxu0 %v520
      %v839 = vpop.f32.mrf.mxu0
      %v840 = vadd.f32 %v791, %v839
      %v841 = vpop.f32.mrf.mxu0
      %v842 = vadd.f32 %v793, %v841
      %843 = vmatmul.bf16.gmra.mxu0 %v524
      %v844 = vpop.f32.mrf.mxu0
      %v845 = vadd.f32 %v796, %v844
      %v846 = vpop.f32.mrf.mxu0
      %v847 = vadd.f32 %v798, %v846
      %848 = vdwg.mxu0
      %849 = vmatpush.bf16.msra.mxu0 %v710
      %850 = vmatpush.bf16.msra.mxu0 %v709
      %851 = vmatpush.bf16.msra.mxu0 %v708
      %852 = vmatpush.bf16.msra.mxu0 %v707
      %853 = vmatpush.bf16.msra.mxu0 %v706
      %854 = vmatpush.bf16.msra.mxu0 %v705
      %855 = vmatpush.bf16.msra.mxu0 %v704
      %856 = vmatpush.bf16.msra.mxu0 %v703
      %857 = vmatmul.bf16.gmra.mxu0 %v497
      %v858 = vpop.f32.mrf.mxu0
      %v859 = vadd.f32 %v810, %v858
      %v860 = vpop.f32.mrf.mxu0
      %v861 = vadd.f32 %v812, %v860
      %862 = vmatmul.bf16.gmra.mxu0 %v501
      %v863 = vpop.f32.mrf.mxu0
      %v864 = vadd.f32 %v815, %v863
      %v865 = vpop.f32.mrf.mxu0
      %v866 = vadd.f32 %v817, %v865
      %867 = vmatmul.bf16.gmra.mxu0 %v505
      %v868 = vpop.f32.mrf.mxu0
      %v869 = vadd.f32 %v820, %v868
      %v870 = vpop.f32.mrf.mxu0
      %v871 = vadd.f32 %v822, %v870
      %872 = vmatmul.bf16.gmra.mxu0 %v509
      %v873 = vpop.f32.mrf.mxu0
      %v874 = vadd.f32 %v825, %v873
      %v875 = vpop.f32.mrf.mxu0
      %v876 = vadd.f32 %v827, %v875
      %877 = vmatmul.bf16.gmra.mxu0 %v513
      %v878 = vpop.f32.mrf.mxu0
      %v879 = vadd.f32 %v830, %v878
      %v880 = vpop.f32.mrf.mxu0
      %v881 = vadd.f32 %v832, %v880
      %882 = vmatmul.bf16.gmra.mxu0 %v517
      %v883 = vpop.f32.mrf.mxu0
      %v884 = vadd.f32 %v835, %v883
      %v885 = vpop.f32.mrf.mxu0
      %v886 = vadd.f32 %v837, %v885
      %887 = vmatmul.bf16.gmra.mxu0 %v521
      %v888 = vpop.f32.mrf.mxu0
      %v889 = vadd.f32 %v840, %v888
      %v890 = vpop.f32.mrf.mxu0
      %v891 = vadd.f32 %v842, %v890
      %892 = vmatmul.bf16.gmra.mxu0 %v525
      %v893 = vpop.f32.mrf.mxu0
      %v894 = vadd.f32 %v845, %v893
      %v895 = vpop.f32.mrf.mxu0
      %v896 = vadd.f32 %v847, %v895
      %897 = vdwg.mxu0
      %898 = vmatpush.bf16.msra.mxu0 %v718
      %899 = vmatpush.bf16.msra.mxu0 %v717
      %900 = vmatpush.bf16.msra.mxu0 %v716
      %901 = vmatpush.bf16.msra.mxu0 %v715
      %902 = vmatpush.bf16.msra.mxu0 %v714
      %903 = vmatpush.bf16.msra.mxu0 %v713
      %904 = vmatpush.bf16.msra.mxu0 %v712
      %905 = vmatpush.bf16.msra.mxu0 %v711
      %906 = vmatmul.bf16.gmra.mxu0 %v498
      %v907 = vpop.f32.mrf.mxu0
      %v908 = vadd.f32 %v859, %v907
      %v909 = vpop.f32.mrf.mxu0
      %v910 = vadd.f32 %v861, %v909
      %911 = vmatmul.bf16.gmra.mxu0 %v502
      %v912 = vpop.f32.mrf.mxu0
      %v913 = vadd.f32 %v864, %v912
      %v914 = vpop.f32.mrf.mxu0
      %v915 = vadd.f32 %v866, %v914
      %916 = vmatmul.bf16.gmra.mxu0 %v506
      %v917 = vpop.f32.mrf.mxu0
      %v918 = vadd.f32 %v869, %v917
      %v919 = vpop.f32.mrf.mxu0
      %v920 = vadd.f32 %v871, %v919
      %921 = vmatmul.bf16.gmra.mxu0 %v510
      %v922 = vpop.f32.mrf.mxu0
      %v923 = vadd.f32 %v874, %v922
      %v924 = vpop.f32.mrf.mxu0
      %v925 = vadd.f32 %v876, %v924
      %926 = vmatmul.bf16.gmra.mxu0 %v514
      %v927 = vpop.f32.mrf.mxu0
      %v928 = vadd.f32 %v879, %v927
      %v929 = vpop.f32.mrf.mxu0
      %v930 = vadd.f32 %v881, %v929
      %931 = vmatmul.bf16.gmra.mxu0 %v518
      %v932 = vpop.f32.mrf.mxu0
      %v933 = vadd.f32 %v884, %v932
      %v934 = vpop.f32.mrf.mxu0
      %v935 = vadd.f32 %v886, %v934
      %936 = vmatmul.bf16.gmra.mxu0 %v522
      %v937 = vpop.f32.mrf.mxu0
      %v938 = vadd.f32 %v889, %v937
      %v939 = vpop.f32.mrf.mxu0
      %v940 = vadd.f32 %v891, %v939
      %941 = vmatmul.bf16.gmra.mxu0 %v526
      %v942 = vpop.f32.mrf.mxu0
      %v943 = vadd.f32 %v894, %v942
      %v944 = vpop.f32.mrf.mxu0
      %v945 = vadd.f32 %v896, %v944
      %946 = vdwg.mxu0
      %v947 = vadd.f32 %v287, %v908
      %v948 = vadd.f32 %v288, %v910
      %v949 = vadd.f32 %v289, %v913
      %v950 = vadd.f32 %v290, %v915
      %v951 = vadd.f32 %v291, %v918
      %v952 = vadd.f32 %v292, %v920
      %v953 = vadd.f32 %v293, %v923
      %v954 = vadd.f32 %v294, %v925
      %v955 = vadd.f32 %v295, %v928
      %v956 = vadd.f32 %v296, %v930
      %v957 = vadd.f32 %v297, %v933
      %v958 = vadd.f32 %v298, %v935
      %v959 = vadd.f32 %v299, %v938
      %v960 = vadd.f32 %v300, %v940
      %v961 = vadd.f32 %v301, %v943
      %v962 = vadd.f32 %v302, %v945
      %963 = vst [vmem:[#allocation2] sm:$0xff] %v947
      %964 = vst [vmem:[#allocation2 + $0x8] sm:$0xff] %v948
      %965 = vst [vmem:[#allocation2 + $0x10] sm:$0xff] %v949
      %966 = vst [vmem:[#allocation2 + $0x18] sm:$0xff] %v950
      %967 = vst [vmem:[#allocation2 + $0x20] sm:$0xff] %v951
      %968 = vst [vmem:[#allocation2 + $0x28] sm:$0xff] %v952
      %969 = vst [vmem:[#allocation2 + $0x30] sm:$0xff] %v953
      %970 = vst [vmem:[#allocation2 + $0x38] sm:$0xff] %v954
      %971 = vst [vmem:[#allocation2 + $0x40] sm:$0xff] %v955
      %972 = vst [vmem:[#allocation2 + $0x48] sm:$0xff] %v956
      %973 = vst [vmem:[#allocation2 + $0x50] sm:$0xff] %v957
      %974 = vst [vmem:[#allocation2 + $0x58] sm:$0xff] %v958
      %975 = vst [vmem:[#allocation2 + $0x60] sm:$0xff] %v959
      %976 = vst [vmem:[#allocation2 + $0x68] sm:$0xff] %v960
      %977 = vst [vmem:[#allocation2 + $0x70] sm:$0xff] %v961
      %978 = vst [vmem:[#allocation2 + $0x78] sm:$0xff] %v962
      // Predicated region
      $region37: #{inception_apply.6} parent=31 // pred_check
        %p979 = pneg %p267
      $region38: #{inception_apply.6} parent=31 // pred_check_branch
        %981 = sbr.rel (%p979) target = $region40
      $region39: #{inception_apply.6} parent=31 // pred_region
        %v982 = vld [vmem:[#allocation2] sm:$0xff]
        %v983 = vld [vmem:[#allocation2 + $0x8] sm:$0xff]
        %v984 = vld [vmem:[#allocation2 + $0x10] sm:$0xff]
        %v985 = vld [vmem:[#allocation2 + $0x18] sm:$0xff]
        %v986 = vld [vmem:[#allocation2 + $0x20] sm:$0xff]
        %v987 = vld [vmem:[#allocation2 + $0x28] sm:$0xff]
        %v988 = vld [vmem:[#allocation2 + $0x30] sm:$0xff]
        %v989 = vld [vmem:[#allocation2 + $0x38] sm:$0xff]
        %v990 = vld [vmem:[#allocation2 + $0x40] sm:$0xff]
        %v991 = vld [vmem:[#allocation2 + $0x48] sm:$0xff]
        %v992 = vld [vmem:[#allocation2 + $0x50] sm:$0xff]
        %v993 = vld [vmem:[#allocation2 + $0x58] sm:$0xff]
        %v994 = vld [vmem:[#allocation2 + $0x60] sm:$0xff]
        %v995 = vld [vmem:[#allocation2 + $0x68] sm:$0xff]
        %v996 = vld [vmem:[#allocation2 + $0x70] sm:$0xff]
        %v997 = vld [vmem:[#allocation2 + $0x78] sm:$0xff]
        %v998 = vld [vmem:[%s257] sm:$0x1]
        %v1000 = vperm.slane %v998, 0
        %v1002 = vadd.f32 %v982, %v1000
        %v1003 = vadd.f32 %v983, %v1000
        %v1004 = vadd.f32 %v984, %v1000
        %v1005 = vadd.f32 %v985, %v1000
        %v1006 = vadd.f32 %v986, %v1000
        %v1007 = vadd.f32 %v987, %v1000
        %v1008 = vadd.f32 %v988, %v1000
        %v1009 = vadd.f32 %v989, %v1000
        %v1010 = vadd.f32 %v990, %v1000
        %v1011 = vadd.f32 %v991, %v1000
        %v1012 = vadd.f32 %v992, %v1000
        %v1013 = vadd.f32 %v993, %v1000
        %v1014 = vadd.f32 %v994, %v1000
        %v1015 = vadd.f32 %v995, %v1000
        %v1016 = vadd.f32 %v996, %v1000
        %v1017 = vadd.f32 %v997, %v1000
        %v1018 = vmax.f32 %v1002, 0.0
        %v1019 = vmax.f32 %v1003, 0.0
        %v1020 = vmax.f32 %v1004, 0.0
        %v1021 = vmax.f32 %v1005, 0.0
        %v1022 = vmax.f32 %v1006, 0.0
        %v1023 = vmax.f32 %v1007, 0.0
        %v1024 = vmax.f32 %v1008, 0.0
        %v1025 = vmax.f32 %v1009, 0.0
        %v1026 = vmax.f32 %v1010, 0.0
        %v1027 = vmax.f32 %v1011, 0.0
        %v1028 = vmax.f32 %v1012, 0.0
        %v1029 = vmax.f32 %v1013, 0.0
        %v1030 = vmax.f32 %v1014, 0.0
        %v1031 = vmax.f32 %v1015, 0.0
        %v1032 = vmax.f32 %v1016, 0.0
        %v1033 = vmax.f32 %v1017, 0.0
        %1034 = vst [vmem:[%s265] sm:$0xff] %v1018
        %1035 = vst [vmem:[%s265 + $0x8] sm:$0xff] %v1019
        %1036 = vst [vmem:[%s265 + $0x10] sm:$0xff] %v1020
        %1037 = vst [vmem:[%s265 + $0x18] sm:$0xff] %v1021
        %1038 = vst [vmem:[%s265 + $0x20] sm:$0xff] %v1022
        %1039 = vst [vmem:[%s265 + $0x28] sm:$0xff] %v1023
        %1040 = vst [vmem:[%s265 + $0x30] sm:$0xff] %v1024
        %1041 = vst [vmem:[%s265 + $0x38] sm:$0xff] %v1025
        %1042 = vst [vmem:[%s265 + $0x40] sm:$0xff] %v1026
        %1043 = vst [vmem:[%s265 + $0x48] sm:$0xff] %v1027
        %1044 = vst [vmem:[%s265 + $0x50] sm:$0xff] %v1028
        %1045 = vst [vmem:[%s265 + $0x58] sm:$0xff] %v1029
        %1046 = vst [vmem:[%s265 + $0x60] sm:$0xff] %v1030
        %1047 = vst [vmem:[%s265 + $0x68] sm:$0xff] %v1031
        %1048 = vst [vmem:[%s265 + $0x70] sm:$0xff] %v1032
        %1049 = vst [vmem:[%s265 + $0x78] sm:$0xff] %v1033
      $region40: #{inception_apply.6} parent=31 // pred_fallthru
        _
      %s1050 = smul.u32 16, %s19
      %p1051 = scmp.lt.s32.totalorder %s1050, 63
      %s1052 = scalar_select %p1051, %s1050, 63
      %p1053 = scmp.lt.s32.totalorder %s20, 0
      %s1054 = scalar_select %p1053, %s20, 0
      %s1055 = sadd.s32 %s1054, %s1052
      %s1056 = smul.addr %s1055, 8
      %s1057 = scalar_lea.vmem %s3, %s1056
      // Predicated region
      $region41: #{inception_apply.6} parent=31 // pred_check
        %p1058 = pneg %p135
      $region42: #{inception_apply.6} parent=31 // pred_check_branch
        %1060 = sbr.rel (%p1058) target = $region44
      $region43: #{inception_apply.6} parent=31 // pred_region
        %s1061 = smul.u32 16, %s19
      $region44: #{inception_apply.6} parent=31 // pred_fallthru
        _
    $region32: #{inception_apply.6} parent=5 // pred_fallthru
      _
    %p1062 = scmp.le.s32.totalorder 2, %s9
    // Predicated region
    $region45: #{inception_apply.6} parent=5 // pred_check
      %p1063 = pneg %p1062
    $region46: #{inception_apply.6} parent=5 // pred_check_branch
      %1065 = sbr.rel (%p1063) target = $region48
    $region47: #{inception_apply.6} parent=5 // pred_region
      %s1066 = ssub.s32 %s9, 2
      // Predicated region
      $region49: #{inception_apply.6} parent=47 // pred_check
        %p1067 = pneg %p141
      $region50: #{inception_apply.6} parent=47 // pred_check_branch
        %1069 = sbr.rel (%p1067) target = $region52
      $region51: #{inception_apply.6} parent=47 // pred_region
        %s1070 = smul.u32 16, %s22
        %p1071 = scmp.lt.s32.totalorder %s1070, 63
        %s1072 = scalar_select %p1071, %s1070, 63
        %p1073 = scmp.lt.s32.totalorder %s23, 0
        %s1074 = scalar_select %p1073, %s23, 0
        %s1075 = sadd.s32 %s1074, %s1072
        %s1076 = smul.addr %s1075, 8
        %s1077 = scalar_lea.vmem %s3, %s1076
      $region52: #{inception_apply.6} parent=47 // pred_fallthru
        _
    $region48: #{inception_apply.6} parent=5 // pred_fallthru
      _
  $region6: #{inception_apply.6} parent=0 // loop_footer
    %s13 = sadd.s32 1, %s9
  $region7: #{inception_apply.6} parent=0 // loop_footer_branch
    %8 = sbr.rel target = $region3
  $region8: #{inception_apply.6} parent=0 // loop_exit
    _

// kernel: inception_apply.8
$region0: #{inception_apply.8}
  #allocation0 [shape = 'u32[]', space=smem, size = 0x4, offset = 0x4, fixed_abs, tag = 'smem constant byte address 0x4 - core index']
  #allocation1 [shape = 'u32[72,128]{1,0:T(1,128)}', space=vmem, size = 0x9000, scoped, tag = 'internal scratch']
  %s0 = inlined_call_operand.vmem [shape: f32[9,32768], index: 0, kind: input, shape index: {}]
  %s1 = inlined_call_operand.vmem [shape: f32[1,32768], index: 1, kind: output, shape index: {}]
  %s2 = sld [smem:[#allocation0]]
  $region60: #{inception_apply.8} parent=0
    _
  %s4 = ssub.s32 1, %s2
  %s5 = scalar_select 0, %s4, %s2
  $region1: #{inception_apply.8} parent=0
    #allocation2 [shape = 'u8[524288]{0}', space=vmem, size = 0x80000, scoped, tag = 'input window, operand 0']
    loop: start=0, step=1, limit=10
    $region2: #{inception_apply.8} parent=1 // loop_pre_header
      _
    $region3: #{inception_apply.8} parent=1 // loop_header
      %s7 = sphi 0, %s11
      %p8 = scmp.ge.s32.totalorder %s7, 10
      %s17 = sphi 0, %s19
      %s20 = sphi 0, %s17
      %s21 = sphi 0, %s20
      %s37 = sphi 0, %s21
      %s43 = sphi 0, %s45
      %s46 = sphi 0, %s43
      %s47 = sphi 0, %s46
      %s63 = sphi 0, %s47
    $region4: #{inception_apply.8} parent=1 // loop_header_branch
      %10 = sbr.rel (%p8) target = $region8
    $region5: #{inception_apply.8} parent=1 // loop_body
      %s12 = ssub.s32 %s7, 1
      %s13 = ssub.s32 %s7, 2
      %s14 = sadd.s32 %s7, 1
      %s15 = ssub.s32 %s7, %s14
      %p16 = scmp.eq.s32.totalorder %s15, 0
      %s18 = sadd.s32 %s17, 1
      %s19 = scalar_select %p16, %s17, %s18
      %p22 = pneg %p16
      %p23 = scmp.eq.s32.totalorder %s7, 7
      %p24 = por %p22, %p23
      %p25 = scmp.ne.s32.totalorder %s17, %s20
      %p26 = scmp.eq.s32.totalorder %s7, 0
      %p27 = por %p25, %p26
      %p28 = scmp.ne.s32.totalorder %s17, %s20
      %p29 = scmp.eq.s32.totalorder %s12, 7
      %p30 = por %p28, %p29
      %p31 = scmp.ne.s32.totalorder %s20, %s21
      %p32 = scmp.eq.s32.totalorder %s12, 0
      %p33 = por %p31, %p32
      %p34 = scmp.ne.s32.totalorder %s20, %s21
      %p35 = scmp.eq.s32.totalorder %s13, 7
      %p36 = por %p34, %p35
      %p38 = scmp.ne.s32.totalorder %s21, %s37
      %p39 = scmp.eq.s32.totalorder %s13, 0
      %p40 = por %p38, %p39
      %s41 = ssub.s32 %s7, %s14
      %p42 = scmp.eq.s32.totalorder %s41, 0
      %s44 = sadd.s32 %s43, 1
      %s45 = scalar_select %p42, %s43, %s44
      %p48 = pneg %p42
      %p49 = scmp.eq.s32.totalorder %s7, 7
      %p50 = por %p48, %p49
      %p51 = scmp.ne.s32.totalorder %s43, %s46
      %p52 = scmp.eq.s32.totalorder %s7, 0
      %p53 = por %p51, %p52
      %p54 = scmp.ne.s32.totalorder %s43, %s46
      %p55 = scmp.eq.s32.totalorder %s12, 7
      %p56 = por %p54, %p55
      %p57 = scmp.ne.s32.totalorder %s46, %s47
      %p58 = scmp.eq.s32.totalorder %s12, 0
      %p59 = por %p57, %p58
      %p60 = scmp.ne.s32.totalorder %s46, %s47
      %p61 = scmp.eq.s32.totalorder %s13, 7
      %p62 = por %p60, %p61
      %p64 = scmp.ne.s32.totalorder %s47, %s63
      %p65 = scmp.eq.s32.totalorder %s13, 0
      %p66 = por %p64, %p65
      %p67 = scmp.le.s32.totalorder 1, %s7
      %p68 = scmp.lt.s32.totalorder %s7, 9
      %p69 = pnand %p67, %p68
      %p70 = pneg %p69
      // Predicated region
      $region9: #{inception_apply.8} parent=5 // pred_check
        _
      $region10: #{inception_apply.8} parent=5 // pred_check_branch
        %72 = sbr.rel (%p69) target = $region12
      $region11: #{inception_apply.8} parent=5 // pred_region
        %s73 = ssub.s32 %s7, 1
      $region12: #{inception_apply.8} parent=5 // pred_fallthru
        _
      %p74 = scmp.lt.s32.totalorder %s7, 8
      // Predicated region
      $region13: #{inception_apply.8} parent=5 // pred_check
        %p75 = pneg %p74
      $region14: #{inception_apply.8} parent=5 // pred_check_branch
        %77 = sbr.rel (%p75) target = $region16
      $region15: #{inception_apply.8} parent=5 // pred_region
        // Predicated region
        $region17: #{inception_apply.8} parent=15 // pred_check
          %p78 = pneg %p27
        $region18: #{inception_apply.8} parent=15 // pred_check_branch
          %80 = sbr.rel (%p78) target = $region20
        $region19: #{inception_apply.8} parent=15 // pred_region
          %s81 = sand.u32 %s17, 1
          %s82 = sand.u32 %s17, 1
          %s83 = smul.addr %s82, 512
          %s84 = scalar_lea.vmem [#allocation2], %s83
          %s85 = smul.u32 32, %s7
          %s86 = smul.addr %s85, 8
          %s87 = scalar_lea.vmem %s0, %s86
          // Predicated region
          $region21: #{inception_apply.8} parent=19 // pred_check
            _
          $region22: #{inception_apply.8} parent=19 // pred_check_branch
            %89 = sbr.rel (0) target = $region24
          $region23: #{inception_apply.8} parent=19 // pred_region
            // Predicated region
            $region25: #{inception_apply.8} parent=23 // pred_check
              _
            $region26: #{inception_apply.8} parent=23 // pred_check_branch
              %91 = sbr.rel (0) target = $region28
            $region27: #{inception_apply.8} parent=23 // pred_region
              loop: start=0, step=1, limit=1
              $region29: #{inception_apply.8} parent=27 // loop_pre_header
                _
              $region30: #{inception_apply.8} parent=27 // loop_header
                %s93 = sphi 0, %s97
                %p94 = scmp.ge.s32.totalorder %s93, 1
                %s98 = sphi %s87, %s87
                %s99 = sphi %s84, %s84
              $region31: #{inception_apply.8} parent=27 // loop_header_branch
                %96 = sbr.rel (%p94) target = $region35
              $region32: #{inception_apply.8} parent=27 // loop_body
                %v100 = vld [vmem:[%s98] sm:$0xff]
                %101 = vst [vmem:[%s99] sm:$0xff] %v100
                %v102 = vld [vmem:[%s98 + $0x8] sm:$0xff]
                %103 = vst [vmem:[%s99 + $0x8] sm:$0xff] %v102
                %v104 = vld [vmem:[%s98 + $0x10] sm:$0xff]
                %105 = vst [vmem:[%s99 + $0x10] sm:$0xff] %v104
                %v106 = vld [vmem:[%s98 + $0x18] sm:$0xff]
                %107 = vst [vmem:[%s99 + $0x18] sm:$0xff] %v106
                %v108 = vld [vmem:[%s98 + $0x20] sm:$0xff]
                %109 = vst [vmem:[%s99 + $0x20] sm:$0xff] %v108
                %v110 = vld [vmem:[%s98 + $0x28] sm:$0xff]
                %111 = vst [vmem:[%s99 + $0x28] sm:$0xff] %v110
                %v112 = vld [vmem:[%s98 + $0x30] sm:$0xff]
                %113 = vst [vmem:[%s99 + $0x30] sm:$0xff] %v112
                %v114 = vld [vmem:[%s98 + $0x38] sm:$0xff]
                %115 = vst [vmem:[%s99 + $0x38] sm:$0xff] %v114
                %v116 = vld [vmem:[%s98 + $0x40] sm:$0xff]
                %117 = vst [vmem:[%s99 + $0x40] sm:$0xff] %v116
                %v118 = vld [vmem:[%s98 + $0x48] sm:$0xff]
                %119 = vst [vmem:[%s99 + $0x48] sm:$0xff] %v118
                %v120 = vld [vmem:[%s98 + $0x50] sm:$0xff]
                %121 = vst [vmem:[%s99 + $0x50] sm:$0xff] %v120
                %v122 = vld [vmem:[%s98 + $0x58] sm:$0xff]
                %123 = vst [vmem:[%s99 + $0x58] sm:$0xff] %v122
                %v124 = vld [vmem:[%s98 + $0x60] sm:$0xff]
                %125 = vst [vmem:[%s99 + $0x60] sm:$0xff] %v124
                %v126 = vld [vmem:[%s98 + $0x68] sm:$0xff]
                %127 = vst [vmem:[%s99 + $0x68] sm:$0xff] %v126
                %v128 = vld [vmem:[%s98 + $0x70] sm:$0xff]
                %129 = vst [vmem:[%s99 + $0x70] sm:$0xff] %v128
                %v130 = vld [vmem:[%s98 + $0x78] sm:$0xff]
                %131 = vst [vmem:[%s99 + $0x78] sm:$0xff] %v130
                %v132 = vld [vmem:[%s98 + $0x80] sm:$0xff]
                %133 = vst [vmem:[%s99 + $0x80] sm:$0xff] %v132
                %v134 = vld [vmem:[%s98 + $0x88] sm:$0xff]
                %135 = vst [vmem:[%s99 + $0x88] sm:$0xff] %v134
                %v136 = vld [vmem:[%s98 + $0x90] sm:$0xff]
                %137 = vst [vmem:[%s99 + $0x90] sm:$0xff] %v136
                %v138 = vld [vmem:[%s98 + $0x98] sm:$0xff]
                %139 = vst [vmem:[%s99 + $0x98] sm:$0xff] %v138
                %v140 = vld [vmem:[%s98 + $0xa0] sm:$0xff]
                %141 = vst [vmem:[%s99 + $0xa0] sm:$0xff] %v140
                %v142 = vld [vmem:[%s98 + $0xa8] sm:$0xff]
                %143 = vst [vmem:[%s99 + $0xa8] sm:$0xff] %v142
                %v144 = vld [vmem:[%s98 + $0xb0] sm:$0xff]
                %145 = vst [vmem:[%s99 + $0xb0] sm:$0xff] %v144
                %v146 = vld [vmem:[%s98 + $0xb8] sm:$0xff]
                %147 = vst [vmem:[%s99 + $0xb8] sm:$0xff] %v146
                %v148 = vld [vmem:[%s98 + $0xc0] sm:$0xff]
                %149 = vst [vmem:[%s99 + $0xc0] sm:$0xff] %v148
                %v150 = vld [vmem:[%s98 + $0xc8] sm:$0xff]
                %151 = vst [vmem:[%s99 + $0xc8] sm:$0xff] %v150
                %v152 = vld [vmem:[%s98 + $0xd0] sm:$0xff]
                %153 = vst [vmem:[%s99 + $0xd0] sm:$0xff] %v152
                %v154 = vld [vmem:[%s98 + $0xd8] sm:$0xff]
                %155 = vst [vmem:[%s99 + $0xd8] sm:$0xff] %v154
                %v156 = vld [vmem:[%s98 + $0xe0] sm:$0xff]
                %157 = vst [vmem:[%s99 + $0xe0] sm:$0xff] %v156
                %v158 = vld [vmem:[%s98 + $0xe8] sm:$0xff]
                %159 = vst [vmem:[%s99 + $0xe8] sm:$0xff] %v158
                %v160 = vld [vmem:[%s98 + $0xf0] sm:$0xff]
                %161 = vst [vmem:[%s99 + $0xf0] sm:$0xff] %v160
                %v162 = vld [vmem:[%s98 + $0xf8] sm:$0xff]
                %163 = vst [vmem:[%s99 + $0xf8] sm:$0xff] %v162
                %v164 = vld [vmem:[%s98 + $0x800] sm:$0xff]
                %165 = vst [vmem:[%s99 + $0x100] sm:$0xff] %v164
                %v166 = vld [vmem:[%s98 + $0x808] sm:$0xff]
                %167 = vst [vmem:[%s99 + $0x108] sm:$0xff] %v166
                %v168 = vld [vmem:[%s98 + $0x810] sm:$0xff]
                %169 = vst [vmem:[%s99 + $0x110] sm:$0xff] %v168
                %v170 = vld [vmem:[%s98 + $0x818] sm:$0xff]
                %171 = vst [vmem:[%s99 + $0x118] sm:$0xff] %v170
                %v172 = vld [vmem:[%s98 + $0x820] sm:$0xff]
                %173 = vst [vmem:[%s99 + $0x120] sm:$0xff] %v172
                %v174 = vld [vmem:[%s98 + $0x828] sm:$0xff]
                %175 = vst [vmem:[%s99 + $0x128] sm:$0xff] %v174
                %v176 = vld [vmem:[%s98 + $0x830] sm:$0xff]
                %177 = vst [vmem:[%s99 + $0x130] sm:$0xff] %v176
                %v178 = vld [vmem:[%s98 + $0x838] sm:$0xff]
                %179 = vst [vmem:[%s99 + $0x138] sm:$0xff] %v178
                %v180 = vld [vmem:[%s98 + $0x840] sm:$0xff]
                %181 = vst [vmem:[%s99 + $0x140] sm:$0xff] %v180
                %v182 = vld [vmem:[%s98 + $0x848] sm:$0xff]
                %183 = vst [vmem:[%s99 + $0x148] sm:$0xff] %v182
                %v184 = vld [vmem:[%s98 + $0x850] sm:$0xff]
                %185 = vst [vmem:[%s99 + $0x150] sm:$0xff] %v184
                %v186 = vld [vmem:[%s98 + $0x858] sm:$0xff]
                %187 = vst [vmem:[%s99 + $0x158] sm:$0xff] %v186
                %v188 = vld [vmem:[%s98 + $0x860] sm:$0xff]
                %189 = vst [vmem:[%s99 + $0x160] sm:$0xff] %v188
                %v190 = vld [vmem:[%s98 + $0x868] sm:$0xff]
                %191 = vst [vmem:[%s99 + $0x168] sm:$0xff] %v190
                %v192 = vld [vmem:[%s98 + $0x870] sm:$0xff]
                %193 = vst [vmem:[%s99 + $0x170] sm:$0xff] %v192
                %v194 = vld [vmem:[%s98 + $0x878] sm:$0xff]
                %195 = vst [vmem:[%s99 + $0x178] sm:$0xff] %v194
                %v196 = vld [vmem:[%s98 + $0x880] sm:$0xff]
                %197 = vst [vmem:[%s99 + $0x180] sm:$0xff] %v196
                %v198 = vld [vmem:[%s98 + $0x888] sm:$0xff]
                %199 = vst [vmem:[%s99 + $0x188] sm:$0xff] %v198
                %v200 = vld [vmem:[%s98 + $0x890] sm:$0xff]
                %201 = vst [vmem:[%s99 + $0x190] sm:$0xff] %v200
                %v202 = vld [vmem:[%s98 + $0x898] sm:$0xff]
                %203 = vst [vmem:[%s99 + $0x198] sm:$0xff] %v202
                %v204 = vld [vmem:[%s98 + $0x8a0] sm:$0xff]
                %205 = vst [vmem:[%s99 + $0x1a0] sm:$0xff] %v204
                %v206 = vld [vmem:[%s98 + $0x8a8] sm:$0xff]
                %207 = vst [vmem:[%s99 + $0x1a8] sm:$0xff] %v206
                %v208 = vld [vmem:[%s98 + $0x8b0] sm:$0xff]
                %209 = vst [vmem:[%s99 + $0x1b0] sm:$0xff] %v208
                %v210 = vld [vmem:[%s98 + $0x8b8] sm:$0xff]
                %211 = vst [vmem:[%s99 + $0x1b8] sm:$0xff] %v210
                %v212 = vld [vmem:[%s98 + $0x8c0] sm:$0xff]
                %213 = vst [vmem:[%s99 + $0x1c0] sm:$0xff] %v212
                %v214 = vld [vmem:[%s98 + $0x8c8] sm:$0xff]
                %215 = vst [vmem:[%s99 + $0x1c8] sm:$0xff] %v214
                %v216 = vld [vmem:[%s98 + $0x8d0] sm:$0xff]
                %217 = vst [vmem:[%s99 + $0x1d0] sm:$0xff] %v216
                %v218 = vld [vmem:[%s98 + $0x8d8] sm:$0xff]
                %219 = vst [vmem:[%s99 + $0x1d8] sm:$0xff] %v218
                %v220 = vld [vmem:[%s98 + $0x8e0] sm:$0xff]
                %221 = vst [vmem:[%s99 + $0x1e0] sm:$0xff] %v220
                %v222 = vld [vmem:[%s98 + $0x8e8] sm:$0xff]
                %223 = vst [vmem:[%s99 + $0x1e8] sm:$0xff] %v222
                %v224 = vld [vmem:[%s98 + $0x8f0] sm:$0xff]
                %225 = vst [vmem:[%s99 + $0x1f0] sm:$0xff] %v224
                %v226 = vld [vmem:[%s98 + $0x8f8] sm:$0xff]
                %227 = vst [vmem:[%s99 + $0x1f8] sm:$0xff] %v226
              $region33: #{inception_apply.8} parent=27 // loop_footer
                %s97 = sadd.s32 1, %s93
              $region34: #{inception_apply.8} parent=27 // loop_footer_branch
                %92 = sbr.rel target = $region30
              $region35: #{inception_apply.8} parent=27 // loop_exit
                _
            $region28: #{inception_apply.8} parent=23 // pred_fallthru
              _
            // Predicated region
            $region36: #{inception_apply.8} parent=23 // pred_check
              _
            $region37: #{inception_apply.8} parent=23 // pred_check_branch
              %229 = sbr.rel target = $region39
            $region38: #{inception_apply.8} parent=23 // pred_region
              _
            $region39: #{inception_apply.8} parent=23 // pred_fallthru
              _
          $region24: #{inception_apply.8} parent=19 // pred_fallthru
            _
          %230 = vnop
        $region20: #{inception_apply.8} parent=15 // pred_fallthru
          _
      $region16: #{inception_apply.8} parent=5 // pred_fallthru
        _
      %p231 = scmp.le.s32.totalorder 1, %s7
      %p232 = scmp.lt.s32.totalorder %s7, 9
      %p233 = pnand %p231, %p232
      %p234 = pneg %p233
      // Predicated region
      $region40: #{inception_apply.8} parent=5 // pred_check
        _
      $region41: #{inception_apply.8} parent=5 // pred_check_branch
        %236 = sbr.rel (%p233) target = $region43
      $region42: #{inception_apply.8} parent=5 // pred_region
        %s237 = ssub.s32 %s7, 1
        %s238 = sand.u32 %s20, 1
        %s239 = sand.u32 %s20, 1
        %s240 = smul.addr %s239, 512
        %s241 = scalar_lea.vmem [#allocation2], %s240
        // Predicated region
        $region44: #{inception_apply.8} parent=42 // pred_check
          %p242 = pneg %p33
        $region45: #{inception_apply.8} parent=42 // pred_check_branch
          %244 = sbr.rel (%p242) target = $region47
        $region46: #{inception_apply.8} parent=42 // pred_region
          _
        $region47: #{inception_apply.8} parent=42 // pred_fallthru
          _
        %s245 = sand.u32 %s20, 1
        %s246 = sand.u32 %s20, 1
        %s247 = smul.addr %s246, 512
        %s248 = scalar_lea.vmem [#allocation2], %s247
        %p249 = pneg %p33
        %p250 = pneg %p30
        %p251 = pneg %p59
        %p252 = pneg %p56
        %s253 = smul.u32 32, %s12
        %p254 = scmp.lt.s32.totalorder %s253, 255
        %s255 = scalar_select %p254, %s253, 255
        %s256 = scalar_lea.vmem %s1, %s255
        %s257 = smul.u32 32, %s12
        %s258 = smul.u32 32, %s12
        %p259 = scmp.lt.s32.totalorder %s258, 255
        %s260 = scalar_select %p259, %s258, 255
        %s261 = scalar_lea.vmem %s1, %s260
        %s262 = smul.u32 32, %s12
        %v263 = vld [vmem:[%s241] sm:$0xff]
        %v264 = vld [vmem:[%s241 + $0x8] sm:$0xff]
        %v265 = vld [vmem:[%s241 + $0x10] sm:$0xff]
        %v266 = vld [vmem:[%s241 + $0x18] sm:$0xff]
        %v267 = vld [vmem:[%s241 + $0x20] sm:$0xff]
        %v268 = vld [vmem:[%s241 + $0x28] sm:$0xff]
        %v269 = vld [vmem:[%s241 + $0x30] sm:$0xff]
        %v270 = vld [vmem:[%s241 + $0x38] sm:$0xff]
        %v271 = vld [vmem:[%s241 + $0x40] sm:$0xff]
        %v272 = vld [vmem:[%s241 + $0x48] sm:$0xff]
        %v273 = vld [vmem:[%s241 + $0x50] sm:$0xff]
        %v274 = vld [vmem:[%s241 + $0x58] sm:$0xff]
        %v275 = vld [vmem:[%s241 + $0x60] sm:$0xff]
        %v276 = vld [vmem:[%s241 + $0x68] sm:$0xff]
        %v277 = vld [vmem:[%s241 + $0x70] sm:$0xff]
        %v278 = vld [vmem:[%s241 + $0x78] sm:$0xff]
        %v279 = vld [vmem:[%s241 + $0x80] sm:$0xff]
        %v280 = vld [vmem:[%s241 + $0x88] sm:$0xff]
        %v281 = vld [vmem:[%s241 + $0x90] sm:$0xff]
        %v282 = vld [vmem:[%s241 + $0x98] sm:$0xff]
        %v283 = vld [vmem:[%s241 + $0xa0] sm:$0xff]
        %v284 = vld [vmem:[%s241 + $0xa8] sm:$0xff]
        %v285 = vld [vmem:[%s241 + $0xb0] sm:$0xff]
        %v286 = vld [vmem:[%s241 + $0xb8] sm:$0xff]
        %v287 = vld [vmem:[%s241 + $0xc0] sm:$0xff]
        %v288 = vld [vmem:[%s241 + $0xc8] sm:$0xff]
        %v289 = vld [vmem:[%s241 + $0xd0] sm:$0xff]
        %v290 = vld [vmem:[%s241 + $0xd8] sm:$0xff]
        %v291 = vld [vmem:[%s241 + $0xe0] sm:$0xff]
        %v292 = vld [vmem:[%s241 + $0xe8] sm:$0xff]
        %v293 = vld [vmem:[%s241 + $0xf0] sm:$0xff]
        %v294 = vld [vmem:[%s241 + $0xf8] sm:$0xff]
        %v295 = vld [vmem:[%s241 + $0x100] sm:$0x1]
        %v296 = vld [vmem:[%s241 + $0x108] sm:$0x1]
        %v297 = vld [vmem:[%s241 + $0x110] sm:$0x1]
        %v298 = vld [vmem:[%s241 + $0x118] sm:$0x1]
        %v299 = vld [vmem:[%s241 + $0x120] sm:$0x1]
        %v300 = vld [vmem:[%s241 + $0x128] sm:$0x1]
        %v301 = vld [vmem:[%s241 + $0x130] sm:$0x1]
        %v302 = vld [vmem:[%s241 + $0x138] sm:$0x1]
        %v303 = vld [vmem:[%s241 + $0x140] sm:$0x1]
        %v304 = vld [vmem:[%s241 + $0x148] sm:$0x1]
        %v305 = vld [vmem:[%s241 + $0x150] sm:$0x1]
        %v306 = vld [vmem:[%s241 + $0x158] sm:$0x1]
        %v307 = vld [vmem:[%s241 + $0x160] sm:$0x1]
        %v308 = vld [vmem:[%s241 + $0x168] sm:$0x1]
        %v309 = vld [vmem:[%s241 + $0x170] sm:$0x1]
        %v310 = vld [vmem:[%s241 + $0x178] sm:$0x1]
        %v311 = vld [vmem:[%s241 + $0x180] sm:$0x1]
        %v312 = vld [vmem:[%s241 + $0x188] sm:$0x1]
        %v313 = vld [vmem:[%s241 + $0x190] sm:$0x1]
        %v314 = vld [vmem:[%s241 + $0x198] sm:$0x1]
        %v315 = vld [vmem:[%s241 + $0x1a0] sm:$0x1]
        %v316 = vld [vmem:[%s241 + $0x1a8] sm:$0x1]
        %v317 = vld [vmem:[%s241 + $0x1b0] sm:$0x1]
        %v318 = vld [vmem:[%s241 + $0x1b8] sm:$0x1]
        %v319 = vld [vmem:[%s241 + $0x1c0] sm:$0x1]
        %v320 = vld [vmem:[%s241 + $0x1c8] sm:$0x1]
        %v321 = vld [vmem:[%s241 + $0x1d0] sm:$0x1]
        %v322 = vld [vmem:[%s241 + $0x1d8] sm:$0x1]
        %v323 = vld [vmem:[%s241 + $0x1e0] sm:$0x1]
        %v324 = vld [vmem:[%s241 + $0x1e8] sm:$0x1]
        %v325 = vld [vmem:[%s241 + $0x1f0] sm:$0x1]
        %v326 = vld [vmem:[%s241 + $0x1f8] sm:$0x1]
        %vm327 = vcmask 1040384
        %v328 = vsel %vm327, %v295, -inf
        %v329 = vmax.f32 %v263, %v328
        %v330 = vrot.slane %v329, 4
        %v331 = vmax.f32 %v329, %v330
        %v332 = vrot.slane %v331, 2
        %v333 = vmax.f32 %v331, %v332
        %v334 = vrot.slane %v333, 1
        %v335 = vmax.f32 %v333, %v334
        %v336 = vsel %vm327, %v296, -inf
        %v337 = vmax.f32 %v264, %v336
        %v338 = vrot.slane %v337, 4
        %v339 = vmax.f32 %v337, %v338
        %v340 = vrot.slane %v339, 2
        %v341 = vmax.f32 %v339, %v340
        %v342 = vrot.slane %v341, 1
        %v343 = vmax.f32 %v341, %v342
        %v344 = vsel %vm327, %v297, -inf
        %v345 = vmax.f32 %v265, %v344
        %v346 = vrot.slane %v345, 4
        %v347 = vmax.f32 %v345, %v346
        %v348 = vrot.slane %v347, 2
        %v349 = vmax.f32 %v347, %v348
        %v350 = vrot.slane %v349, 1
        %v351 = vmax.f32 %v349, %v350
        %v352 = vsel %vm327, %v298, -inf
        %v353 = vmax.f32 %v266, %v352
        %v354 = vrot.slane %v353, 4
        %v355 = vmax.f32 %v353, %v354
        %v356 = vrot.slane %v355, 2
        %v357 = vmax.f32 %v355, %v356
        %v358 = vrot.slane %v357, 1
        %v359 = vmax.f32 %v357, %v358
        %v360 = vsel %vm327, %v299, -inf
        %v361 = vmax.f32 %v267, %v360
        %v362 = vrot.slane %v361, 4
        %v363 = vmax.f32 %v361, %v362
        %v364 = vrot.slane %v363, 2
        %v365 = vmax.f32 %v363, %v364
        %v366 = vrot.slane %v365, 1
        %v367 = vmax.f32 %v365, %v366
        %v368 = vsel %vm327, %v300, -inf
        %v369 = vmax.f32 %v268, %v368
        %v370 = vrot.slane %v369, 4
        %v371 = vmax.f32 %v369, %v370
        %v372 = vrot.slane %v371, 2
        %v373 = vmax.f32 %v371, %v372
        %v374 = vrot.slane %v373, 1
        %v375 = vmax.f32 %v373, %v374
        %v376 = vsel %vm327, %v301, -inf
        %v377 = vmax.f32 %v269, %v376
        %v378 = vrot.slane %v377, 4
        %v379 = vmax.f32 %v377, %v378
        %v380 = vrot.slane %v379, 2
        %v381 = vmax.f32 %v379, %v380
        %v382 = vrot.slane %v381, 1
        %v383 = vmax.f32 %v381, %v382
        %v384 = vsel %vm327, %v302, -inf
        %v385 = vmax.f32 %v270, %v384
        %v386 = vrot.slane %v385, 4
        %v387 = vmax.f32 %v385, %v386
        %v388 = vrot.slane %v387, 2
        %v389 = vmax.f32 %v387, %v388
        %v390 = vrot.slane %v389, 1
        %v391 = vmax.f32 %v389, %v390
        %v392 = vsel %vm327, %v303, -inf
        %v393 = vmax.f32 %v271, %v392
        %v394 = vrot.slane %v393, 4
        %v395 = vmax.f32 %v393, %v394
        %v396 = vrot.slane %v395, 2
        %v397 = vmax.f32 %v395, %v396
        %v398 = vrot.slane %v397, 1
        %v399 = vmax.f32 %v397, %v398
        %v400 = vsel %vm327, %v304, -inf
        %v401 = vmax.f32 %v272, %v400
        %v402 = vrot.slane %v401, 4
        %v403 = vmax.f32 %v401, %v402
        %v404 = vrot.slane %v403, 2
        %v405 = vmax.f32 %v403, %v404
        %v406 = vrot.slane %v405, 1
        %v407 = vmax.f32 %v405, %v406
        %v408 = vsel %vm327, %v305, -inf
        %v409 = vmax.f32 %v273, %v408
        %v410 = vrot.slane %v409, 4
        %v411 = vmax.f32 %v409, %v410
        %v412 = vrot.slane %v411, 2
        %v413 = vmax.f32 %v411, %v412
        %v414 = vrot.slane %v413, 1
        %v415 = vmax.f32 %v413, %v414
        %v416 = vsel %vm327, %v306, -inf
        %v417 = vmax.f32 %v274, %v416
        %v418 = vrot.slane %v417, 4
        %v419 = vmax.f32 %v417, %v418
        %v420 = vrot.slane %v419, 2
        %v421 = vmax.f32 %v419, %v420
        %v422 = vrot.slane %v421, 1
        %v423 = vmax.f32 %v421, %v422
        %v424 = vsel %vm327, %v307, -inf
        %v425 = vmax.f32 %v275, %v424
        %v426 = vrot.slane %v425, 4
        %v427 = vmax.f32 %v425, %v426
        %v428 = vrot.slane %v427, 2
        %v429 = vmax.f32 %v427, %v428
        %v430 = vrot.slane %v429, 1
        %v431 = vmax.f32 %v429, %v430
        %v432 = vsel %vm327, %v308, -inf
        %v433 = vmax.f32 %v276, %v432
        %v434 = vrot.slane %v433, 4
        %v435 = vmax.f32 %v433, %v434
        %v436 = vrot.slane %v435, 2
        %v437 = vmax.f32 %v435, %v436
        %v438 = vrot.slane %v437, 1
        %v439 = vmax.f32 %v437, %v438
        %v440 = vsel %vm327, %v309, -inf
        %v441 = vmax.f32 %v277, %v440
        %v442 = vrot.slane %v441, 4
        %v443 = vmax.f32 %v441, %v442
        %v444 = vrot.slane %v443, 2
        %v445 = vmax.f32 %v443, %v444
        %v446 = vrot.slane %v445, 1
        %v447 = vmax.f32 %v445, %v446
        %v448 = vsel %vm327, %v310, -inf
        %v449 = vmax.f32 %v278, %v448
        %v450 = vrot.slane %v449, 4
        %v451 = vmax.f32 %v449, %v450
        %v452 = vrot.slane %v451, 2
        %v453 = vmax.f32 %v451, %v452
        %v454 = vrot.slane %v453, 1
        %v455 = vmax.f32 %v453, %v454
        %v456 = vsel %vm327, %v311, -inf
        %v457 = vmax.f32 %v279, %v456
        %v458 = vrot.slane %v457, 4
        %v459 = vmax.f32 %v457, %v458
        %v460 = vrot.slane %v459, 2
        %v461 = vmax.f32 %v459, %v460
        %v462 = vrot.slane %v461, 1
        %v463 = vmax.f32 %v461, %v462
        %v464 = vsel %vm327, %v312, -inf
        %v465 = vmax.f32 %v280, %v464
        %v466 = vrot.slane %v465, 4
        %v467 = vmax.f32 %v465, %v466
        %v468 = vrot.slane %v467, 2
        %v469 = vmax.f32 %v467, %v468
        %v470 = vrot.slane %v469, 1
        %v471 = vmax.f32 %v469, %v470
        %v472 = vsel %vm327, %v313, -inf
        %v473 = vmax.f32 %v281, %v472
        %v474 = vrot.slane %v473, 4
        %v475 = vmax.f32 %v473, %v474
        %v476 = vrot.slane %v475, 2
        %v477 = vmax.f32 %v475, %v476
        %v478 = vrot.slane %v477, 1
        %v479 = vmax.f32 %v477, %v478
        %v480 = vsel %vm327, %v314, -inf
        %v481 = vmax.f32 %v282, %v480
        %v482 = vrot.slane %v481, 4
        %v483 = vmax.f32 %v481, %v482
        %v484 = vrot.slane %v483, 2
        %v485 = vmax.f32 %v483, %v484
        %v486 = vrot.slane %v485, 1
        %v487 = vmax.f32 %v485, %v486
        %v488 = vsel %vm327, %v315, -inf
        %v489 = vmax.f32 %v283, %v488
        %v490 = vrot.slane %v489, 4
        %v491 = vmax.f32 %v489, %v490
        %v492 = vrot.slane %v491, 2
        %v493 = vmax.f32 %v491, %v492
        %v494 = vrot.slane %v493, 1
        %v495 = vmax.f32 %v493, %v494
        %v496 = vsel %vm327, %v316, -inf
        %v497 = vmax.f32 %v284, %v496
        %v498 = vrot.slane %v497, 4
        %v499 = vmax.f32 %v497, %v498
        %v500 = vrot.slane %v499, 2
        %v501 = vmax.f32 %v499, %v500
        %v502 = vrot.slane %v501, 1
        %v503 = vmax.f32 %v501, %v502
        %v504 = vsel %vm327, %v317, -inf
        %v505 = vmax.f32 %v285, %v504
        %v506 = vrot.slane %v505, 4
        %v507 = vmax.f32 %v505, %v506
        %v508 = vrot.slane %v507, 2
        %v509 = vmax.f32 %v507, %v508
        %v510 = vrot.slane %v509, 1
        %v511 = vmax.f32 %v509, %v510
        %v512 = vsel %vm327, %v318, -inf
        %v513 = vmax.f32 %v286, %v512
        %v514 = vrot.slane %v513, 4
        %v515 = vmax.f32 %v513, %v514
        %v516 = vrot.slane %v515, 2
        %v517 = vmax.f32 %v515, %v516
        %v518 = vrot.slane %v517, 1
        %v519 = vmax.f32 %v517, %v518
        %v520 = vsel %vm327, %v319, -inf
        %v521 = vmax.f32 %v287, %v520
        %v522 = vrot.slane %v521, 4
        %v523 = vmax.f32 %v521, %v522
        %v524 = vrot.slane %v523, 2
        %v525 = vmax.f32 %v523, %v524
        %v526 = vrot.slane %v525, 1
        %v527 = vmax.f32 %v525, %v526
        %v528 = vsel %vm327, %v320, -inf
        %v529 = vmax.f32 %v288, %v528
        %v530 = vrot.slane %v529, 4
        %v531 = vmax.f32 %v529, %v530
        %v532 = vrot.slane %v531, 2
        %v533 = vmax.f32 %v531, %v532
        %v534 = vrot.slane %v533, 1
        %v535 = vmax.f32 %v533, %v534
        %v536 = vsel %vm327, %v321, -inf
        %v537 = vmax.f32 %v289, %v536
        %v538 = vrot.slane %v537, 4
        %v539 = vmax.f32 %v537, %v538
        %v540 = vrot.slane %v539, 2
        %v541 = vmax.f32 %v539, %v540
        %v542 = vrot.slane %v541, 1
        %v543 = vmax.f32 %v541, %v542
        %v544 = vsel %vm327, %v322, -inf
        %v545 = vmax.f32 %v290, %v544
        %v546 = vrot.slane %v545, 4
        %v547 = vmax.f32 %v545, %v546
        %v548 = vrot.slane %v547, 2
        %v549 = vmax.f32 %v547, %v548
        %v550 = vrot.slane %v549, 1
        %v551 = vmax.f32 %v549, %v550
        %v552 = vsel %vm327, %v323, -inf
        %v553 = vmax.f32 %v291, %v552
        %v554 = vrot.slane %v553, 4
        %v555 = vmax.f32 %v553, %v554
        %v556 = vrot.slane %v555, 2
        %v557 = vmax.f32 %v555, %v556
        %v558 = vrot.slane %v557, 1
        %v559 = vmax.f32 %v557, %v558
        %v560 = vsel %vm327, %v324, -inf
        %v561 = vmax.f32 %v292, %v560
        %v562 = vrot.slane %v561, 4
        %v563 = vmax.f32 %v561, %v562
        %v564 = vrot.slane %v563, 2
        %v565 = vmax.f32 %v563, %v564
        %v566 = vrot.slane %v565, 1
        %v567 = vmax.f32 %v565, %v566
        %v568 = vsel %vm327, %v325, -inf
        %v569 = vmax.f32 %v293, %v568
        %v570 = vrot.slane %v569, 4
        %v571 = vmax.f32 %v569, %v570
        %v572 = vrot.slane %v571, 2
        %v573 = vmax.f32 %v571, %v572
        %v574 = vrot.slane %v573, 1
        %v575 = vmax.f32 %v573, %v574
        %v576 = vsel %vm327, %v326, -inf
        %v577 = vmax.f32 %v294, %v576
        %v578 = vrot.slane %v577, 4
        %v579 = vmax.f32 %v577, %v578
        %v580 = vrot.slane %v579, 2
        %v581 = vmax.f32 %v579, %v580
        %v582 = vrot.slane %v581, 1
        %v583 = vmax.f32 %v581, %v582
        %v616 = vrot.slane %v343, 7
        %v617 = vrot.slane %v351, 6
        %v618 = vrot.slane %v359, 5
        %v619 = vrot.slane %v367, 4
        %v620 = vrot.slane %v375, 3
        %v621 = vrot.slane %v383, 2
        %v622 = vrot.slane %v391, 1
        %v623 = vrot.slane %v407, 7
        %v624 = vrot.slane %v415, 6
        %v625 = vrot.slane %v423, 5
        %v626 = vrot.slane %v431, 4
        %v627 = vrot.slane %v439, 3
        %v628 = vrot.slane %v447, 2
        %v629 = vrot.slane %v455, 1
        %v630 = vrot.slane %v471, 7
        %v631 = vrot.slane %v479, 6
        %v632 = vrot.slane %v487, 5
        %v633 = vrot.slane %v495, 4
        %v634 = vrot.slane %v503, 3
        %v635 = vrot.slane %v511, 2
        %v636 = vrot.slane %v519, 1
        %v637 = vrot.slane %v535, 7
        %v638 = vrot.slane %v543, 6
        %v639 = vrot.slane %v551, 5
        %v640 = vrot.slane %v559, 4
        %v641 = vrot.slane %v567, 3
        %v642 = vrot.slane %v575, 2
        %v643 = vrot.slane %v583, 1
        %v644 = vsel %vm327, %v335, %v616
        %vm645 = vcmask 1042434
        %v646 = vsel %vm645, %v617, %v618
        %vm647 = vcmask 1041408
        %v648 = vsel %vm647, %v644, %v646
        %vm649 = vcmask 1044484
        %v650 = vsel %vm649, %v619, %v620
        %vm651 = vcmask 1046534
        %v652 = vsel %vm651, %v621, %v622
        %vm653 = vcmask 1045508
        %v654 = vsel %vm653, %v650, %v652
        %vm655 = vcmask 1043456
        %v656 = vsel %vm655, %v648, %v654
        %v657 = vsel %vm327, %v399, %v623
        %v658 = vsel %vm645, %v624, %v625
        %v659 = vsel %vm647, %v657, %v658
        %v660 = vsel %vm649, %v626, %v627
        %v661 = vsel %vm651, %v628, %v629
        %v662 = vsel %vm653, %v660, %v661
        %v663 = vsel %vm655, %v659, %v662
        %v664 = vsel %vm327, %v463, %v630
        %v665 = vsel %vm645, %v631, %v632
        %v666 = vsel %vm647, %v664, %v665
        %v667 = vsel %vm649, %v633, %v634
        %v668 = vsel %vm651, %v635, %v636
        %v669 = vsel %vm653, %v667, %v668
        %v670 = vsel %vm655, %v666, %v669
        %v671 = vsel %vm327, %v527, %v637
        %v672 = vsel %vm645, %v638, %v639
        %v673 = vsel %vm647, %v671, %v672
        %v674 = vsel %vm649, %v640, %v641
        %v675 = vsel %vm651, %v642, %v643
        %v676 = vsel %vm653, %v674, %v675
        %v677 = vsel %vm655, %v673, %v676
        %682 = vst [vmem:[%s261] sm:$0xff] %v656
        %683 = vst [vmem:[%s261 + $0x8] sm:$0xff] %v663
        %684 = vst [vmem:[%s261 + $0x10] sm:$0xff] %v670
        %685 = vst [vmem:[%s261 + $0x18] sm:$0xff] %v677
        %s686 = smul.u32 32, %s12
        %p687 = scmp.lt.s32.totalorder %s686, 255
        %s688 = scalar_select %p687, %s686, 255
        %s689 = scalar_lea.vmem %s1, %s688
        // Predicated region
        $region48: #{inception_apply.8} parent=42 // pred_check
          %p690 = pneg %p56
        $region49: #{inception_apply.8} parent=42 // pred_check_branch
          %692 = sbr.rel (%p690) target = $region51
        $region50: #{inception_apply.8} parent=42 // pred_region
          %s693 = smul.u32 32, %s12
        $region51: #{inception_apply.8} parent=42 // pred_fallthru
          _
      $region43: #{inception_apply.8} parent=5 // pred_fallthru
        _
      %p694 = scmp.le.s32.totalorder 2, %s7
      // Predicated region
      $region52: #{inception_apply.8} parent=5 // pred_check
        %p695 = pneg %p694
      $region53: #{inception_apply.8} parent=5 // pred_check_branch
        %697 = sbr.rel (%p695) target = $region55
      $region54: #{inception_apply.8} parent=5 // pred_region
        %s698 = ssub.s32 %s7, 2
        // Predicated region
        $region56: #{inception_apply.8} parent=54 // pred_check
          %p699 = pneg %p62
        $region57: #{inception_apply.8} parent=54 // pred_check_branch
          %701 = sbr.rel (%p699) target = $region59
        $region58: #{inception_apply.8} parent=54 // pred_region
          %s702 = smul.u32 32, %s13
          %p703 = scmp.lt.s32.totalorder %s702, 255
          %s704 = scalar_select %p703, %s702, 255
          %s705 = scalar_lea.vmem %s1, %s704
        $region59: #{inception_apply.8} parent=54 // pred_fallthru
          _
      $region55: #{inception_apply.8} parent=5 // pred_fallthru
        _
    $region6: #{inception_apply.8} parent=1 // loop_footer
      %s11 = sadd.s32 1, %s7
    $region7: #{inception_apply.8} parent=1 // loop_footer_branch
      %6 = sbr.rel target = $region3
    $region8: #{inception_apply.8} parent=1 // loop_exit
      _

// kernel: squeeze.0
$region0: #{squeeze.0}
  %s0 = inlined_call_operand.vmem [shape: bf16[32768], index: 0, kind: input, shape index: {}]
  %s1 = inlined_call_operand.vmem [shape: bf16[512,64], index: 1, kind: output, shape index: {}]
  $region1: #{squeeze.0} parent=0
    #allocation0 [shape = 'u8[262144]{0}', space=vmem, size = 0x40000, scoped, tag = 'scoped mem for output reshape']
    #allocation1 [shape = 'u8[131072]{0}', space=vmem, size = 0x20000, scoped, tag = 'scoped mem for input reshape']
    %s3 = ssub.s32 256, 1
    %s4 = scalar_lea.vmem %s0, 124
    %s5 = sshrl.u32 %s3, 1
    %s6 = sor.u32 %s3, %s5
    %s7 = sand.u32 %s6, 85
    %s8 = sshrl.u32 %s7, 1
    %s9 = sor.u32 %s7, %s8
    %s10 = sand.u32 51, %s9
    %s11 = sshrl.u32 %s10, 2
    %s12 = sor.u32 %s10, %s11
    %s13 = sand.u32 15, %s12
    %v14 = vld [vmem:[%s4] sm:%s13]
    %v15 = vunpack.c.l.bf16 %v14
    %v16 = vunpack.c.h.bf16 %v14
    %s17 = scalar_lea.vmem [#allocation1], 248
    %18 = vst [vmem:[%s17] sm:%s3] %v15
    %s19 = scalar_lea.vmem %s0, 120
    %s20 = sshrl.u32 %s3, 1
    %s21 = sor.u32 %s3, %s20
    %s22 = sand.u32 %s21, 85
    %s23 = sshrl.u32 %s22, 1
    %s24 = sor.u32 %s22, %s23
    %s25 = sand.u32 51, %s24
    %s26 = sshrl.u32 %s25, 2
    %s27 = sor.u32 %s25, %s26
    %s28 = sand.u32 15, %s27
    %v29 = vld [vmem:[%s19] sm:%s28]
    %v30 = vunpack.c.l.bf16 %v29
    %v31 = vunpack.c.h.bf16 %v29
    %s32 = scalar_lea.vmem [#allocation1], 240
    %33 = vst [vmem:[%s32] sm:%s3] %v30
    %s34 = scalar_lea.vmem %s0, 116
    %s35 = sshrl.u32 %s3, 1
    %s36 = sor.u32 %s3, %s35
    %s37 = sand.u32 %s36, 85
    %s38 = sshrl.u32 %s37, 1
    %s39 = sor.u32 %s37, %s38
    %s40 = sand.u32 51, %s39
    %s41 = sshrl.u32 %s40, 2
    %s42 = sor.u32 %s40, %s41
    %s43 = sand.u32 15, %s42
    %v44 = vld [vmem:[%s34] sm:%s43]
    %v45 = vunpack.c.l.bf16 %v44
    %v46 = vunpack.c.h.bf16 %v44
    %s47 = scalar_lea.vmem [#allocation1], 232
    %48 = vst [vmem:[%s47] sm:%s3] %v45
    %s49 = scalar_lea.vmem %s0, 112
    %s50 = sshrl.u32 %s3, 1
    %s51 = sor.u32 %s3, %s50
    %s52 = sand.u32 %s51, 85
    %s53 = sshrl.u32 %s52, 1
    %s54 = sor.u32 %s52, %s53
    %s55 = sand.u32 51, %s54
    %s56 = sshrl.u32 %s55, 2
    %s57 = sor.u32 %s55, %s56
    %s58 = sand.u32 15, %s57
    %v59 = vld [vmem:[%s49] sm:%s58]
    %v60 = vunpack.c.l.bf16 %v59
    %v61 = vunpack.c.h.bf16 %v59
    %s62 = scalar_lea.vmem [#allocation1], 224
    %63 = vst [vmem:[%s62] sm:%s3] %v60
    %s64 = scalar_lea.vmem %s0, 108
    %s65 = sshrl.u32 %s3, 1
    %s66 = sor.u32 %s3, %s65
    %s67 = sand.u32 %s66, 85
    %s68 = sshrl.u32 %s67, 1
    %s69 = sor.u32 %s67, %s68
    %s70 = sand.u32 51, %s69
    %s71 = sshrl.u32 %s70, 2
    %s72 = sor.u32 %s70, %s71
    %s73 = sand.u32 15, %s72
    %v74 = vld [vmem:[%s64] sm:%s73]
    %v75 = vunpack.c.l.bf16 %v74
    %v76 = vunpack.c.h.bf16 %v74
    %s77 = scalar_lea.vmem [#allocation1], 216
    %78 = vst [vmem:[%s77] sm:%s3] %v75
    %s79 = scalar_lea.vmem %s0, 104
    %s80 = sshrl.u32 %s3, 1
    %s81 = sor.u32 %s3, %s80
    %s82 = sand.u32 %s81, 85
    %s83 = sshrl.u32 %s82, 1
    %s84 = sor.u32 %s82, %s83
    %s85 = sand.u32 51, %s84
    %s86 = sshrl.u32 %s85, 2
    %s87 = sor.u32 %s85, %s86
    %s88 = sand.u32 15, %s87
    %v89 = vld [vmem:[%s79] sm:%s88]
    %v90 = vunpack.c.l.bf16 %v89
    %v91 = vunpack.c.h.bf16 %v89
    %s92 = scalar_lea.vmem [#allocation1], 208
    %93 = vst [vmem:[%s92] sm:%s3] %v90
    %s94 = scalar_lea.vmem %s0, 100
    %s95 = sshrl.u32 %s3, 1
    %s96 = sor.u32 %s3, %s95
    %s97 = sand.u32 %s96, 85
    %s98 = sshrl.u32 %s97, 1
    %s99 = sor.u32 %s97, %s98
    %s100 = sand.u32 51, %s99
    %s101 = sshrl.u32 %s100, 2
    %s102 = sor.u32 %s100, %s101
    %s103 = sand.u32 15, %s102
    %v104 = vld [vmem:[%s94] sm:%s103]
    %v105 = vunpack.c.l.bf16 %v104
    %v106 = vunpack.c.h.bf16 %v104
    %s107 = scalar_lea.vmem [#allocation1], 200
    %108 = vst [vmem:[%s107] sm:%s3] %v105
    %s109 = scalar_lea.vmem %s0, 96
    %s110 = sshrl.u32 %s3, 1
    %s111 = sor.u32 %s3, %s110
    %s112 = sand.u32 %s111, 85
    %s113 = sshrl.u32 %s112, 1
    %s114 = sor.u32 %s112, %s113
    %s115 = sand.u32 51, %s114
    %s116 = sshrl.u32 %s115, 2
    %s117 = sor.u32 %s115, %s116
    %s118 = sand.u32 15, %s117
    %v119 = vld [vmem:[%s109] sm:%s118]
    %v120 = vunpack.c.l.bf16 %v119
    %v121 = vunpack.c.h.bf16 %v119
    %s122 = scalar_lea.vmem [#allocation1], 192
    %123 = vst [vmem:[%s122] sm:%s3] %v120
    %s124 = scalar_lea.vmem %s0, 92
    %s125 = sshrl.u32 %s3, 1
    %s126 = sor.u32 %s3, %s125
    %s127 = sand.u32 %s126, 85
    %s128 = sshrl.u32 %s127, 1
    %s129 = sor.u32 %s127, %s128
    %s130 = sand.u32 51, %s129
    %s131 = sshrl.u32 %s130, 2
    %s132 = sor.u32 %s130, %s131
    %s133 = sand.u32 15, %s132
    %v134 = vld [vmem:[%s124] sm:%s133]
    %v135 = vunpack.c.l.bf16 %v134
    %v136 = vunpack.c.h.bf16 %v134
    %s137 = scalar_lea.vmem [#allocation1], 184
    %138 = vst [vmem:[%s137] sm:%s3] %v135
    %s139 = scalar_lea.vmem %s0, 88
    %s140 = sshrl.u32 %s3, 1
    %s141 = sor.u32 %s3, %s140
    %s142 = sand.u32 %s141, 85
    %s143 = sshrl.u32 %s142, 1
    %s144 = sor.u32 %s142, %s143
    %s145 = sand.u32 51, %s144
    %s146 = sshrl.u32 %s145, 2
    %s147 = sor.u32 %s145, %s146
    %s148 = sand.u32 15, %s147
    %v149 = vld [vmem:[%s139] sm:%s148]
    %v150 = vunpack.c.l.bf16 %v149
    %v151 = vunpack.c.h.bf16 %v149
    %s152 = scalar_lea.vmem [#allocation1], 176
    %153 = vst [vmem:[%s152] sm:%s3] %v150
    %s154 = scalar_lea.vmem %s0, 84
    %s155 = sshrl.u32 %s3, 1
    %s156 = sor.u32 %s3, %s155
    %s157 = sand.u32 %s156, 85
    %s158 = sshrl.u32 %s157, 1
    %s159 = sor.u32 %s157, %s158
    %s160 = sand.u32 51, %s159
    %s161 = sshrl.u32 %s160, 2
    %s162 = sor.u32 %s160, %s161
    %s163 = sand.u32 15, %s162
    %v164 = vld [vmem:[%s154] sm:%s163]
    %v165 = vunpack.c.l.bf16 %v164
    %v166 = vunpack.c.h.bf16 %v164
    %s167 = scalar_lea.vmem [#allocation1], 168
    %168 = vst [vmem:[%s167] sm:%s3] %v165
    %s169 = scalar_lea.vmem %s0, 80
    %s170 = sshrl.u32 %s3, 1
    %s171 = sor.u32 %s3, %s170
    %s172 = sand.u32 %s171, 85
    %s173 = sshrl.u32 %s172, 1
    %s174 = sor.u32 %s172, %s173
    %s175 = sand.u32 51, %s174
    %s176 = sshrl.u32 %s175, 2
    %s177 = sor.u32 %s175, %s176
    %s178 = sand.u32 15, %s177
    %v179 = vld [vmem:[%s169] sm:%s178]
    %v180 = vunpack.c.l.bf16 %v179
    %v181 = vunpack.c.h.bf16 %v179
    %s182 = scalar_lea.vmem [#allocation1], 160
    %183 = vst [vmem:[%s182] sm:%s3] %v180
    %s184 = scalar_lea.vmem %s0, 76
    %s185 = sshrl.u32 %s3, 1
    %s186 = sor.u32 %s3, %s185
    %s187 = sand.u32 %s186, 85
    %s188 = sshrl.u32 %s187, 1
    %s189 = sor.u32 %s187, %s188
    %s190 = sand.u32 51, %s189
    %s191 = sshrl.u32 %s190, 2
    %s192 = sor.u32 %s190, %s191
    %s193 = sand.u32 15, %s192
    %v194 = vld [vmem:[%s184] sm:%s193]
    %v195 = vunpack.c.l.bf16 %v194
    %v196 = vunpack.c.h.bf16 %v194
    %s197 = scalar_lea.vmem [#allocation1], 152
    %198 = vst [vmem:[%s197] sm:%s3] %v195
    %s199 = scalar_lea.vmem %s0, 72
    %s200 = sshrl.u32 %s3, 1
    %s201 = sor.u32 %s3, %s200
    %s202 = sand.u32 %s201, 85
    %s203 = sshrl.u32 %s202, 1
    %s204 = sor.u32 %s202, %s203
    %s205 = sand.u32 51, %s204
    %s206 = sshrl.u32 %s205, 2
    %s207 = sor.u32 %s205, %s206
    %s208 = sand.u32 15, %s207
    %v209 = vld [vmem:[%s199] sm:%s208]
    %v210 = vunpack.c.l.bf16 %v209
    %v211 = vunpack.c.h.bf16 %v209
    %s212 = scalar_lea.vmem [#allocation1], 144
    %213 = vst [vmem:[%s212] sm:%s3] %v210
    %s214 = scalar_lea.vmem %s0, 68
    %s215 = sshrl.u32 %s3, 1
    %s216 = sor.u32 %s3, %s215
    %s217 = sand.u32 %s216, 85
    %s218 = sshrl.u32 %s217, 1
    %s219 = sor.u32 %s217, %s218
    %s220 = sand.u32 51, %s219
    %s221 = sshrl.u32 %s220, 2
    %s222 = sor.u32 %s220, %s221
    %s223 = sand.u32 15, %s222
    %v224 = vld [vmem:[%s214] sm:%s223]
    %v225 = vunpack.c.l.bf16 %v224
    %v226 = vunpack.c.h.bf16 %v224
    %s227 = scalar_lea.vmem [#allocation1], 136
    %228 = vst [vmem:[%s227] sm:%s3] %v225
    %s229 = scalar_lea.vmem %s0, 64
    %s230 = sshrl.u32 %s3, 1
    %s231 = sor.u32 %s3, %s230
    %s232 = sand.u32 %s231, 85
    %s233 = sshrl.u32 %s232, 1
    %s234 = sor.u32 %s232, %s233
    %s235 = sand.u32 51, %s234
    %s236 = sshrl.u32 %s235, 2
    %s237 = sor.u32 %s235, %s236
    %s238 = sand.u32 15, %s237
    %v239 = vld [vmem:[%s229] sm:%s238]
    %v240 = vunpack.c.l.bf16 %v239
    %v241 = vunpack.c.h.bf16 %v239
    %s242 = scalar_lea.vmem [#allocation1], 128
    %243 = vst [vmem:[%s242] sm:%s3] %v240
    %s244 = scalar_lea.vmem %s0, 60
    %s245 = sshrl.u32 %s3, 1
    %s246 = sor.u32 %s3, %s245
    %s247 = sand.u32 %s246, 85
    %s248 = sshrl.u32 %s247, 1
    %s249 = sor.u32 %s247, %s248
    %s250 = sand.u32 51, %s249
    %s251 = sshrl.u32 %s250, 2
    %s252 = sor.u32 %s250, %s251
    %s253 = sand.u32 15, %s252
    %v254 = vld [vmem:[%s244] sm:%s253]
    %v255 = vunpack.c.l.bf16 %v254
    %v256 = vunpack.c.h.bf16 %v254
    %s257 = scalar_lea.vmem [#allocation1], 120
    %258 = vst [vmem:[%s257] sm:%s3] %v255
    %s259 = scalar_lea.vmem %s0, 56
    %s260 = sshrl.u32 %s3, 1
    %s261 = sor.u32 %s3, %s260
    %s262 = sand.u32 %s261, 85
    %s263 = sshrl.u32 %s262, 1
    %s264 = sor.u32 %s262, %s263
    %s265 = sand.u32 51, %s264
    %s266 = sshrl.u32 %s265, 2
    %s267 = sor.u32 %s265, %s266
    %s268 = sand.u32 15, %s267
    %v269 = vld [vmem:[%s259] sm:%s268]
    %v270 = vunpack.c.l.bf16 %v269
    %v271 = vunpack.c.h.bf16 %v269
    %s272 = scalar_lea.vmem [#allocation1], 112
    %273 = vst [vmem:[%s272] sm:%s3] %v270
    %s274 = scalar_lea.vmem %s0, 52
    %s275 = sshrl.u32 %s3, 1
    %s276 = sor.u32 %s3, %s275
    %s277 = sand.u32 %s276, 85
    %s278 = sshrl.u32 %s277, 1
    %s279 = sor.u32 %s277, %s278
    %s280 = sand.u32 51, %s279
    %s281 = sshrl.u32 %s280, 2
    %s282 = sor.u32 %s280, %s281
    %s283 = sand.u32 15, %s282
    %v284 = vld [vmem:[%s274] sm:%s283]
    %v285 = vunpack.c.l.bf16 %v284
    %v286 = vunpack.c.h.bf16 %v284
    %s287 = scalar_lea.vmem [#allocation1], 104
    %288 = vst [vmem:[%s287] sm:%s3] %v285
    %s289 = scalar_lea.vmem %s0, 48
    %s290 = sshrl.u32 %s3, 1
    %s291 = sor.u32 %s3, %s290
    %s292 = sand.u32 %s291, 85
    %s293 = sshrl.u32 %s292, 1
    %s294 = sor.u32 %s292, %s293
    %s295 = sand.u32 51, %s294
    %s296 = sshrl.u32 %s295, 2
    %s297 = sor.u32 %s295, %s296
    %s298 = sand.u32 15, %s297
    %v299 = vld [vmem:[%s289] sm:%s298]
    %v300 = vunpack.c.l.bf16 %v299
    %v301 = vunpack.c.h.bf16 %v299
    %s302 = scalar_lea.vmem [#allocation1], 96
    %303 = vst [vmem:[%s302] sm:%s3] %v300
    %s304 = scalar_lea.vmem %s0, 44
    %s305 = sshrl.u32 %s3, 1
    %s306 = sor.u32 %s3, %s305
    %s307 = sand.u32 %s306, 85
    %s308 = sshrl.u32 %s307, 1
    %s309 = sor.u32 %s307, %s308
    %s310 = sand.u32 51, %s309
    %s311 = sshrl.u32 %s310, 2
    %s312 = sor.u32 %s310, %s311
    %s313 = sand.u32 15, %s312
    %v314 = vld [vmem:[%s304] sm:%s313]
    %v315 = vunpack.c.l.bf16 %v314
    %v316 = vunpack.c.h.bf16 %v314
    %s317 = scalar_lea.vmem [#allocation1], 88
    %318 = vst [vmem:[%s317] sm:%s3] %v315
    %s319 = scalar_lea.vmem %s0, 40
    %s320 = sshrl.u32 %s3, 1
    %s321 = sor.u32 %s3, %s320
    %s322 = sand.u32 %s321, 85
    %s323 = sshrl.u32 %s322, 1
    %s324 = sor.u32 %s322, %s323
    %s325 = sand.u32 51, %s324
    %s326 = sshrl.u32 %s325, 2
    %s327 = sor.u32 %s325, %s326
    %s328 = sand.u32 15, %s327
    %v329 = vld [vmem:[%s319] sm:%s328]
    %v330 = vunpack.c.l.bf16 %v329
    %v331 = vunpack.c.h.bf16 %v329
    %s332 = scalar_lea.vmem [#allocation1], 80
    %333 = vst [vmem:[%s332] sm:%s3] %v330
    %s334 = scalar_lea.vmem %s0, 36
    %s335 = sshrl.u32 %s3, 1
    %s336 = sor.u32 %s3, %s335
    %s337 = sand.u32 %s336, 85
    %s338 = sshrl.u32 %s337, 1
    %s339 = sor.u32 %s337, %s338
    %s340 = sand.u32 51, %s339
    %s341 = sshrl.u32 %s340, 2
    %s342 = sor.u32 %s340, %s341
    %s343 = sand.u32 15, %s342
    %v344 = vld [vmem:[%s334] sm:%s343]
    %v345 = vunpack.c.l.bf16 %v344
    %v346 = vunpack.c.h.bf16 %v344
    %s347 = scalar_lea.vmem [#allocation1], 72
    %348 = vst [vmem:[%s347] sm:%s3] %v345
    %s349 = scalar_lea.vmem %s0, 32
    %s350 = sshrl.u32 %s3, 1
    %s351 = sor.u32 %s3, %s350
    %s352 = sand.u32 %s351, 85
    %s353 = sshrl.u32 %s352, 1
    %s354 = sor.u32 %s352, %s353
    %s355 = sand.u32 51, %s354
    %s356 = sshrl.u32 %s355, 2
    %s357 = sor.u32 %s355, %s356
    %s358 = sand.u32 15, %s357
    %v359 = vld [vmem:[%s349] sm:%s358]
    %v360 = vunpack.c.l.bf16 %v359
    %v361 = vunpack.c.h.bf16 %v359
    %s362 = scalar_lea.vmem [#allocation1], 64
    %363 = vst [vmem:[%s362] sm:%s3] %v360
    %s364 = scalar_lea.vmem %s0, 28
    %s365 = sshrl.u32 %s3, 1
    %s366 = sor.u32 %s3, %s365
    %s367 = sand.u32 %s366, 85
    %s368 = sshrl.u32 %s367, 1
    %s369 = sor.u32 %s367, %s368
    %s370 = sand.u32 51, %s369
    %s371 = sshrl.u32 %s370, 2
    %s372 = sor.u32 %s370, %s371
    %s373 = sand.u32 15, %s372
    %v374 = vld [vmem:[%s364] sm:%s373]
    %v375 = vunpack.c.l.bf16 %v374
    %v376 = vunpack.c.h.bf16 %v374
    %s377 = scalar_lea.vmem [#allocation1], 56
    %378 = vst [vmem:[%s377] sm:%s3] %v375
    %s379 = scalar_lea.vmem %s0, 24
    %s380 = sshrl.u32 %s3, 1
    %s381 = sor.u32 %s3, %s380
    %s382 = sand.u32 %s381, 85
    %s383 = sshrl.u32 %s382, 1
    %s384 = sor.u32 %s382, %s383
    %s385 = sand.u32 51, %s384
    %s386 = sshrl.u32 %s385, 2
    %s387 = sor.u32 %s385, %s386
    %s388 = sand.u32 15, %s387
    %v389 = vld [vmem:[%s379] sm:%s388]
    %v390 = vunpack.c.l.bf16 %v389
    %v391 = vunpack.c.h.bf16 %v389
    %s392 = scalar_lea.vmem [#allocation1], 48
    %393 = vst [vmem:[%s392] sm:%s3] %v390
    %s394 = scalar_lea.vmem %s0, 20
    %s395 = sshrl.u32 %s3, 1
    %s396 = sor.u32 %s3, %s395
    %s397 = sand.u32 %s396, 85
    %s398 = sshrl.u32 %s397, 1
    %s399 = sor.u32 %s397, %s398
    %s400 = sand.u32 51, %s399
    %s401 = sshrl.u32 %s400, 2
    %s402 = sor.u32 %s400, %s401
    %s403 = sand.u32 15, %s402
    %v404 = vld [vmem:[%s394] sm:%s403]
    %v405 = vunpack.c.l.bf16 %v404
    %v406 = vunpack.c.h.bf16 %v404
    %s407 = scalar_lea.vmem [#allocation1], 40
    %408 = vst [vmem:[%s407] sm:%s3] %v405
    %s409 = scalar_lea.vmem %s0, 16
    %s410 = sshrl.u32 %s3, 1
    %s411 = sor.u32 %s3, %s410
    %s412 = sand.u32 %s411, 85
    %s413 = sshrl.u32 %s412, 1
    %s414 = sor.u32 %s412, %s413
    %s415 = sand.u32 51, %s414
    %s416 = sshrl.u32 %s415, 2
    %s417 = sor.u32 %s415, %s416
    %s418 = sand.u32 15, %s417
    %v419 = vld [vmem:[%s409] sm:%s418]
    %v420 = vunpack.c.l.bf16 %v419
    %v421 = vunpack.c.h.bf16 %v419
    %s422 = scalar_lea.vmem [#allocation1], 32
    %423 = vst [vmem:[%s422] sm:%s3] %v420
    %s424 = scalar_lea.vmem %s0, 12
    %s425 = sshrl.u32 %s3, 1
    %s426 = sor.u32 %s3, %s425
    %s427 = sand.u32 %s426, 85
    %s428 = sshrl.u32 %s427, 1
    %s429 = sor.u32 %s427, %s428
    %s430 = sand.u32 51, %s429
    %s431 = sshrl.u32 %s430, 2
    %s432 = sor.u32 %s430, %s431
    %s433 = sand.u32 15, %s432
    %v434 = vld [vmem:[%s424] sm:%s433]
    %v435 = vunpack.c.l.bf16 %v434
    %v436 = vunpack.c.h.bf16 %v434
    %s437 = scalar_lea.vmem [#allocation1], 24
    %438 = vst [vmem:[%s437] sm:%s3] %v435
    %s439 = scalar_lea.vmem %s0, 8
    %s440 = sshrl.u32 %s3, 1
    %s441 = sor.u32 %s3, %s440
    %s442 = sand.u32 %s441, 85
    %s443 = sshrl.u32 %s442, 1
    %s444 = sor.u32 %s442, %s443
    %s445 = sand.u32 51, %s444
    %s446 = sshrl.u32 %s445, 2
    %s447 = sor.u32 %s445, %s446
    %s448 = sand.u32 15, %s447
    %v449 = vld [vmem:[%s439] sm:%s448]
    %v450 = vunpack.c.l.bf16 %v449
    %v451 = vunpack.c.h.bf16 %v449
    %s452 = scalar_lea.vmem [#allocation1], 16
    %453 = vst [vmem:[%s452] sm:%s3] %v450
    %s454 = scalar_lea.vmem %s0, 4
    %s455 = sshrl.u32 %s3, 1
    %s456 = sor.u32 %s3, %s455
    %s457 = sand.u32 %s456, 85
    %s458 = sshrl.u32 %s457, 1
    %s459 = sor.u32 %s457, %s458
    %s460 = sand.u32 51, %s459
    %s461 = sshrl.u32 %s460, 2
    %s462 = sor.u32 %s460, %s461
    %s463 = sand.u32 15, %s462
    %v464 = vld [vmem:[%s454] sm:%s463]
    %v465 = vunpack.c.l.bf16 %v464
    %v466 = vunpack.c.h.bf16 %v464
    %s467 = scalar_lea.vmem [#allocation1], 8
    %468 = vst [vmem:[%s467] sm:%s3] %v465
    %s469 = sshrl.u32 %s3, 1
    %s470 = sor.u32 %s3, %s469
    %s471 = sand.u32 %s470, 85
    %s472 = sshrl.u32 %s471, 1
    %s473 = sor.u32 %s471, %s472
    %s474 = sand.u32 51, %s473
    %s475 = sshrl.u32 %s474, 2
    %s476 = sor.u32 %s474, %s475
    %s477 = sand.u32 15, %s476
    %v478 = vld [vmem:[%s0] sm:%s477]
    %v479 = vunpack.c.l.bf16 %v478
    %v480 = vunpack.c.h.bf16 %v478
    %481 = vst [vmem:[#allocation1] sm:%s3] %v479
    %v482 = vld [vmem:[#allocation1] sm:$0xff]
    %vm483 = vcmask 523264
    %484 = vst.msk [vmem:[#allocation0] ss:$2 sm:$0xff] %vm483, %v482
    %s485 = scalar_lea.vmem [#allocation1], 8
    %v486 = vld [vmem:[%s485] sm:$0xff]
    %vm487 = vcmask 523264
    %s488 = scalar_lea.vmem [#allocation0], 16
    %489 = vst.msk [vmem:[%s488] ss:$2 sm:$0xff] %vm487, %v486
    %s490 = scalar_lea.vmem [#allocation1], 16
    %v491 = vld [vmem:[%s490] sm:$0xff]
    %vm492 = vcmask 523264
    %s493 = scalar_lea.vmem [#allocation0], 32
    %494 = vst.msk [vmem:[%s493] ss:$2 sm:$0xff] %vm492, %v491
    %s495 = scalar_lea.vmem [#allocation1], 24
    %v496 = vld [vmem:[%s495] sm:$0xff]
    %vm497 = vcmask 523264
    %s498 = scalar_lea.vmem [#allocation0], 48
    %499 = vst.msk [vmem:[%s498] ss:$2 sm:$0xff] %vm497, %v496
    %s500 = scalar_lea.vmem [#allocation1], 32
    %v501 = vld [vmem:[%s500] sm:$0xff]
    %vm502 = vcmask 523264
    %s503 = scalar_lea.vmem [#allocation0], 64
    %504 = vst.msk [vmem:[%s503] ss:$2 sm:$0xff] %vm502, %v501
    %s505 = scalar_lea.vmem [#allocation1], 40
    %v506 = vld [vmem:[%s505] sm:$0xff]
    %vm507 = vcmask 523264
    %s508 = scalar_lea.vmem [#allocation0], 80
    %509 = vst.msk [vmem:[%s508] ss:$2 sm:$0xff] %vm507, %v506
    %s510 = scalar_lea.vmem [#allocation1], 48
    %v511 = vld [vmem:[%s510] sm:$0xff]
    %vm512 = vcmask 523264
    %s513 = scalar_lea.vmem [#allocation0], 96
    %514 = vst.msk [vmem:[%s513] ss:$2 sm:$0xff] %vm512, %v511
    %s515 = scalar_lea.vmem [#allocation1], 56
    %v516 = vld [vmem:[%s515] sm:$0xff]
    %vm517 = vcmask 523264
    %s518 = scalar_lea.vmem [#allocation0], 112
    %519 = vst.msk [vmem:[%s518] ss:$2 sm:$0xff] %vm517, %v516
    %s520 = scalar_lea.vmem [#allocation1], 64
    %v521 = vld [vmem:[%s520] sm:$0xff]
    %vm522 = vcmask 523264
    %s523 = scalar_lea.vmem [#allocation0], 128
    %524 = vst.msk [vmem:[%s523] ss:$2 sm:$0xff] %vm522, %v521
    %s525 = scalar_lea.vmem [#allocation1], 72
    %v526 = vld [vmem:[%s525] sm:$0xff]
    %vm527 = vcmask 523264
    %s528 = scalar_lea.vmem [#allocation0], 144
    %529 = vst.msk [vmem:[%s528] ss:$2 sm:$0xff] %vm527, %v526
    %s530 = scalar_lea.vmem [#allocation1], 80
    %v531 = vld [vmem:[%s530] sm:$0xff]
    %vm532 = vcmask 523264
    %s533 = scalar_lea.vmem [#allocation0], 160
    %534 = vst.msk [vmem:[%s533] ss:$2 sm:$0xff] %vm532, %v531
    %s535 = scalar_lea.vmem [#allocation1], 88
    %v536 = vld [vmem:[%s535] sm:$0xff]
    %vm537 = vcmask 523264
    %s538 = scalar_lea.vmem [#allocation0], 176
    %539 = vst.msk [vmem:[%s538] ss:$2 sm:$0xff] %vm537, %v536
    %s540 = scalar_lea.vmem [#allocation1], 96
    %v541 = vld [vmem:[%s540] sm:$0xff]
    %vm542 = vcmask 523264
    %s543 = scalar_lea.vmem [#allocation0], 192
    %544 = vst.msk [vmem:[%s543] ss:$2 sm:$0xff] %vm542, %v541
    %s545 = scalar_lea.vmem [#allocation1], 104
    %v546 = vld [vmem:[%s545] sm:$0xff]
    %vm547 = vcmask 523264
    %s548 = scalar_lea.vmem [#allocation0], 208
    %549 = vst.msk [vmem:[%s548] ss:$2 sm:$0xff] %vm547, %v546
    %s550 = scalar_lea.vmem [#allocation1], 112
    %v551 = vld [vmem:[%s550] sm:$0xff]
    %vm552 = vcmask 523264
    %s553 = scalar_lea.vmem [#allocation0], 224
    %554 = vst.msk [vmem:[%s553] ss:$2 sm:$0xff] %vm552, %v551
    %s555 = scalar_lea.vmem [#allocation1], 120
    %v556 = vld [vmem:[%s555] sm:$0xff]
    %vm557 = vcmask 523264
    %s558 = scalar_lea.vmem [#allocation0], 240
    %559 = vst.msk [vmem:[%s558] ss:$2 sm:$0xff] %vm557, %v556
    %s560 = scalar_lea.vmem [#allocation1], 128
    %v561 = vld [vmem:[%s560] sm:$0xff]
    %vm562 = vcmask 523264
    %s563 = scalar_lea.vmem [#allocation0], 256
    %564 = vst.msk [vmem:[%s563] ss:$2 sm:$0xff] %vm562, %v561
    %s565 = scalar_lea.vmem [#allocation1], 136
    %v566 = vld [vmem:[%s565] sm:$0xff]
    %vm567 = vcmask 523264
    %s568 = scalar_lea.vmem [#allocation0], 272
    %569 = vst.msk [vmem:[%s568] ss:$2 sm:$0xff] %vm567, %v566
    %s570 = scalar_lea.vmem [#allocation1], 144
    %v571 = vld [vmem:[%s570] sm:$0xff]
    %vm572 = vcmask 523264
    %s573 = scalar_lea.vmem [#allocation0], 288
    %574 = vst.msk [vmem:[%s573] ss:$2 sm:$0xff] %vm572, %v571
    %s575 = scalar_lea.vmem [#allocation1], 152
    %v576 = vld [vmem:[%s575] sm:$0xff]
    %vm577 = vcmask 523264
    %s578 = scalar_lea.vmem [#allocation0], 304
    %579 = vst.msk [vmem:[%s578] ss:$2 sm:$0xff] %vm577, %v576
    %s580 = scalar_lea.vmem [#allocation1], 160
    %v581 = vld [vmem:[%s580] sm:$0xff]
    %vm582 = vcmask 523264
    %s583 = scalar_lea.vmem [#allocation0], 320
    %584 = vst.msk [vmem:[%s583] ss:$2 sm:$0xff] %vm582, %v581
    %s585 = scalar_lea.vmem [#allocation1], 168
    %v586 = vld [vmem:[%s585] sm:$0xff]
    %vm587 = vcmask 523264
    %s588 = scalar_lea.vmem [#allocation0], 336
    %589 = vst.msk [vmem:[%s588] ss:$2 sm:$0xff] %vm587, %v586
    %s590 = scalar_lea.vmem [#allocation1], 176
    %v591 = vld [vmem:[%s590] sm:$0xff]
    %vm592 = vcmask 523264
    %s593 = scalar_lea.vmem [#allocation0], 352
    %594 = vst.msk [vmem:[%s593] ss:$2 sm:$0xff] %vm592, %v591
    %s595 = scalar_lea.vmem [#allocation1], 184
    %v596 = vld [vmem:[%s595] sm:$0xff]
    %vm597 = vcmask 523264
    %s598 = scalar_lea.vmem [#allocation0], 368
    %599 = vst.msk [vmem:[%s598] ss:$2 sm:$0xff] %vm597, %v596
    %s600 = scalar_lea.vmem [#allocation1], 192
    %v601 = vld [vmem:[%s600] sm:$0xff]
    %vm602 = vcmask 523264
    %s603 = scalar_lea.vmem [#allocation0], 384
    %604 = vst.msk [vmem:[%s603] ss:$2 sm:$0xff] %vm602, %v601
    %s605 = scalar_lea.vmem [#allocation1], 200
    %v606 = vld [vmem:[%s605] sm:$0xff]
    %vm607 = vcmask 523264
    %s608 = scalar_lea.vmem [#allocation0], 400
    %609 = vst.msk [vmem:[%s608] ss:$2 sm:$0xff] %vm607, %v606
    %s610 = scalar_lea.vmem [#allocation1], 208
    %v611 = vld [vmem:[%s610] sm:$0xff]
    %vm612 = vcmask 523264
    %s613 = scalar_lea.vmem [#allocation0], 416
    %614 = vst.msk [vmem:[%s613] ss:$2 sm:$0xff] %vm612, %v611
    %s615 = scalar_lea.vmem [#allocation1], 216
    %v616 = vld [vmem:[%s615] sm:$0xff]
    %vm617 = vcmask 523264
    %s618 = scalar_lea.vmem [#allocation0], 432
    %619 = vst.msk [vmem:[%s618] ss:$2 sm:$0xff] %vm617, %v616
    %s620 = scalar_lea.vmem [#allocation1], 224
    %v621 = vld [vmem:[%s620] sm:$0xff]
    %vm622 = vcmask 523264
    %s623 = scalar_lea.vmem [#allocation0], 448
    %624 = vst.msk [vmem:[%s623] ss:$2 sm:$0xff] %vm622, %v621
    %s625 = scalar_lea.vmem [#allocation1], 232
    %v626 = vld [vmem:[%s625] sm:$0xff]
    %vm627 = vcmask 523264
    %s628 = scalar_lea.vmem [#allocation0], 464
    %629 = vst.msk [vmem:[%s628] ss:$2 sm:$0xff] %vm627, %v626
    %s630 = scalar_lea.vmem [#allocation1], 240
    %v631 = vld [vmem:[%s630] sm:$0xff]
    %vm632 = vcmask 523264
    %s633 = scalar_lea.vmem [#allocation0], 480
    %634 = vst.msk [vmem:[%s633] ss:$2 sm:$0xff] %vm632, %v631
    %s635 = scalar_lea.vmem [#allocation1], 248
    %v636 = vld [vmem:[%s635] sm:$0xff]
    %vm637 = vcmask 523264
    %s638 = scalar_lea.vmem [#allocation0], 496
    %639 = vst.msk [vmem:[%s638] ss:$2 sm:$0xff] %vm637, %v636
    %v640 = vld [vmem:[#allocation1] sm:$0xff]
    %641 = vrot.lane.b32.xlu0 %v640, 64
    %v642 = vpop.permute.xlu0 %641
    %vm643 = vcmask 523264
    %s644 = scalar_lea.vmem [#allocation0], 1
    %645 = vst.msk [vmem:[%s644] ss:$2 sm:$0xff] %vm643, %v642
    %s646 = scalar_lea.vmem [#allocation1], 16
    %v647 = vld [vmem:[%s646] sm:$0xff]
    %648 = vrot.lane.b32.xlu0 %v647, 64
    %v649 = vpop.permute.xlu0 %648
    %vm650 = vcmask 523264
    %s651 = scalar_lea.vmem [#allocation0], 33
    %652 = vst.msk [vmem:[%s651] ss:$2 sm:$0xff] %vm650, %v649
    %s653 = scalar_lea.vmem [#allocation1], 32
    %v654 = vld [vmem:[%s653] sm:$0xff]
    %655 = vrot.lane.b32.xlu0 %v654, 64
    %v656 = vpop.permute.xlu0 %655
    %vm657 = vcmask 523264
    %s658 = scalar_lea.vmem [#allocation0], 65
    %659 = vst.msk [vmem:[%s658] ss:$2 sm:$0xff] %vm657, %v656
    %s660 = scalar_lea.vmem [#allocation1], 48
    %v661 = vld [vmem:[%s660] sm:$0xff]
    %662 = vrot.lane.b32.xlu0 %v661, 64
    %v663 = vpop.permute.xlu0 %662
    %vm664 = vcmask 523264
    %s665 = scalar_lea.vmem [#allocation0], 97
    %666 = vst.msk [vmem:[%s665] ss:$2 sm:$0xff] %vm664, %v663
    %s667 = scalar_lea.vmem [#allocation1], 64
    %v668 = vld [vmem:[%s667] sm:$0xff]
    %669 = vrot.lane.b32.xlu0 %v668, 64
    %v670 = vpop.permute.xlu0 %669
    %vm671 = vcmask 523264
    %s672 = scalar_lea.vmem [#allocation0], 129
    %673 = vst.msk [vmem:[%s672] ss:$2 sm:$0xff] %vm671, %v670
    %s674 = scalar_lea.vmem [#allocation1], 80
    %v675 = vld [vmem:[%s674] sm:$0xff]
    %676 = vrot.lane.b32.xlu0 %v675, 64
    %v677 = vpop.permute.xlu0 %676
    %vm678 = vcmask 523264
    %s679 = scalar_lea.vmem [#allocation0], 161
    %680 = vst.msk [vmem:[%s679] ss:$2 sm:$0xff] %vm678, %v677
    %s681 = scalar_lea.vmem [#allocation1], 96
    %v682 = vld [vmem:[%s681] sm:$0xff]
    %683 = vrot.lane.b32.xlu0 %v682, 64
    %v684 = vpop.permute.xlu0 %683
    %vm685 = vcmask 523264
    %s686 = scalar_lea.vmem [#allocation0], 193
    %687 = vst.msk [vmem:[%s686] ss:$2 sm:$0xff] %vm685, %v684
    %s688 = scalar_lea.vmem [#allocation1], 112
    %v689 = vld [vmem:[%s688] sm:$0xff]
    %690 = vrot.lane.b32.xlu0 %v689, 64
    %v691 = vpop.permute.xlu0 %690
    %vm692 = vcmask 523264
    %s693 = scalar_lea.vmem [#allocation0], 225
    %694 = vst.msk [vmem:[%s693] ss:$2 sm:$0xff] %vm692, %v691
    %s695 = scalar_lea.vmem [#allocation1], 128
    %v696 = vld [vmem:[%s695] sm:$0xff]
    %697 = vrot.lane.b32.xlu0 %v696, 64
    %v698 = vpop.permute.xlu0 %697
    %vm699 = vcmask 523264
    %s700 = scalar_lea.vmem [#allocation0], 257
    %701 = vst.msk [vmem:[%s700] ss:$2 sm:$0xff] %vm699, %v698
    %s702 = scalar_lea.vmem [#allocation1], 144
    %v703 = vld [vmem:[%s702] sm:$0xff]
    %704 = vrot.lane.b32.xlu0 %v703, 64
    %v705 = vpop.permute.xlu0 %704
    %vm706 = vcmask 523264
    %s707 = scalar_lea.vmem [#allocation0], 289
    %708 = vst.msk [vmem:[%s707] ss:$2 sm:$0xff] %vm706, %v705
    %s709 = scalar_lea.vmem [#allocation1], 160
    %v710 = vld [vmem:[%s709] sm:$0xff]
    %711 = vrot.lane.b32.xlu0 %v710, 64
    %v712 = vpop.permute.xlu0 %711
    %vm713 = vcmask 523264
    %s714 = scalar_lea.vmem [#allocation0], 321
    %715 = vst.msk [vmem:[%s714] ss:$2 sm:$0xff] %vm713, %v712
    %s716 = scalar_lea.vmem [#allocation1], 176
    %v717 = vld [vmem:[%s716] sm:$0xff]
    %718 = vrot.lane.b32.xlu0 %v717, 64
    %v719 = vpop.permute.xlu0 %718
    %vm720 = vcmask 523264
    %s721 = scalar_lea.vmem [#allocation0], 353
    %722 = vst.msk [vmem:[%s721] ss:$2 sm:$0xff] %vm720, %v719
    %s723 = scalar_lea.vmem [#allocation1], 192
    %v724 = vld [vmem:[%s723] sm:$0xff]
    %725 = vrot.lane.b32.xlu0 %v724, 64
    %v726 = vpop.permute.xlu0 %725
    %vm727 = vcmask 523264
    %s728 = scalar_lea.vmem [#allocation0], 385
    %729 = vst.msk [vmem:[%s728] ss:$2 sm:$0xff] %vm727, %v726
    %s730 = scalar_lea.vmem [#allocation1], 208
    %v731 = vld [vmem:[%s730] sm:$0xff]
    %732 = vrot.lane.b32.xlu0 %v731, 64
    %v733 = vpop.permute.xlu0 %732
    %vm734 = vcmask 523264
    %s735 = scalar_lea.vmem [#allocation0], 417
    %736 = vst.msk [vmem:[%s735] ss:$2 sm:$0xff] %vm734, %v733
    %s737 = scalar_lea.vmem [#allocation1], 224
    %v738 = vld [vmem:[%s737] sm:$0xff]
    %739 = vrot.lane.b32.xlu0 %v738, 64
    %v740 = vpop.permute.xlu0 %739
    %vm741 = vcmask 523264
    %s742 = scalar_lea.vmem [#allocation0], 449
    %743 = vst.msk [vmem:[%s742] ss:$2 sm:$0xff] %vm741, %v740
    %s744 = scalar_lea.vmem [#allocation1], 240
    %v745 = vld [vmem:[%s744] sm:$0xff]
    %746 = vrot.lane.b32.xlu0 %v745, 64
    %v747 = vpop.permute.xlu0 %746
    %vm748 = vcmask 523264
    %s749 = scalar_lea.vmem [#allocation0], 481
    %750 = vst.msk [vmem:[%s749] ss:$2 sm:$0xff] %vm748, %v747
    %s751 = scalar_lea.vmem [#allocation1], 8
    %v752 = vld [vmem:[%s751] sm:$0xff]
    %753 = vrot.lane.b32.xlu0 %v752, 64
    %v754 = vpop.permute.xlu0 %753
    %vm755 = vcmask 523264
    %s756 = scalar_lea.vmem [#allocation0], 17
    %757 = vst.msk [vmem:[%s756] ss:$2 sm:$0xff] %vm755, %v754
    %s758 = scalar_lea.vmem [#allocation1], 24
    %v759 = vld [vmem:[%s758] sm:$0xff]
    %760 = vrot.lane.b32.xlu0 %v759, 64
    %v761 = vpop.permute.xlu0 %760
    %vm762 = vcmask 523264
    %s763 = scalar_lea.vmem [#allocation0], 49
    %764 = vst.msk [vmem:[%s763] ss:$2 sm:$0xff] %vm762, %v761
    %s765 = scalar_lea.vmem [#allocation1], 40
    %v766 = vld [vmem:[%s765] sm:$0xff]
    %767 = vrot.lane.b32.xlu0 %v766, 64
    %v768 = vpop.permute.xlu0 %767
    %vm769 = vcmask 523264
    %s770 = scalar_lea.vmem [#allocation0], 81
    %771 = vst.msk [vmem:[%s770] ss:$2 sm:$0xff] %vm769, %v768
    %s772 = scalar_lea.vmem [#allocation1], 56
    %v773 = vld [vmem:[%s772] sm:$0xff]
    %774 = vrot.lane.b32.xlu0 %v773, 64
    %v775 = vpop.permute.xlu0 %774
    %vm776 = vcmask 523264
    %s777 = scalar_lea.vmem [#allocation0], 113
    %778 = vst.msk [vmem:[%s777] ss:$2 sm:$0xff] %vm776, %v775
    %s779 = scalar_lea.vmem [#allocation1], 72
    %v780 = vld [vmem:[%s779] sm:$0xff]
    %781 = vrot.lane.b32.xlu0 %v780, 64
    %v782 = vpop.permute.xlu0 %781
    %vm783 = vcmask 523264
    %s784 = scalar_lea.vmem [#allocation0], 145
    %785 = vst.msk [vmem:[%s784] ss:$2 sm:$0xff] %vm783, %v782
    %s786 = scalar_lea.vmem [#allocation1], 88
    %v787 = vld [vmem:[%s786] sm:$0xff]
    %788 = vrot.lane.b32.xlu0 %v787, 64
    %v789 = vpop.permute.xlu0 %788
    %vm790 = vcmask 523264
    %s791 = scalar_lea.vmem [#allocation0], 177
    %792 = vst.msk [vmem:[%s791] ss:$2 sm:$0xff] %vm790, %v789
    %s793 = scalar_lea.vmem [#allocation1], 104
    %v794 = vld [vmem:[%s793] sm:$0xff]
    %795 = vrot.lane.b32.xlu0 %v794, 64
    %v796 = vpop.permute.xlu0 %795
    %vm797 = vcmask 523264
    %s798 = scalar_lea.vmem [#allocation0], 209
    %799 = vst.msk [vmem:[%s798] ss:$2 sm:$0xff] %vm797, %v796
    %s800 = scalar_lea.vmem [#allocation1], 120
    %v801 = vld [vmem:[%s800] sm:$0xff]
    %802 = vrot.lane.b32.xlu0 %v801, 64
    %v803 = vpop.permute.xlu0 %802
    %vm804 = vcmask 523264
    %s805 = scalar_lea.vmem [#allocation0], 241
    %806 = vst.msk [vmem:[%s805] ss:$2 sm:$0xff] %vm804, %v803
    %s807 = scalar_lea.vmem [#allocation1], 136
    %v808 = vld [vmem:[%s807] sm:$0xff]
    %809 = vrot.lane.b32.xlu0 %v808, 64
    %v810 = vpop.permute.xlu0 %809
    %vm811 = vcmask 523264
    %s812 = scalar_lea.vmem [#allocation0], 273
    %813 = vst.msk [vmem:[%s812] ss:$2 sm:$0xff] %vm811, %v810
    %s814 = scalar_lea.vmem [#allocation1], 152
    %v815 = vld [vmem:[%s814] sm:$0xff]
    %816 = vrot.lane.b32.xlu0 %v815, 64
    %v817 = vpop.permute.xlu0 %816
    %vm818 = vcmask 523264
    %s819 = scalar_lea.vmem [#allocation0], 305
    %820 = vst.msk [vmem:[%s819] ss:$2 sm:$0xff] %vm818, %v817
    %s821 = scalar_lea.vmem [#allocation1], 168
    %v822 = vld [vmem:[%s821] sm:$0xff]
    %823 = vrot.lane.b32.xlu0 %v822, 64
    %v824 = vpop.permute.xlu0 %823
    %vm825 = vcmask 523264
    %s826 = scalar_lea.vmem [#allocation0], 337
    %827 = vst.msk [vmem:[%s826] ss:$2 sm:$0xff] %vm825, %v824
    %s828 = scalar_lea.vmem [#allocation1], 184
    %v829 = vld [vmem:[%s828] sm:$0xff]
    %830 = vrot.lane.b32.xlu0 %v829, 64
    %v831 = vpop.permute.xlu0 %830
    %vm832 = vcmask 523264
    %s833 = scalar_lea.vmem [#allocation0], 369
    %834 = vst.msk [vmem:[%s833] ss:$2 sm:$0xff] %vm832, %v831
    %s835 = scalar_lea.vmem [#allocation1], 200
    %v836 = vld [vmem:[%s835] sm:$0xff]
    %837 = vrot.lane.b32.xlu0 %v836, 64
    %v838 = vpop.permute.xlu0 %837
    %vm839 = vcmask 523264
    %s840 = scalar_lea.vmem [#allocation0], 401
    %841 = vst.msk [vmem:[%s840] ss:$2 sm:$0xff] %vm839, %v838
    %s842 = scalar_lea.vmem [#allocation1], 216
    %v843 = vld [vmem:[%s842] sm:$0xff]
    %844 = vrot.lane.b32.xlu0 %v843, 64
    %v845 = vpop.permute.xlu0 %844
    %vm846 = vcmask 523264
    %s847 = scalar_lea.vmem [#allocation0], 433
    %848 = vst.msk [vmem:[%s847] ss:$2 sm:$0xff] %vm846, %v845
    %s849 = scalar_lea.vmem [#allocation1], 232
    %v850 = vld [vmem:[%s849] sm:$0xff]
    %851 = vrot.lane.b32.xlu0 %v850, 64
    %v852 = vpop.permute.xlu0 %851
    %vm853 = vcmask 523264
    %s854 = scalar_lea.vmem [#allocation0], 465
    %855 = vst.msk [vmem:[%s854] ss:$2 sm:$0xff] %vm853, %v852
    %s856 = scalar_lea.vmem [#allocation1], 248
    %v857 = vld [vmem:[%s856] sm:$0xff]
    %858 = vrot.lane.b32.xlu0 %v857, 64
    %v859 = vpop.permute.xlu0 %858
    %vm860 = vcmask 523264
    %s861 = scalar_lea.vmem [#allocation0], 497
    %862 = vst.msk [vmem:[%s861] ss:$2 sm:$0xff] %vm860, %v859
    %s864 = ssub.s32 256, 1
    %v865 = vld [vmem:[#allocation0] sm:%s864]
    %v866 = vpack.c.bf16 0.0, %v865
    %s868 = ssub.s32 16, 1
    %869 = vst [vmem:[%s1] sm:%s868] %v866
    %s870 = scalar_lea.vmem [#allocation0], 8
    %v871 = vld [vmem:[%s870] sm:%s864]
    %v872 = vpack.c.bf16 0.0, %v871
    %s874 = ssub.s32 16, 1
    %s875 = scalar_lea.vmem %s1, 4
    %876 = vst [vmem:[%s875] sm:%s874] %v872
    %s877 = scalar_lea.vmem [#allocation0], 16
    %v878 = vld [vmem:[%s877] sm:%s864]
    %v879 = vpack.c.bf16 0.0, %v878
    %s881 = ssub.s32 16, 1
    %s882 = scalar_lea.vmem %s1, 8
    %883 = vst [vmem:[%s882] sm:%s881] %v879
    %s884 = scalar_lea.vmem [#allocation0], 24
    %v885 = vld [vmem:[%s884] sm:%s864]
    %v886 = vpack.c.bf16 0.0, %v885
    %s888 = ssub.s32 16, 1
    %s889 = scalar_lea.vmem %s1, 12
    %890 = vst [vmem:[%s889] sm:%s888] %v886
    %s891 = scalar_lea.vmem [#allocation0], 32
    %v892 = vld [vmem:[%s891] sm:%s864]
    %v893 = vpack.c.bf16 0.0, %v892
    %s895 = ssub.s32 16, 1
    %s896 = scalar_lea.vmem %s1, 16
    %897 = vst [vmem:[%s896] sm:%s895] %v893
    %s898 = scalar_lea.vmem [#allocation0], 40
    %v899 = vld [vmem:[%s898] sm:%s864]
    %v900 = vpack.c.bf16 0.0, %v899
    %s902 = ssub.s32 16, 1
    %s903 = scalar_lea.vmem %s1, 20
    %904 = vst [vmem:[%s903] sm:%s902] %v900
    %s905 = scalar_lea.vmem [#allocation0], 48
    %v906 = vld [vmem:[%s905] sm:%s864]
    %v907 = vpack.c.bf16 0.0, %v906
    %s909 = ssub.s32 16, 1
    %s910 = scalar_lea.vmem %s1, 24
    %911 = vst [vmem:[%s910] sm:%s909] %v907
    %s912 = scalar_lea.vmem [#allocation0], 56
    %v913 = vld [vmem:[%s912] sm:%s864]
    %v914 = vpack.c.bf16 0.0, %v913
    %s916 = ssub.s32 16, 1
    %s917 = scalar_lea.vmem %s1, 28
    %918 = vst [vmem:[%s917] sm:%s916] %v914
    %s919 = scalar_lea.vmem [#allocation0], 64
    %v920 = vld [vmem:[%s919] sm:%s864]
    %v921 = vpack.c.bf16 0.0, %v920
    %s923 = ssub.s32 16, 1
    %s924 = scalar_lea.vmem %s1, 32
    %925 = vst [vmem:[%s924] sm:%s923] %v921
    %s926 = scalar_lea.vmem [#allocation0], 72
    %v927 = vld [vmem:[%s926] sm:%s864]
    %v928 = vpack.c.bf16 0.0, %v927
    %s930 = ssub.s32 16, 1
    %s931 = scalar_lea.vmem %s1, 36
    %932 = vst [vmem:[%s931] sm:%s930] %v928
    %s933 = scalar_lea.vmem [#allocation0], 80
    %v934 = vld [vmem:[%s933] sm:%s864]
    %v935 = vpack.c.bf16 0.0, %v934
    %s937 = ssub.s32 16, 1
    %s938 = scalar_lea.vmem %s1, 40
    %939 = vst [vmem:[%s938] sm:%s937] %v935
    %s940 = scalar_lea.vmem [#allocation0], 88
    %v941 = vld [vmem:[%s940] sm:%s864]
    %v942 = vpack.c.bf16 0.0, %v941
    %s944 = ssub.s32 16, 1
    %s945 = scalar_lea.vmem %s1, 44
    %946 = vst [vmem:[%s945] sm:%s944] %v942
    %s947 = scalar_lea.vmem [#allocation0], 96
    %v948 = vld [vmem:[%s947] sm:%s864]
    %v949 = vpack.c.bf16 0.0, %v948
    %s951 = ssub.s32 16, 1
    %s952 = scalar_lea.vmem %s1, 48
    %953 = vst [vmem:[%s952] sm:%s951] %v949
    %s954 = scalar_lea.vmem [#allocation0], 104
    %v955 = vld [vmem:[%s954] sm:%s864]
    %v956 = vpack.c.bf16 0.0, %v955
    %s958 = ssub.s32 16, 1
    %s959 = scalar_lea.vmem %s1, 52
    %960 = vst [vmem:[%s959] sm:%s958] %v956
    %s961 = scalar_lea.vmem [#allocation0], 112
    %v962 = vld [vmem:[%s961] sm:%s864]
    %v963 = vpack.c.bf16 0.0, %v962
    %s965 = ssub.s32 16, 1
    %s966 = scalar_lea.vmem %s1, 56
    %967 = vst [vmem:[%s966] sm:%s965] %v963
    %s968 = scalar_lea.vmem [#allocation0], 120
    %v969 = vld [vmem:[%s968] sm:%s864]
    %v970 = vpack.c.bf16 0.0, %v969
    %s972 = ssub.s32 16, 1
    %s973 = scalar_lea.vmem %s1, 60
    %974 = vst [vmem:[%s973] sm:%s972] %v970
    %s975 = scalar_lea.vmem [#allocation0], 128
    %v976 = vld [vmem:[%s975] sm:%s864]
    %v977 = vpack.c.bf16 0.0, %v976
    %s979 = ssub.s32 16, 1
    %s980 = scalar_lea.vmem %s1, 64
    %981 = vst [vmem:[%s980] sm:%s979] %v977
    %s982 = scalar_lea.vmem [#allocation0], 136
    %v983 = vld [vmem:[%s982] sm:%s864]
    %v984 = vpack.c.bf16 0.0, %v983
    %s986 = ssub.s32 16, 1
    %s987 = scalar_lea.vmem %s1, 68
    %988 = vst [vmem:[%s987] sm:%s986] %v984
    %s989 = scalar_lea.vmem [#allocation0], 144
    %v990 = vld [vmem:[%s989] sm:%s864]
    %v991 = vpack.c.bf16 0.0, %v990
    %s993 = ssub.s32 16, 1
    %s994 = scalar_lea.vmem %s1, 72
    %995 = vst [vmem:[%s994] sm:%s993] %v991
    %s996 = scalar_lea.vmem [#allocation0], 152
    %v997 = vld [vmem:[%s996] sm:%s864]
    %v998 = vpack.c.bf16 0.0, %v997
    %s1000 = ssub.s32 16, 1
    %s1001 = scalar_lea.vmem %s1, 76
    %1002 = vst [vmem:[%s1001] sm:%s1000] %v998
    %s1003 = scalar_lea.vmem [#allocation0], 160
    %v1004 = vld [vmem:[%s1003] sm:%s864]
    %v1005 = vpack.c.bf16 0.0, %v1004
    %s1007 = ssub.s32 16, 1
    %s1008 = scalar_lea.vmem %s1, 80
    %1009 = vst [vmem:[%s1008] sm:%s1007] %v1005
    %s1010 = scalar_lea.vmem [#allocation0], 168
    %v1011 = vld [vmem:[%s1010] sm:%s864]
    %v1012 = vpack.c.bf16 0.0, %v1011
    %s1014 = ssub.s32 16, 1
    %s1015 = scalar_lea.vmem %s1, 84
    %1016 = vst [vmem:[%s1015] sm:%s1014] %v1012
    %s1017 = scalar_lea.vmem [#allocation0], 176
    %v1018 = vld [vmem:[%s1017] sm:%s864]
    %v1019 = vpack.c.bf16 0.0, %v1018
    %s1021 = ssub.s32 16, 1
    %s1022 = scalar_lea.vmem %s1, 88
    %1023 = vst [vmem:[%s1022] sm:%s1021] %v1019
    %s1024 = scalar_lea.vmem [#allocation0], 184
    %v1025 = vld [vmem:[%s1024] sm:%s864]
    %v1026 = vpack.c.bf16 0.0, %v1025
    %s1028 = ssub.s32 16, 1
    %s1029 = scalar_lea.vmem %s1, 92
    %1030 = vst [vmem:[%s1029] sm:%s1028] %v1026
    %s1031 = scalar_lea.vmem [#allocation0], 192
    %v1032 = vld [vmem:[%s1031] sm:%s864]
    %v1033 = vpack.c.bf16 0.0, %v1032
    %s1035 = ssub.s32 16, 1
    %s1036 = scalar_lea.vmem %s1, 96
    %1037 = vst [vmem:[%s1036] sm:%s1035] %v1033
    %s1038 = scalar_lea.vmem [#allocation0], 200
    %v1039 = vld [vmem:[%s1038] sm:%s864]
    %v1040 = vpack.c.bf16 0.0, %v1039
    %s1042 = ssub.s32 16, 1
    %s1043 = scalar_lea.vmem %s1, 100
    %1044 = vst [vmem:[%s1043] sm:%s1042] %v1040
    %s1045 = scalar_lea.vmem [#allocation0], 208
    %v1046 = vld [vmem:[%s1045] sm:%s864]
    %v1047 = vpack.c.bf16 0.0, %v1046
    %s1049 = ssub.s32 16, 1
    %s1050 = scalar_lea.vmem %s1, 104
    %1051 = vst [vmem:[%s1050] sm:%s1049] %v1047
    %s1052 = scalar_lea.vmem [#allocation0], 216
    %v1053 = vld [vmem:[%s1052] sm:%s864]
    %v1054 = vpack.c.bf16 0.0, %v1053
    %s1056 = ssub.s32 16, 1
    %s1057 = scalar_lea.vmem %s1, 108
    %1058 = vst [vmem:[%s1057] sm:%s1056] %v1054
    %s1059 = scalar_lea.vmem [#allocation0], 224
    %v1060 = vld [vmem:[%s1059] sm:%s864]
    %v1061 = vpack.c.bf16 0.0, %v1060
    %s1063 = ssub.s32 16, 1
    %s1064 = scalar_lea.vmem %s1, 112
    %1065 = vst [vmem:[%s1064] sm:%s1063] %v1061
    %s1066 = scalar_lea.vmem [#allocation0], 232
    %v1067 = vld [vmem:[%s1066] sm:%s864]
    %v1068 = vpack.c.bf16 0.0, %v1067
    %s1070 = ssub.s32 16, 1
    %s1071 = scalar_lea.vmem %s1, 116
    %1072 = vst [vmem:[%s1071] sm:%s1070] %v1068
    %s1073 = scalar_lea.vmem [#allocation0], 240
    %v1074 = vld [vmem:[%s1073] sm:%s864]
    %v1075 = vpack.c.bf16 0.0, %v1074
    %s1077 = ssub.s32 16, 1
    %s1078 = scalar_lea.vmem %s1, 120
    %1079 = vst [vmem:[%s1078] sm:%s1077] %v1075
    %s1080 = scalar_lea.vmem [#allocation0], 248
    %v1081 = vld [vmem:[%s1080] sm:%s864]
    %v1082 = vpack.c.bf16 0.0, %v1081
    %s1084 = ssub.s32 16, 1
    %s1085 = scalar_lea.vmem %s1, 124
    %1086 = vst [vmem:[%s1085] sm:%s1084] %v1082
    %s1087 = scalar_lea.vmem [#allocation0], 256
    %v1088 = vld [vmem:[%s1087] sm:%s864]
    %v1089 = vpack.c.bf16 0.0, %v1088
    %s1091 = ssub.s32 16, 1
    %s1092 = scalar_lea.vmem %s1, 128
    %1093 = vst [vmem:[%s1092] sm:%s1091] %v1089
    %s1094 = scalar_lea.vmem [#allocation0], 264
    %v1095 = vld [vmem:[%s1094] sm:%s864]
    %v1096 = vpack.c.bf16 0.0, %v1095
    %s1098 = ssub.s32 16, 1
    %s1099 = scalar_lea.vmem %s1, 132
    %1100 = vst [vmem:[%s1099] sm:%s1098] %v1096
    %s1101 = scalar_lea.vmem [#allocation0], 272
    %v1102 = vld [vmem:[%s1101] sm:%s864]
    %v1103 = vpack.c.bf16 0.0, %v1102
    %s1105 = ssub.s32 16, 1
    %s1106 = scalar_lea.vmem %s1, 136
    %1107 = vst [vmem:[%s1106] sm:%s1105] %v1103
    %s1108 = scalar_lea.vmem [#allocation0], 280
    %v1109 = vld [vmem:[%s1108] sm:%s864]
    %v1110 = vpack.c.bf16 0.0, %v1109
    %s1112 = ssub.s32 16, 1
    %s1113 = scalar_lea.vmem %s1, 140
    %1114 = vst [vmem:[%s1113] sm:%s1112] %v1110
    %s1115 = scalar_lea.vmem [#allocation0], 288
    %v1116 = vld [vmem:[%s1115] sm:%s864]
    %v1117 = vpack.c.bf16 0.0, %v1116
    %s1119 = ssub.s32 16, 1
    %s1120 = scalar_lea.vmem %s1, 144
    %1121 = vst [vmem:[%s1120] sm:%s1119] %v1117
    %s1122 = scalar_lea.vmem [#allocation0], 296
    %v1123 = vld [vmem:[%s1122] sm:%s864]
    %v1124 = vpack.c.bf16 0.0, %v1123
    %s1126 = ssub.s32 16, 1
    %s1127 = scalar_lea.vmem %s1, 148
    %1128 = vst [vmem:[%s1127] sm:%s1126] %v1124
    %s1129 = scalar_lea.vmem [#allocation0], 304
    %v1130 = vld [vmem:[%s1129] sm:%s864]
    %v1131 = vpack.c.bf16 0.0, %v1130
    %s1133 = ssub.s32 16, 1
    %s1134 = scalar_lea.vmem %s1, 152
    %1135 = vst [vmem:[%s1134] sm:%s1133] %v1131
    %s1136 = scalar_lea.vmem [#allocation0], 312
    %v1137 = vld [vmem:[%s1136] sm:%s864]
    %v1138 = vpack.c.bf16 0.0, %v1137
    %s1140 = ssub.s32 16, 1
    %s1141 = scalar_lea.vmem %s1, 156
    %1142 = vst [vmem:[%s1141] sm:%s1140] %v1138
    %s1143 = scalar_lea.vmem [#allocation0], 320
    %v1144 = vld [vmem:[%s1143] sm:%s864]
    %v1145 = vpack.c.bf16 0.0, %v1144
    %s1147 = ssub.s32 16, 1
    %s1148 = scalar_lea.vmem %s1, 160
    %1149 = vst [vmem:[%s1148] sm:%s1147] %v1145
    %s1150 = scalar_lea.vmem [#allocation0], 328
    %v1151 = vld [vmem:[%s1150] sm:%s864]
    %v1152 = vpack.c.bf16 0.0, %v1151
    %s1154 = ssub.s32 16, 1
    %s1155 = scalar_lea.vmem %s1, 164
    %1156 = vst [vmem:[%s1155] sm:%s1154] %v1152
    %s1157 = scalar_lea.vmem [#allocation0], 336
    %v1158 = vld [vmem:[%s1157] sm:%s864]
    %v1159 = vpack.c.bf16 0.0, %v1158
    %s1161 = ssub.s32 16, 1
    %s1162 = scalar_lea.vmem %s1, 168
    %1163 = vst [vmem:[%s1162] sm:%s1161] %v1159
    %s1164 = scalar_lea.vmem [#allocation0], 344
    %v1165 = vld [vmem:[%s1164] sm:%s864]
    %v1166 = vpack.c.bf16 0.0, %v1165
    %s1168 = ssub.s32 16, 1
    %s1169 = scalar_lea.vmem %s1, 172
    %1170 = vst [vmem:[%s1169] sm:%s1168] %v1166
    %s1171 = scalar_lea.vmem [#allocation0], 352
    %v1172 = vld [vmem:[%s1171] sm:%s864]
    %v1173 = vpack.c.bf16 0.0, %v1172
    %s1175 = ssub.s32 16, 1
    %s1176 = scalar_lea.vmem %s1, 176
    %1177 = vst [vmem:[%s1176] sm:%s1175] %v1173
    %s1178 = scalar_lea.vmem [#allocation0], 360
    %v1179 = vld [vmem:[%s1178] sm:%s864]
    %v1180 = vpack.c.bf16 0.0, %v1179
    %s1182 = ssub.s32 16, 1
    %s1183 = scalar_lea.vmem %s1, 180
    %1184 = vst [vmem:[%s1183] sm:%s1182] %v1180
    %s1185 = scalar_lea.vmem [#allocation0], 368
    %v1186 = vld [vmem:[%s1185] sm:%s864]
    %v1187 = vpack.c.bf16 0.0, %v1186
    %s1189 = ssub.s32 16, 1
    %s1190 = scalar_lea.vmem %s1, 184
    %1191 = vst [vmem:[%s1190] sm:%s1189] %v1187
    %s1192 = scalar_lea.vmem [#allocation0], 376
    %v1193 = vld [vmem:[%s1192] sm:%s864]
    %v1194 = vpack.c.bf16 0.0, %v1193
    %s1196 = ssub.s32 16, 1
    %s1197 = scalar_lea.vmem %s1, 188
    %1198 = vst [vmem:[%s1197] sm:%s1196] %v1194
    %s1199 = scalar_lea.vmem [#allocation0], 384
    %v1200 = vld [vmem:[%s1199] sm:%s864]
    %v1201 = vpack.c.bf16 0.0, %v1200
    %s1203 = ssub.s32 16, 1
    %s1204 = scalar_lea.vmem %s1, 192
    %1205 = vst [vmem:[%s1204] sm:%s1203] %v1201
    %s1206 = scalar_lea.vmem [#allocation0], 392
    %v1207 = vld [vmem:[%s1206] sm:%s864]
    %v1208 = vpack.c.bf16 0.0, %v1207
    %s1210 = ssub.s32 16, 1
    %s1211 = scalar_lea.vmem %s1, 196
    %1212 = vst [vmem:[%s1211] sm:%s1210] %v1208
    %s1213 = scalar_lea.vmem [#allocation0], 400
    %v1214 = vld [vmem:[%s1213] sm:%s864]
    %v1215 = vpack.c.bf16 0.0, %v1214
    %s1217 = ssub.s32 16, 1
    %s1218 = scalar_lea.vmem %s1, 200
    %1219 = vst [vmem:[%s1218] sm:%s1217] %v1215
    %s1220 = scalar_lea.vmem [#allocation0], 408
    %v1221 = vld [vmem:[%s1220] sm:%s864]
    %v1222 = vpack.c.bf16 0.0, %v1221
    %s1224 = ssub.s32 16, 1
    %s1225 = scalar_lea.vmem %s1, 204
    %1226 = vst [vmem:[%s1225] sm:%s1224] %v1222
    %s1227 = scalar_lea.vmem [#allocation0], 416
    %v1228 = vld [vmem:[%s1227] sm:%s864]
    %v1229 = vpack.c.bf16 0.0, %v1228
    %s1231 = ssub.s32 16, 1
    %s1232 = scalar_lea.vmem %s1, 208
    %1233 = vst [vmem:[%s1232] sm:%s1231] %v1229
    %s1234 = scalar_lea.vmem [#allocation0], 424
    %v1235 = vld [vmem:[%s1234] sm:%s864]
    %v1236 = vpack.c.bf16 0.0, %v1235
    %s1238 = ssub.s32 16, 1
    %s1239 = scalar_lea.vmem %s1, 212
    %1240 = vst [vmem:[%s1239] sm:%s1238] %v1236
    %s1241 = scalar_lea.vmem [#allocation0], 432
    %v1242 = vld [vmem:[%s1241] sm:%s864]
    %v1243 = vpack.c.bf16 0.0, %v1242
    %s1245 = ssub.s32 16, 1
    %s1246 = scalar_lea.vmem %s1, 216
    %1247 = vst [vmem:[%s1246] sm:%s1245] %v1243
    %s1248 = scalar_lea.vmem [#allocation0], 440
    %v1249 = vld [vmem:[%s1248] sm:%s864]
    %v1250 = vpack.c.bf16 0.0, %v1249
    %s1252 = ssub.s32 16, 1
    %s1253 = scalar_lea.vmem %s1, 220
    %1254 = vst [vmem:[%s1253] sm:%s1252] %v1250
    %s1255 = scalar_lea.vmem [#allocation0], 448
    %v1256 = vld [vmem:[%s1255] sm:%s864]
    %v1257 = vpack.c.bf16 0.0, %v1256
    %s1259 = ssub.s32 16, 1
    %s1260 = scalar_lea.vmem %s1, 224
    %1261 = vst [vmem:[%s1260] sm:%s1259] %v1257
    %s1262 = scalar_lea.vmem [#allocation0], 456
    %v1263 = vld [vmem:[%s1262] sm:%s864]
    %v1264 = vpack.c.bf16 0.0, %v1263
    %s1266 = ssub.s32 16, 1
    %s1267 = scalar_lea.vmem %s1, 228
    %1268 = vst [vmem:[%s1267] sm:%s1266] %v1264
    %s1269 = scalar_lea.vmem [#allocation0], 464
    %v1270 = vld [vmem:[%s1269] sm:%s864]
    %v1271 = vpack.c.bf16 0.0, %v1270
    %s1273 = ssub.s32 16, 1
    %s1274 = scalar_lea.vmem %s1, 232
    %1275 = vst [vmem:[%s1274] sm:%s1273] %v1271
    %s1276 = scalar_lea.vmem [#allocation0], 472
    %v1277 = vld [vmem:[%s1276] sm:%s864]
    %v1278 = vpack.c.bf16 0.0, %v1277
    %s1280 = ssub.s32 16, 1
    %s1281 = scalar_lea.vmem %s1, 236
    %1282 = vst [vmem:[%s1281] sm:%s1280] %v1278
    %s1283 = scalar_lea.vmem [#allocation0], 480
    %v1284 = vld [vmem:[%s1283] sm:%s864]
    %v1285 = vpack.c.bf16 0.0, %v1284
    %s1287 = ssub.s32 16, 1
    %s1288 = scalar_lea.vmem %s1, 240
    %1289 = vst [vmem:[%s1288] sm:%s1287] %v1285
    %s1290 = scalar_lea.vmem [#allocation0], 488
    %v1291 = vld [vmem:[%s1290] sm:%s864]
    %v1292 = vpack.c.bf16 0.0, %v1291
    %s1294 = ssub.s32 16, 1
    %s1295 = scalar_lea.vmem %s1, 244
    %1296 = vst [vmem:[%s1295] sm:%s1294] %v1292
    %s1297 = scalar_lea.vmem [#allocation0], 496
    %v1298 = vld [vmem:[%s1297] sm:%s864]
    %v1299 = vpack.c.bf16 0.0, %v1298
    %s1301 = ssub.s32 16, 1
    %s1302 = scalar_lea.vmem %s1, 248
    %1303 = vst [vmem:[%s1302] sm:%s1301] %v1299
    %s1304 = scalar_lea.vmem [#allocation0], 504
    %v1305 = vld [vmem:[%s1304] sm:%s864]
    %v1306 = vpack.c.bf16 0.0, %v1305
    %s1308 = ssub.s32 16, 1
    %s1309 = scalar_lea.vmem %s1, 252
    %1310 = vst [vmem:[%s1309] sm:%s1308] %v1306

</llo_original>
